<compile_context>
chip_gen: v7x
topology: tpu7x:2x2x1
jax: 0.10.0
libtpu: 0.0.40
codegen_flags: <defaults>
</compile_context>

<pallas_src>
import functools

import jax
import jax.numpy as jnp
from jax import lax
from jax.experimental import pallas as pl
from jax.experimental.pallas import tpu as pltpu

_EPS = 1e-3    # BatchNorm2d eps=0.001
_PAD_L = 8     # left halo width in the W-padded scratch (sublane-aligned)


# ----------------------------------------------------------------------------
# Fused Block35 kernel
# ----------------------------------------------------------------------------
def _block35_kernel(x_ref,
                    w96_ref, s96_ref, b96_ref,
                    w11_ref, s11_ref, b11_ref,
                    w21_ref, s21_ref, b21_ref,
                    w22_ref, s22_ref, b22_ref,
                    wf0_ref, wf1_ref, wf2_ref, fb_ref,
                    o_ref,
                    pad32_ref, pad48_ref,
                    *, scale):
    _, H, W, C = x_ref.shape
    M = H * W

    x = x_ref[0]                                   # (H, W, 320) f32
    xf = x.reshape(M, C)                           # residual path (kept f32)

    # --- fused branch-stem 1x1 convs (branch0 / branch1[0] / branch2[0]) ----
    y = jnp.dot(xf.astype(jnp.bfloat16), w96_ref[...],
                preferred_element_type=jnp.float32)
    y = jnp.maximum(y * s96_ref[...] + b96_ref[...], 0.0)          # (M, 96)

    def conv3x3_bn_relu(inp_hwc, pad_ref, w_ref, s_ref, b_ref):
        ci = inp_hwc.shape[-1]
        # Zero halo scratch, then place the tile at rows [1, H+1) and at a
        # sublane-aligned column offset [_PAD_L, _PAD_L+W).  Everything
        # outside the interior stays zero => implicit "padding=1".
        pad_ref[...] = jnp.zeros_like(pad_ref)
        pad_ref[1:H + 1, _PAD_L:_PAD_L + W, :] = inp_hwc
        xp = pad_ref[...]
        acc = None
        for dy in range(3):
            rows = xp[dy:dy + H]                            # (H, W+2*PAD, ci)
            for dx in range(3):
                patch = rows[:, _PAD_L - 1 + dx:_PAD_L - 1 + dx + W, :]
                patch = patch.reshape(M, ci).astype(jnp.bfloat16)
                part = jnp.dot(patch, w_ref[dy, dx],
                               preferred_element_type=jnp.float32)
                acc = part if acc is None else acc + part
        return jnp.maximum(acc * s_ref[...] + b_ref[...], 0.0)      # (M, co)

    x0 = y[:, 0:32]                                                  # (M, 32)
    x1 = conv3x3_bn_relu(y[:, 32:64].reshape(H, W, 32),
                         pad32_ref, w11_ref, s11_ref, b11_ref)       # (M, 32)
    x2 = conv3x3_bn_relu(y[:, 64:96].reshape(H, W, 32),
                         pad32_ref, w21_ref, s21_ref, b21_ref)       # (M, 48)
    x2 = conv3x3_bn_relu(x2.reshape(H, W, 48),
                         pad48_ref, w22_ref, s22_ref, b22_ref)       # (M, 64)

    # --- final 1x1 conv (weight split per branch => no concat), residual ----
    yf = (jnp.dot(x0.astype(jnp.bfloat16), wf0_ref[...],
                  preferred_element_type=jnp.float32)
          + jnp.dot(x1.astype(jnp.bfloat16), wf1_ref[...],
                    preferred_element_type=jnp.float32)
          + jnp.dot(x2.astype(jnp.bfloat16), wf2_ref[...],
                    preferred_element_type=jnp.float32)
          + fb_ref[...])
    out = jnp.maximum(yf * scale + xf, 0.0)
    o_ref[0] = out.reshape(H, W, C)


def _block35_pallas(x_nhwc, p, scale):
    N, H, W, C = x_nhwc.shape

    def const_spec(a):
        nd = a.ndim
        return pl.BlockSpec(a.shape, lambda n, _nd=nd: (0,) * _nd)

    weight_args = (p["w96"], p["s96"], p["b96"],
                   p["w11"], p["s11"], p["b11"],
                   p["w21"], p["s21"], p["b21"],
                   p["w22"], p["s22"], p["b22"],
                   p["wf0"], p["wf1"], p["wf2"], p["fb"])

    grid_spec = pltpu.PrefetchScalarGridSpec(
        num_scalar_prefetch=0,
        grid=(N,),
        in_specs=[pl.BlockSpec((1, H, W, C), lambda n: (n, 0, 0, 0))]
                 + [const_spec(a) for a in weight_args],
        out_specs=pl.BlockSpec((1, H, W, C), lambda n: (n, 0, 0, 0)),
        scratch_shapes=[
            pltpu.VMEM((H + 2, W + 2 * _PAD_L, 32), jnp.float32),
            pltpu.VMEM((H + 2, W + 2 * _PAD_L, 48), jnp.float32),
        ],
    )
    return pl.pallas_call(
        functools.partial(_block35_kernel, scale=float(scale)),
        grid_spec=grid_spec,
        out_shape=jax.ShapeDtypeStruct((N, H, W, C), jnp.float32),
        compiler_params=pltpu.CompilerParams(
            dimension_semantics=("parallel",),
            vmem_limit_bytes=48 * 1024 * 1024,
        ),
    )(x_nhwc, *weight_args)


# ----------------------------------------------------------------------------
# Parameter construction (deterministic, synthetic) and one-time prep
# ----------------------------------------------------------------------------
def _fold_bn(gamma, beta, mean, var, eps=_EPS):
    s = gamma / jnp.sqrt(var + eps)
    b = beta - mean * s
    return s, b


def make_params(key):
    keys = iter(jax.random.split(key, 64))

    def conv_w(cout, cin, k):
        fan_in = cin * k * k
        return (jax.random.normal(next(keys), (cout, cin, k, k), jnp.float32)
                * (1.0 / fan_in) ** 0.5)

    def bn_params(c):
        gamma = 1.0 + 0.1 * jax.random.normal(next(keys), (c,), jnp.float32)
        beta = 0.1 * jax.random.normal(next(keys), (c,), jnp.float32)
        mean = 0.1 * jax.random.normal(next(keys), (c,), jnp.float32)
        var = jnp.abs(jax.random.normal(next(keys), (c,), jnp.float32)) + 0.5
        return gamma, beta, mean, var

    def basic(cout, cin, k):
        w = conv_w(cout, cin, k)                 # OIHW (PyTorch layout)
        return {"w_oihw": w, "bn": bn_params(cout)}

    return {
        "b0_0": basic(32, 320, 1),
        "b1_0": basic(32, 320, 1),
        "b1_1": basic(32, 32, 3),
        "b2_0": basic(32, 320, 1),
        "b2_1": basic(48, 32, 3),
        "b2_2": basic(64, 48, 3),
        "conv2d_w": conv_w(320, 128, 1),
        "conv2d_b": 0.05 * jax.random.normal(next(keys), (320,), jnp.float32),
    }


def prepare_block35_params(params):
    """One-time prep: BN folding, layout transposes, stem fusion, bf16 cast."""
    def stem(layer):
        w = layer["w_oihw"][:, :, 0, 0].T               # (Cin, Cout)
        s, b = _fold_bn(*layer["bn"])
        return w, s, b

    w0, s0, b0 = stem(params["b0_0"])
    w1, s1, b1 = stem(params["b1_0"])
    w2, s2, b2 = stem(params["b2_0"])

    def conv3(layer):
        w = jnp.transpose(layer["w_oihw"], (2, 3, 1, 0))  # HWIO (3,3,Ci,Co)
        s, b = _fold_bn(*layer["bn"])
        co = w.shape[-1]
        return (w.astype(jnp.bfloat16),
                s.reshape(1, co).astype(jnp.float32),
                b.reshape(1, co).astype(jnp.float32))

    w11, s11, b11 = conv3(params["b1_1"])
    w21, s21, b21 = conv3(params["b2_1"])
    w22, s22, b22 = conv3(params["b2_2"])

    wf = params["conv2d_w"][:, :, 0, 0].T                 # (128, 320)

    return {
        "w96": jnp.concatenate([w0, w1, w2], axis=1).astype(jnp.bfloat16),
        "s96": jnp.concatenate([s0, s1, s2]).reshape(1, 96).astype(jnp.float32),
        "b96": jnp.concatenate([b0, b1, b2]).reshape(1, 96).astype(jnp.float32),
        "w11": w11, "s11": s11, "b11": b11,
        "w21": w21, "s21": s21, "b21": b21,
        "w22": w22, "s22": s22, "b22": b22,
        "wf0": wf[0:32].astype(jnp.bfloat16),
        "wf1": wf[32:64].astype(jnp.bfloat16),
        "wf2": wf[64:128].astype(jnp.bfloat16),
        "fb": params["conv2d_b"].reshape(1, 320).astype(jnp.float32),
    }


# ----------------------------------------------------------------------------
# Block35 forward (Pallas path, NCHW in/out like the PyTorch module)
# ----------------------------------------------------------------------------
@functools.partial(jax.jit, static_argnames=("scale",))
def block35_forward(x_nchw, prepped, scale=1.0):
    x = jnp.transpose(x_nchw, (0, 2, 3, 1)).astype(jnp.float32)   # NCHW -> NHWC
    out = _block35_pallas(x, prepped, scale)
    return jnp.transpose(out, (0, 3, 1, 2))                       # NHWC -> NCHW


# ----------------------------------------------------------------------------
# Pure-JAX reference (f32, HIGHEST precision) for the correctness check
# ----------------------------------------------------------------------------
def _ref_basic(x_nhwc, layer, pad):
    w = jnp.transpose(layer["w_oihw"], (2, 3, 1, 0))  # HWIO
    y = lax.conv_general_dilated(
        x_nhwc, w, (1, 1), [(pad, pad), (pad, pad)],
        dimension_numbers=("NHWC", "HWIO", "NHWC"),
        precision=lax.Precision.HIGHEST)
    s, b = _fold_bn(*layer["bn"])
    return jnp.maximum(y * s + b, 0.0)


def block35_reference(x_nchw, params, scale=1.0):
    x = jnp.transpose(x_nchw, (0, 2, 3, 1)).astype(jnp.float32)
    x0 = _ref_basic(x, params["b0_0"], 0)
    x1 = _ref_basic(_ref_basic(x, params["b1_0"], 0), params["b1_1"], 1)
    x2 = _ref_basic(
        _ref_basic(_ref_basic(x, params["b2_0"], 0), params["b2_1"], 1),
        params["b2_2"], 1)
    cat = jnp.concatenate([x0, x1, x2], axis=-1)
    w = jnp.transpose(params["conv2d_w"], (2, 3, 1, 0))
    y = lax.conv_general_dilated(
        cat, w, (1, 1), [(0, 0), (0, 0)],
        dimension_numbers=("NHWC", "HWIO", "NHWC"),
        precision=lax.Precision.HIGHEST) + params["conv2d_b"]
    out = jnp.maximum(y * scale + x, 0.0)
    return jnp.transpose(out, (0, 3, 1, 2))


# ----------------------------------------------------------------------------
if __name__ == "__main__":
    key = jax.random.PRNGKey(0)
    k_x, k_p = jax.random.split(key)

    # Small but module-consistent shapes: in-channels must be 320.
    N, C, H, W = 2, 320, 8, 8
    x = jax.random.normal(k_x, (N, C, H, W), jnp.float32)
    params = make_params(k_p)
    prepped = prepare_block35_params(params)
    scale = 0.17  # typical Block35 scale in Inception-ResNet

    out = jax.block_until_ready(block35_forward(x, prepped, scale=scale))
    ref = jax.block_until_ready(block35_reference(x, params, scale=scale))

    assert out.shape == (N, C, H, W), out.shape
    err = float(jnp.max(jnp.abs(out - ref)))
    # bf16 MXU operands with f32 accumulation -> looser tolerance than pure f32.
    assert err < 5e-2, f"max abs err {err}"

    print("KERNEL_OK")
</pallas_src>

<mosaic_0001>
module attributes {stable_mosaic.version = 11 : i64} {
  func.func @_block35_kernel(%arg0: i32, %arg1: memref<1x8x8x320xf32, #tpu.memory_space<vmem>>, %arg2: memref<320x96xbf16, #tpu.memory_space<vmem>>, %arg3: memref<1x96xf32, #tpu.memory_space<vmem>>, %arg4: memref<1x96xf32, #tpu.memory_space<vmem>>, %arg5: memref<3x3x32x32xbf16, #tpu.memory_space<vmem>>, %arg6: memref<1x32xf32, #tpu.memory_space<vmem>>, %arg7: memref<1x32xf32, #tpu.memory_space<vmem>>, %arg8: memref<3x3x32x48xbf16, #tpu.memory_space<vmem>>, %arg9: memref<1x48xf32, #tpu.memory_space<vmem>>, %arg10: memref<1x48xf32, #tpu.memory_space<vmem>>, %arg11: memref<3x3x48x64xbf16, #tpu.memory_space<vmem>>, %arg12: memref<1x64xf32, #tpu.memory_space<vmem>>, %arg13: memref<1x64xf32, #tpu.memory_space<vmem>>, %arg14: memref<32x320xbf16, #tpu.memory_space<vmem>>, %arg15: memref<32x320xbf16, #tpu.memory_space<vmem>>, %arg16: memref<64x320xbf16, #tpu.memory_space<vmem>>, %arg17: memref<1x320xf32, #tpu.memory_space<vmem>>, %arg18: memref<1x8x8x320xf32, #tpu.memory_space<vmem>>, %arg19: memref<10x24x32xf32, #tpu.memory_space<vmem>>, %arg20: memref<10x24x48xf32, #tpu.memory_space<vmem>>) attributes {dimension_semantics = [#tpu.dimension_semantics<parallel>], iteration_bounds = array<i64: 2>, scalar_prefetch = 0 : i64, scratch_operands = 2 : i64, tpu.core_type = #tpu.core_type<tc>, window_params = [{transform_indices = @transform_0, window_bounds = array<i64: 1, 8, 8, 320>}, {pipeline_mode = #tpu.pipeline_mode<synchronous>, transform_indices = @transform_1, window_bounds = array<i64: 320, 96>}, {pipeline_mode = #tpu.pipeline_mode<synchronous>, transform_indices = @transform_2, window_bounds = array<i64: 1, 96>}, {pipeline_mode = #tpu.pipeline_mode<synchronous>, transform_indices = @transform_3, window_bounds = array<i64: 1, 96>}, {pipeline_mode = #tpu.pipeline_mode<synchronous>, transform_indices = @transform_4, window_bounds = array<i64: 3, 3, 32, 32>}, {pipeline_mode = #tpu.pipeline_mode<synchronous>, transform_indices = @transform_5, window_bounds = array<i64: 1, 32>}, {pipeline_mode = #tpu.pipeline_mode<synchronous>, transform_indices = @transform_6, window_bounds = array<i64: 1, 32>}, {pipeline_mode = #tpu.pipeline_mode<synchronous>, transform_indices = @transform_7, window_bounds = array<i64: 3, 3, 32, 48>}, {pipeline_mode = #tpu.pipeline_mode<synchronous>, transform_indices = @transform_8, window_bounds = array<i64: 1, 48>}, {pipeline_mode = #tpu.pipeline_mode<synchronous>, transform_indices = @transform_9, window_bounds = array<i64: 1, 48>}, {pipeline_mode = #tpu.pipeline_mode<synchronous>, transform_indices = @transform_10, window_bounds = array<i64: 3, 3, 48, 64>}, {pipeline_mode = #tpu.pipeline_mode<synchronous>, transform_indices = @transform_11, window_bounds = array<i64: 1, 64>}, {pipeline_mode = #tpu.pipeline_mode<synchronous>, transform_indices = @transform_12, window_bounds = array<i64: 1, 64>}, {pipeline_mode = #tpu.pipeline_mode<synchronous>, transform_indices = @transform_13, window_bounds = array<i64: 32, 320>}, {pipeline_mode = #tpu.pipeline_mode<synchronous>, transform_indices = @transform_14, window_bounds = array<i64: 32, 320>}, {pipeline_mode = #tpu.pipeline_mode<synchronous>, transform_indices = @transform_15, window_bounds = array<i64: 64, 320>}, {pipeline_mode = #tpu.pipeline_mode<synchronous>, transform_indices = @transform_16, window_bounds = array<i64: 1, 320>}, {transform_indices = @transform_17, window_bounds = array<i64: 1, 8, 8, 320>}]} {
    %c0 = arith.constant 0 : index
    %c0_0 = arith.constant 0 : index
    %c0_1 = arith.constant 0 : index
    %c0_2 = arith.constant 0 : index
    %0 = vector.load %arg1[%c0, %c0_0, %c0_1, %c0_2] : memref<1x8x8x320xf32, #tpu.memory_space<vmem>>, vector<1x8x8x320xf32>
    %1 = vector.shape_cast %0 : vector<1x8x8x320xf32> to vector<8x8x320xf32>
    %2 = vector.shape_cast %1 : vector<8x8x320xf32> to vector<64x320xf32>
    %3 = arith.truncf %2 : vector<64x320xf32> to vector<64x320xbf16>
    %c0_3 = arith.constant 0 : index
    %c0_4 = arith.constant 0 : index
    %4 = vector.load %arg2[%c0_3, %c0_4] : memref<320x96xbf16, #tpu.memory_space<vmem>>, vector<320x96xbf16>
    %cst = arith.constant dense<0.000000e+00> : vector<64x96xf32>
    %5 = tpu.matmul %3, %4, %cst {dimension_numbers = #tpu.dot_dimension_numbers<[1], [0], [0], [1], [0, 0, 1, 1], [], []>} : vector<64x320xbf16>, vector<320x96xbf16>, vector<64x96xf32> -> vector<64x96xf32>
    %c0_5 = arith.constant 0 : index
    %c0_6 = arith.constant 0 : index
    %6 = vector.load %arg3[%c0_5, %c0_6] : memref<1x96xf32, #tpu.memory_space<vmem>>, vector<1x96xf32>
    %7 = vector.broadcast %6 : vector<1x96xf32> to vector<64x96xf32>
    %8 = arith.mulf %5, %7 : vector<64x96xf32>
    %c0_7 = arith.constant 0 : index
    %c0_8 = arith.constant 0 : index
    %9 = vector.load %arg4[%c0_7, %c0_8] : memref<1x96xf32, #tpu.memory_space<vmem>>, vector<1x96xf32>
    %10 = vector.broadcast %9 : vector<1x96xf32> to vector<64x96xf32>
    %11 = arith.addf %8, %10 : vector<64x96xf32>
    %cst_9 = arith.constant 0.000000e+00 : f32
    %12 = vector.broadcast %cst_9 : f32 to vector<64x96xf32>
    %13 = arith.maximumf %11, %12 : vector<64x96xf32>
    %14 = vector.extract_strided_slice %13 {offsets = [0, 0], sizes = [64, 32], strides = [1, 1]} : vector<64x96xf32> to vector<64x32xf32>
    %15 = vector.extract_strided_slice %13 {offsets = [0, 32], sizes = [64, 32], strides = [1, 1]} : vector<64x96xf32> to vector<64x32xf32>
    %16 = vector.shape_cast %15 : vector<64x32xf32> to vector<8x8x32xf32>
    %cst_10 = arith.constant 0.000000e+00 : f32
    %17 = vector.broadcast %cst_10 : f32 to vector<10x24x32xf32>
    %c0_11 = arith.constant 0 : index
    %c0_12 = arith.constant 0 : index
    %c0_13 = arith.constant 0 : index
    %18 = vector.load %arg19[%c0_11, %c0_12, %c0_13] : memref<10x24x32xf32, #tpu.memory_space<vmem>>, vector<10x24x32xf32>
    tpu.vector_store %arg19[%c0_11, %c0_12, %c0_13], %17 {strides = array<i32>} : memref<10x24x32xf32, #tpu.memory_space<vmem>>, vector<10x24x32xf32>,
    %c1 = arith.constant 1 : index
    %c8 = arith.constant 8 : index
    %c0_14 = arith.constant 0 : index
    %19 = vector.load %arg19[%c1, %c8, %c0_14] : memref<10x24x32xf32, #tpu.memory_space<vmem>>, vector<8x8x32xf32>
    tpu.vector_store %arg19[%c1, %c8, %c0_14], %16 {strides = array<i32>} : memref<10x24x32xf32, #tpu.memory_space<vmem>>, vector<8x8x32xf32>,
    %c0_15 = arith.constant 0 : index
    %c0_16 = arith.constant 0 : index
    %c0_17 = arith.constant 0 : index
    %20 = vector.load %arg19[%c0_15, %c0_16, %c0_17] : memref<10x24x32xf32, #tpu.memory_space<vmem>>, vector<10x24x32xf32>
    %21 = vector.extract_strided_slice %20 {offsets = [0, 0, 0], sizes = [8, 24, 32], strides = [1, 1, 1]} : vector<10x24x32xf32> to vector<8x24x32xf32>
    %22 = vector.extract_strided_slice %21 {offsets = [0, 7, 0], sizes = [8, 8, 32], strides = [1, 1, 1]} : vector<8x24x32xf32> to vector<8x8x32xf32>
    %23 = vector.shape_cast %22 : vector<8x8x32xf32> to vector<64x32xf32>
    %24 = arith.truncf %23 : vector<64x32xf32> to vector<64x32xbf16>
    %c0_18 = arith.constant 0 : index
    %c0_19 = arith.constant 0 : index
    %c0_20 = arith.constant 0 : index
    %c0_21 = arith.constant 0 : index
    %25 = vector.load %arg5[%c0_18, %c0_19, %c0_20, %c0_21] : memref<3x3x32x32xbf16, #tpu.memory_space<vmem>>, vector<1x1x32x32xbf16>
    %26 = vector.shape_cast %25 : vector<1x1x32x32xbf16> to vector<32x32xbf16>
    %cst_22 = arith.constant dense<0.000000e+00> : vector<64x32xf32>
    %27 = tpu.matmul %24, %26, %cst_22 {dimension_numbers = #tpu.dot_dimension_numbers<[1], [0], [0], [1], [0, 0, 1, 1], [], []>} : vector<64x32xbf16>, vector<32x32xbf16>, vector<64x32xf32> -> vector<64x32xf32>
    %28 = vector.extract_strided_slice %21 {offsets = [0, 8, 0], sizes = [8, 8, 32], strides = [1, 1, 1]} : vector<8x24x32xf32> to vector<8x8x32xf32>
    %29 = vector.shape_cast %28 : vector<8x8x32xf32> to vector<64x32xf32>
    %30 = arith.truncf %29 : vector<64x32xf32> to vector<64x32xbf16>
    %c0_23 = arith.constant 0 : index
    %c1_24 = arith.constant 1 : index
    %c0_25 = arith.constant 0 : index
    %c0_26 = arith.constant 0 : index
    %31 = vector.load %arg5[%c0_23, %c1_24, %c0_25, %c0_26] : memref<3x3x32x32xbf16, #tpu.memory_space<vmem>>, vector<1x1x32x32xbf16>
    %32 = vector.shape_cast %31 : vector<1x1x32x32xbf16> to vector<32x32xbf16>
    %cst_27 = arith.constant dense<0.000000e+00> : vector<64x32xf32>
    %33 = tpu.matmul %30, %32, %cst_27 {dimension_numbers = #tpu.dot_dimension_numbers<[1], [0], [0], [1], [0, 0, 1, 1], [], []>} : vector<64x32xbf16>, vector<32x32xbf16>, vector<64x32xf32> -> vector<64x32xf32>
    %34 = arith.addf %27, %33 : vector<64x32xf32>
    %35 = vector.extract_strided_slice %21 {offsets = [0, 9, 0], sizes = [8, 8, 32], strides = [1, 1, 1]} : vector<8x24x32xf32> to vector<8x8x32xf32>
    %36 = vector.shape_cast %35 : vector<8x8x32xf32> to vector<64x32xf32>
    %37 = arith.truncf %36 : vector<64x32xf32> to vector<64x32xbf16>
    %c0_28 = arith.constant 0 : index
    %c2 = arith.constant 2 : index
    %c0_29 = arith.constant 0 : index
    %c0_30 = arith.constant 0 : index
    %38 = vector.load %arg5[%c0_28, %c2, %c0_29, %c0_30] : memref<3x3x32x32xbf16, #tpu.memory_space<vmem>>, vector<1x1x32x32xbf16>
    %39 = vector.shape_cast %38 : vector<1x1x32x32xbf16> to vector<32x32xbf16>
    %cst_31 = arith.constant dense<0.000000e+00> : vector<64x32xf32>
    %40 = tpu.matmul %37, %39, %cst_31 {dimension_numbers = #tpu.dot_dimension_numbers<[1], [0], [0], [1], [0, 0, 1, 1], [], []>} : vector<64x32xbf16>, vector<32x32xbf16>, vector<64x32xf32> -> vector<64x32xf32>
    %41 = arith.addf %34, %40 : vector<64x32xf32>
    %42 = vector.extract_strided_slice %20 {offsets = [1, 0, 0], sizes = [8, 24, 32], strides = [1, 1, 1]} : vector<10x24x32xf32> to vector<8x24x32xf32>
    %43 = vector.extract_strided_slice %42 {offsets = [0, 7, 0], sizes = [8, 8, 32], strides = [1, 1, 1]} : vector<8x24x32xf32> to vector<8x8x32xf32>
    %44 = vector.shape_cast %43 : vector<8x8x32xf32> to vector<64x32xf32>
    %45 = arith.truncf %44 : vector<64x32xf32> to vector<64x32xbf16>
    %c1_32 = arith.constant 1 : index
    %c0_33 = arith.constant 0 : index
    %c0_34 = arith.constant 0 : index
    %c0_35 = arith.constant 0 : index
    %46 = vector.load %arg5[%c1_32, %c0_33, %c0_34, %c0_35] : memref<3x3x32x32xbf16, #tpu.memory_space<vmem>>, vector<1x1x32x32xbf16>
    %47 = vector.shape_cast %46 : vector<1x1x32x32xbf16> to vector<32x32xbf16>
    %cst_36 = arith.constant dense<0.000000e+00> : vector<64x32xf32>
    %48 = tpu.matmul %45, %47, %cst_36 {dimension_numbers = #tpu.dot_dimension_numbers<[1], [0], [0], [1], [0, 0, 1, 1], [], []>} : vector<64x32xbf16>, vector<32x32xbf16>, vector<64x32xf32> -> vector<64x32xf32>
    %49 = arith.addf %41, %48 : vector<64x32xf32>
    %50 = vector.extract_strided_slice %42 {offsets = [0, 8, 0], sizes = [8, 8, 32], strides = [1, 1, 1]} : vector<8x24x32xf32> to vector<8x8x32xf32>
    %51 = vector.shape_cast %50 : vector<8x8x32xf32> to vector<64x32xf32>
    %52 = arith.truncf %51 : vector<64x32xf32> to vector<64x32xbf16>
    %c1_37 = arith.constant 1 : index
    %c1_38 = arith.constant 1 : index
    %c0_39 = arith.constant 0 : index
    %c0_40 = arith.constant 0 : index
    %53 = vector.load %arg5[%c1_37, %c1_38, %c0_39, %c0_40] : memref<3x3x32x32xbf16, #tpu.memory_space<vmem>>, vector<1x1x32x32xbf16>
    %54 = vector.shape_cast %53 : vector<1x1x32x32xbf16> to vector<32x32xbf16>
    %cst_41 = arith.constant dense<0.000000e+00> : vector<64x32xf32>
    %55 = tpu.matmul %52, %54, %cst_41 {dimension_numbers = #tpu.dot_dimension_numbers<[1], [0], [0], [1], [0, 0, 1, 1], [], []>} : vector<64x32xbf16>, vector<32x32xbf16>, vector<64x32xf32> -> vector<64x32xf32>
    %56 = arith.addf %49, %55 : vector<64x32xf32>
    %57 = vector.extract_strided_slice %42 {offsets = [0, 9, 0], sizes = [8, 8, 32], strides = [1, 1, 1]} : vector<8x24x32xf32> to vector<8x8x32xf32>
    %58 = vector.shape_cast %57 : vector<8x8x32xf32> to vector<64x32xf32>
    %59 = arith.truncf %58 : vector<64x32xf32> to vector<64x32xbf16>
    %c1_42 = arith.constant 1 : index
    %c2_43 = arith.constant 2 : index
    %c0_44 = arith.constant 0 : index
    %c0_45 = arith.constant 0 : index
    %60 = vector.load %arg5[%c1_42, %c2_43, %c0_44, %c0_45] : memref<3x3x32x32xbf16, #tpu.memory_space<vmem>>, vector<1x1x32x32xbf16>
    %61 = vector.shape_cast %60 : vector<1x1x32x32xbf16> to vector<32x32xbf16>
    %cst_46 = arith.constant dense<0.000000e+00> : vector<64x32xf32>
    %62 = tpu.matmul %59, %61, %cst_46 {dimension_numbers = #tpu.dot_dimension_numbers<[1], [0], [0], [1], [0, 0, 1, 1], [], []>} : vector<64x32xbf16>, vector<32x32xbf16>, vector<64x32xf32> -> vector<64x32xf32>
    %63 = arith.addf %56, %62 : vector<64x32xf32>
    %64 = vector.extract_strided_slice %20 {offsets = [2, 0, 0], sizes = [8, 24, 32], strides = [1, 1, 1]} : vector<10x24x32xf32> to vector<8x24x32xf32>
    %65 = vector.extract_strided_slice %64 {offsets = [0, 7, 0], sizes = [8, 8, 32], strides = [1, 1, 1]} : vector<8x24x32xf32> to vector<8x8x32xf32>
    %66 = vector.shape_cast %65 : vector<8x8x32xf32> to vector<64x32xf32>
    %67 = arith.truncf %66 : vector<64x32xf32> to vector<64x32xbf16>
    %c2_47 = arith.constant 2 : index
    %c0_48 = arith.constant 0 : index
    %c0_49 = arith.constant 0 : index
    %c0_50 = arith.constant 0 : index
    %68 = vector.load %arg5[%c2_47, %c0_48, %c0_49, %c0_50] : memref<3x3x32x32xbf16, #tpu.memory_space<vmem>>, vector<1x1x32x32xbf16>
    %69 = vector.shape_cast %68 : vector<1x1x32x32xbf16> to vector<32x32xbf16>
    %cst_51 = arith.constant dense<0.000000e+00> : vector<64x32xf32>
    %70 = tpu.matmul %67, %69, %cst_51 {dimension_numbers = #tpu.dot_dimension_numbers<[1], [0], [0], [1], [0, 0, 1, 1], [], []>} : vector<64x32xbf16>, vector<32x32xbf16>, vector<64x32xf32> -> vector<64x32xf32>
    %71 = arith.addf %63, %70 : vector<64x32xf32>
    %72 = vector.extract_strided_slice %64 {offsets = [0, 8, 0], sizes = [8, 8, 32], strides = [1, 1, 1]} : vector<8x24x32xf32> to vector<8x8x32xf32>
    %73 = vector.shape_cast %72 : vector<8x8x32xf32> to vector<64x32xf32>
    %74 = arith.truncf %73 : vector<64x32xf32> to vector<64x32xbf16>
    %c2_52 = arith.constant 2 : index
    %c1_53 = arith.constant 1 : index
    %c0_54 = arith.constant 0 : index
    %c0_55 = arith.constant 0 : index
    %75 = vector.load %arg5[%c2_52, %c1_53, %c0_54, %c0_55] : memref<3x3x32x32xbf16, #tpu.memory_space<vmem>>, vector<1x1x32x32xbf16>
    %76 = vector.shape_cast %75 : vector<1x1x32x32xbf16> to vector<32x32xbf16>
    %cst_56 = arith.constant dense<0.000000e+00> : vector<64x32xf32>
    %77 = tpu.matmul %74, %76, %cst_56 {dimension_numbers = #tpu.dot_dimension_numbers<[1], [0], [0], [1], [0, 0, 1, 1], [], []>} : vector<64x32xbf16>, vector<32x32xbf16>, vector<64x32xf32> -> vector<64x32xf32>
    %78 = arith.addf %71, %77 : vector<64x32xf32>
    %79 = vector.extract_strided_slice %64 {offsets = [0, 9, 0], sizes = [8, 8, 32], strides = [1, 1, 1]} : vector<8x24x32xf32> to vector<8x8x32xf32>
    %80 = vector.shape_cast %79 : vector<8x8x32xf32> to vector<64x32xf32>
    %81 = arith.truncf %80 : vector<64x32xf32> to vector<64x32xbf16>
    %c2_57 = arith.constant 2 : index
    %c2_58 = arith.constant 2 : index
    %c0_59 = arith.constant 0 : index
    %c0_60 = arith.constant 0 : index
    %82 = vector.load %arg5[%c2_57, %c2_58, %c0_59, %c0_60] : memref<3x3x32x32xbf16, #tpu.memory_space<vmem>>, vector<1x1x32x32xbf16>
    %83 = vector.shape_cast %82 : vector<1x1x32x32xbf16> to vector<32x32xbf16>
    %cst_61 = arith.constant dense<0.000000e+00> : vector<64x32xf32>
    %84 = tpu.matmul %81, %83, %cst_61 {dimension_numbers = #tpu.dot_dimension_numbers<[1], [0], [0], [1], [0, 0, 1, 1], [], []>} : vector<64x32xbf16>, vector<32x32xbf16>, vector<64x32xf32> -> vector<64x32xf32>
    %85 = arith.addf %78, %84 : vector<64x32xf32>
    %c0_62 = arith.constant 0 : index
    %c0_63 = arith.constant 0 : index
    %86 = vector.load %arg6[%c0_62, %c0_63] : memref<1x32xf32, #tpu.memory_space<vmem>>, vector<1x32xf32>
    %87 = vector.broadcast %86 : vector<1x32xf32> to vector<64x32xf32>
    %88 = arith.mulf %85, %87 : vector<64x32xf32>
    %c0_64 = arith.constant 0 : index
    %c0_65 = arith.constant 0 : index
    %89 = vector.load %arg7[%c0_64, %c0_65] : memref<1x32xf32, #tpu.memory_space<vmem>>, vector<1x32xf32>
    %90 = vector.broadcast %89 : vector<1x32xf32> to vector<64x32xf32>
    %91 = arith.addf %88, %90 : vector<64x32xf32>
    %cst_66 = arith.constant 0.000000e+00 : f32
    %92 = vector.broadcast %cst_66 : f32 to vector<64x32xf32>
    %93 = arith.maximumf %91, %92 : vector<64x32xf32>
    %94 = vector.extract_strided_slice %13 {offsets = [0, 64], sizes = [64, 32], strides = [1, 1]} : vector<64x96xf32> to vector<64x32xf32>
    %95 = vector.shape_cast %94 : vector<64x32xf32> to vector<8x8x32xf32>
    %cst_67 = arith.constant 0.000000e+00 : f32
    %96 = vector.broadcast %cst_67 : f32 to vector<10x24x32xf32>
    %c0_68 = arith.constant 0 : index
    %c0_69 = arith.constant 0 : index
    %c0_70 = arith.constant 0 : index
    %97 = vector.load %arg19[%c0_68, %c0_69, %c0_70] : memref<10x24x32xf32, #tpu.memory_space<vmem>>, vector<10x24x32xf32>
    tpu.vector_store %arg19[%c0_68, %c0_69, %c0_70], %96 {strides = array<i32>} : memref<10x24x32xf32, #tpu.memory_space<vmem>>, vector<10x24x32xf32>,
    %c1_71 = arith.constant 1 : index
    %c8_72 = arith.constant 8 : index
    %c0_73 = arith.constant 0 : index
    %98 = vector.load %arg19[%c1_71, %c8_72, %c0_73] : memref<10x24x32xf32, #tpu.memory_space<vmem>>, vector<8x8x32xf32>
    tpu.vector_store %arg19[%c1_71, %c8_72, %c0_73], %95 {strides = array<i32>} : memref<10x24x32xf32, #tpu.memory_space<vmem>>, vector<8x8x32xf32>,
    %c0_74 = arith.constant 0 : index
    %c0_75 = arith.constant 0 : index
    %c0_76 = arith.constant 0 : index
    %99 = vector.load %arg19[%c0_74, %c0_75, %c0_76] : memref<10x24x32xf32, #tpu.memory_space<vmem>>, vector<10x24x32xf32>
    %100 = vector.extract_strided_slice %99 {offsets = [0, 0, 0], sizes = [8, 24, 32], strides = [1, 1, 1]} : vector<10x24x32xf32> to vector<8x24x32xf32>
    %101 = vector.extract_strided_slice %100 {offsets = [0, 7, 0], sizes = [8, 8, 32], strides = [1, 1, 1]} : vector<8x24x32xf32> to vector<8x8x32xf32>
    %102 = vector.shape_cast %101 : vector<8x8x32xf32> to vector<64x32xf32>
    %103 = arith.truncf %102 : vector<64x32xf32> to vector<64x32xbf16>
    %c0_77 = arith.constant 0 : index
    %c0_78 = arith.constant 0 : index
    %c0_79 = arith.constant 0 : index
    %c0_80 = arith.constant 0 : index
    %104 = vector.load %arg8[%c0_77, %c0_78, %c0_79, %c0_80] : memref<3x3x32x48xbf16, #tpu.memory_space<vmem>>, vector<1x1x32x48xbf16>
    %105 = vector.shape_cast %104 : vector<1x1x32x48xbf16> to vector<32x48xbf16>
    %cst_81 = arith.constant dense<0.000000e+00> : vector<64x48xf32>
    %106 = tpu.matmul %103, %105, %cst_81 {dimension_numbers = #tpu.dot_dimension_numbers<[1], [0], [0], [1], [0, 0, 1, 1], [], []>} : vector<64x32xbf16>, vector<32x48xbf16>, vector<64x48xf32> -> vector<64x48xf32>
    %107 = vector.extract_strided_slice %100 {offsets = [0, 8, 0], sizes = [8, 8, 32], strides = [1, 1, 1]} : vector<8x24x32xf32> to vector<8x8x32xf32>
    %108 = vector.shape_cast %107 : vector<8x8x32xf32> to vector<64x32xf32>
    %109 = arith.truncf %108 : vector<64x32xf32> to vector<64x32xbf16>
    %c0_82 = arith.constant 0 : index
    %c1_83 = arith.constant 1 : index
    %c0_84 = arith.constant 0 : index
    %c0_85 = arith.constant 0 : index
    %110 = vector.load %arg8[%c0_82, %c1_83, %c0_84, %c0_85] : memref<3x3x32x48xbf16, #tpu.memory_space<vmem>>, vector<1x1x32x48xbf16>
    %111 = vector.shape_cast %110 : vector<1x1x32x48xbf16> to vector<32x48xbf16>
    %cst_86 = arith.constant dense<0.000000e+00> : vector<64x48xf32>
    %112 = tpu.matmul %109, %111, %cst_86 {dimension_numbers = #tpu.dot_dimension_numbers<[1], [0], [0], [1], [0, 0, 1, 1], [], []>} : vector<64x32xbf16>, vector<32x48xbf16>, vector<64x48xf32> -> vector<64x48xf32>
    %113 = arith.addf %106, %112 : vector<64x48xf32>
    %114 = vector.extract_strided_slice %100 {offsets = [0, 9, 0], sizes = [8, 8, 32], strides = [1, 1, 1]} : vector<8x24x32xf32> to vector<8x8x32xf32>
    %115 = vector.shape_cast %114 : vector<8x8x32xf32> to vector<64x32xf32>
    %116 = arith.truncf %115 : vector<64x32xf32> to vector<64x32xbf16>
    %c0_87 = arith.constant 0 : index
    %c2_88 = arith.constant 2 : index
    %c0_89 = arith.constant 0 : index
    %c0_90 = arith.constant 0 : index
    %117 = vector.load %arg8[%c0_87, %c2_88, %c0_89, %c0_90] : memref<3x3x32x48xbf16, #tpu.memory_space<vmem>>, vector<1x1x32x48xbf16>
    %118 = vector.shape_cast %117 : vector<1x1x32x48xbf16> to vector<32x48xbf16>
    %cst_91 = arith.constant dense<0.000000e+00> : vector<64x48xf32>
    %119 = tpu.matmul %116, %118, %cst_91 {dimension_numbers = #tpu.dot_dimension_numbers<[1], [0], [0], [1], [0, 0, 1, 1], [], []>} : vector<64x32xbf16>, vector<32x48xbf16>, vector<64x48xf32> -> vector<64x48xf32>
    %120 = arith.addf %113, %119 : vector<64x48xf32>
    %121 = vector.extract_strided_slice %99 {offsets = [1, 0, 0], sizes = [8, 24, 32], strides = [1, 1, 1]} : vector<10x24x32xf32> to vector<8x24x32xf32>
    %122 = vector.extract_strided_slice %121 {offsets = [0, 7, 0], sizes = [8, 8, 32], strides = [1, 1, 1]} : vector<8x24x32xf32> to vector<8x8x32xf32>
    %123 = vector.shape_cast %122 : vector<8x8x32xf32> to vector<64x32xf32>
    %124 = arith.truncf %123 : vector<64x32xf32> to vector<64x32xbf16>
    %c1_92 = arith.constant 1 : index
    %c0_93 = arith.constant 0 : index
    %c0_94 = arith.constant 0 : index
    %c0_95 = arith.constant 0 : index
    %125 = vector.load %arg8[%c1_92, %c0_93, %c0_94, %c0_95] : memref<3x3x32x48xbf16, #tpu.memory_space<vmem>>, vector<1x1x32x48xbf16>
    %126 = vector.shape_cast %125 : vector<1x1x32x48xbf16> to vector<32x48xbf16>
    %cst_96 = arith.constant dense<0.000000e+00> : vector<64x48xf32>
    %127 = tpu.matmul %124, %126, %cst_96 {dimension_numbers = #tpu.dot_dimension_numbers<[1], [0], [0], [1], [0, 0, 1, 1], [], []>} : vector<64x32xbf16>, vector<32x48xbf16>, vector<64x48xf32> -> vector<64x48xf32>
    %128 = arith.addf %120, %127 : vector<64x48xf32>
    %129 = vector.extract_strided_slice %121 {offsets = [0, 8, 0], sizes = [8, 8, 32], strides = [1, 1, 1]} : vector<8x24x32xf32> to vector<8x8x32xf32>
    %130 = vector.shape_cast %129 : vector<8x8x32xf32> to vector<64x32xf32>
    %131 = arith.truncf %130 : vector<64x32xf32> to vector<64x32xbf16>
    %c1_97 = arith.constant 1 : index
    %c1_98 = arith.constant 1 : index
    %c0_99 = arith.constant 0 : index
    %c0_100 = arith.constant 0 : index
    %132 = vector.load %arg8[%c1_97, %c1_98, %c0_99, %c0_100] : memref<3x3x32x48xbf16, #tpu.memory_space<vmem>>, vector<1x1x32x48xbf16>
    %133 = vector.shape_cast %132 : vector<1x1x32x48xbf16> to vector<32x48xbf16>
    %cst_101 = arith.constant dense<0.000000e+00> : vector<64x48xf32>
    %134 = tpu.matmul %131, %133, %cst_101 {dimension_numbers = #tpu.dot_dimension_numbers<[1], [0], [0], [1], [0, 0, 1, 1], [], []>} : vector<64x32xbf16>, vector<32x48xbf16>, vector<64x48xf32> -> vector<64x48xf32>
    %135 = arith.addf %128, %134 : vector<64x48xf32>
    %136 = vector.extract_strided_slice %121 {offsets = [0, 9, 0], sizes = [8, 8, 32], strides = [1, 1, 1]} : vector<8x24x32xf32> to vector<8x8x32xf32>
    %137 = vector.shape_cast %136 : vector<8x8x32xf32> to vector<64x32xf32>
    %138 = arith.truncf %137 : vector<64x32xf32> to vector<64x32xbf16>
    %c1_102 = arith.constant 1 : index
    %c2_103 = arith.constant 2 : index
    %c0_104 = arith.constant 0 : index
    %c0_105 = arith.constant 0 : index
    %139 = vector.load %arg8[%c1_102, %c2_103, %c0_104, %c0_105] : memref<3x3x32x48xbf16, #tpu.memory_space<vmem>>, vector<1x1x32x48xbf16>
    %140 = vector.shape_cast %139 : vector<1x1x32x48xbf16> to vector<32x48xbf16>
    %cst_106 = arith.constant dense<0.000000e+00> : vector<64x48xf32>
    %141 = tpu.matmul %138, %140, %cst_106 {dimension_numbers = #tpu.dot_dimension_numbers<[1], [0], [0], [1], [0, 0, 1, 1], [], []>} : vector<64x32xbf16>, vector<32x48xbf16>, vector<64x48xf32> -> vector<64x48xf32>
    %142 = arith.addf %135, %141 : vector<64x48xf32>
    %143 = vector.extract_strided_slice %99 {offsets = [2, 0, 0], sizes = [8, 24, 32], strides = [1, 1, 1]} : vector<10x24x32xf32> to vector<8x24x32xf32>
    %144 = vector.extract_strided_slice %143 {offsets = [0, 7, 0], sizes = [8, 8, 32], strides = [1, 1, 1]} : vector<8x24x32xf32> to vector<8x8x32xf32>
    %145 = vector.shape_cast %144 : vector<8x8x32xf32> to vector<64x32xf32>
    %146 = arith.truncf %145 : vector<64x32xf32> to vector<64x32xbf16>
    %c2_107 = arith.constant 2 : index
    %c0_108 = arith.constant 0 : index
    %c0_109 = arith.constant 0 : index
    %c0_110 = arith.constant 0 : index
    %147 = vector.load %arg8[%c2_107, %c0_108, %c0_109, %c0_110] : memref<3x3x32x48xbf16, #tpu.memory_space<vmem>>, vector<1x1x32x48xbf16>
    %148 = vector.shape_cast %147 : vector<1x1x32x48xbf16> to vector<32x48xbf16>
    %cst_111 = arith.constant dense<0.000000e+00> : vector<64x48xf32>
    %149 = tpu.matmul %146, %148, %cst_111 {dimension_numbers = #tpu.dot_dimension_numbers<[1], [0], [0], [1], [0, 0, 1, 1], [], []>} : vector<64x32xbf16>, vector<32x48xbf16>, vector<64x48xf32> -> vector<64x48xf32>
    %150 = arith.addf %142, %149 : vector<64x48xf32>
    %151 = vector.extract_strided_slice %143 {offsets = [0, 8, 0], sizes = [8, 8, 32], strides = [1, 1, 1]} : vector<8x24x32xf32> to vector<8x8x32xf32>
    %152 = vector.shape_cast %151 : vector<8x8x32xf32> to vector<64x32xf32>
    %153 = arith.truncf %152 : vector<64x32xf32> to vector<64x32xbf16>
    %c2_112 = arith.constant 2 : index
    %c1_113 = arith.constant 1 : index
    %c0_114 = arith.constant 0 : index
    %c0_115 = arith.constant 0 : index
    %154 = vector.load %arg8[%c2_112, %c1_113, %c0_114, %c0_115] : memref<3x3x32x48xbf16, #tpu.memory_space<vmem>>, vector<1x1x32x48xbf16>
    %155 = vector.shape_cast %154 : vector<1x1x32x48xbf16> to vector<32x48xbf16>
    %cst_116 = arith.constant dense<0.000000e+00> : vector<64x48xf32>
    %156 = tpu.matmul %153, %155, %cst_116 {dimension_numbers = #tpu.dot_dimension_numbers<[1], [0], [0], [1], [0, 0, 1, 1], [], []>} : vector<64x32xbf16>, vector<32x48xbf16>, vector<64x48xf32> -> vector<64x48xf32>
    %157 = arith.addf %150, %156 : vector<64x48xf32>
    %158 = vector.extract_strided_slice %143 {offsets = [0, 9, 0], sizes = [8, 8, 32], strides = [1, 1, 1]} : vector<8x24x32xf32> to vector<8x8x32xf32>
    %159 = vector.shape_cast %158 : vector<8x8x32xf32> to vector<64x32xf32>
    %160 = arith.truncf %159 : vector<64x32xf32> to vector<64x32xbf16>
    %c2_117 = arith.constant 2 : index
    %c2_118 = arith.constant 2 : index
    %c0_119 = arith.constant 0 : index
    %c0_120 = arith.constant 0 : index
    %161 = vector.load %arg8[%c2_117, %c2_118, %c0_119, %c0_120] : memref<3x3x32x48xbf16, #tpu.memory_space<vmem>>, vector<1x1x32x48xbf16>
    %162 = vector.shape_cast %161 : vector<1x1x32x48xbf16> to vector<32x48xbf16>
    %cst_121 = arith.constant dense<0.000000e+00> : vector<64x48xf32>
    %163 = tpu.matmul %160, %162, %cst_121 {dimension_numbers = #tpu.dot_dimension_numbers<[1], [0], [0], [1], [0, 0, 1, 1], [], []>} : vector<64x32xbf16>, vector<32x48xbf16>, vector<64x48xf32> -> vector<64x48xf32>
    %164 = arith.addf %157, %163 : vector<64x48xf32>
    %c0_122 = arith.constant 0 : index
    %c0_123 = arith.constant 0 : index
    %165 = vector.load %arg9[%c0_122, %c0_123] : memref<1x48xf32, #tpu.memory_space<vmem>>, vector<1x48xf32>
    %166 = vector.broadcast %165 : vector<1x48xf32> to vector<64x48xf32>
    %167 = arith.mulf %164, %166 : vector<64x48xf32>
    %c0_124 = arith.constant 0 : index
    %c0_125 = arith.constant 0 : index
    %168 = vector.load %arg10[%c0_124, %c0_125] : memref<1x48xf32, #tpu.memory_space<vmem>>, vector<1x48xf32>
    %169 = vector.broadcast %168 : vector<1x48xf32> to vector<64x48xf32>
    %170 = arith.addf %167, %169 : vector<64x48xf32>
    %cst_126 = arith.constant 0.000000e+00 : f32
    %171 = vector.broadcast %cst_126 : f32 to vector<64x48xf32>
    %172 = arith.maximumf %170, %171 : vector<64x48xf32>
    %173 = vector.shape_cast %172 : vector<64x48xf32> to vector<8x8x48xf32>
    %cst_127 = arith.constant 0.000000e+00 : f32
    %174 = vector.broadcast %cst_127 : f32 to vector<10x24x48xf32>
    %c0_128 = arith.constant 0 : index
    %c0_129 = arith.constant 0 : index
    %c0_130 = arith.constant 0 : index
    %175 = vector.load %arg20[%c0_128, %c0_129, %c0_130] : memref<10x24x48xf32, #tpu.memory_space<vmem>>, vector<10x24x48xf32>
    tpu.vector_store %arg20[%c0_128, %c0_129, %c0_130], %174 {strides = array<i32>} : memref<10x24x48xf32, #tpu.memory_space<vmem>>, vector<10x24x48xf32>,
    %c1_131 = arith.constant 1 : index
    %c8_132 = arith.constant 8 : index
    %c0_133 = arith.constant 0 : index
    %176 = vector.load %arg20[%c1_131, %c8_132, %c0_133] : memref<10x24x48xf32, #tpu.memory_space<vmem>>, vector<8x8x48xf32>
    tpu.vector_store %arg20[%c1_131, %c8_132, %c0_133], %173 {strides = array<i32>} : memref<10x24x48xf32, #tpu.memory_space<vmem>>, vector<8x8x48xf32>,
    %c0_134 = arith.constant 0 : index
    %c0_135 = arith.constant 0 : index
    %c0_136 = arith.constant 0 : index
    %177 = vector.load %arg20[%c0_134, %c0_135, %c0_136] : memref<10x24x48xf32, #tpu.memory_space<vmem>>, vector<10x24x48xf32>
    %178 = vector.extract_strided_slice %177 {offsets = [0, 0, 0], sizes = [8, 24, 48], strides = [1, 1, 1]} : vector<10x24x48xf32> to vector<8x24x48xf32>
    %179 = vector.extract_strided_slice %178 {offsets = [0, 7, 0], sizes = [8, 8, 48], strides = [1, 1, 1]} : vector<8x24x48xf32> to vector<8x8x48xf32>
    %180 = vector.shape_cast %179 : vector<8x8x48xf32> to vector<64x48xf32>
    %181 = arith.truncf %180 : vector<64x48xf32> to vector<64x48xbf16>
    %c0_137 = arith.constant 0 : index
    %c0_138 = arith.constant 0 : index
    %c0_139 = arith.constant 0 : index
    %c0_140 = arith.constant 0 : index
    %182 = vector.load %arg11[%c0_137, %c0_138, %c0_139, %c0_140] : memref<3x3x48x64xbf16, #tpu.memory_space<vmem>>, vector<1x1x48x64xbf16>
    %183 = vector.shape_cast %182 : vector<1x1x48x64xbf16> to vector<48x64xbf16>
    %cst_141 = arith.constant dense<0.000000e+00> : vector<64x64xf32>
    %184 = tpu.matmul %181, %183, %cst_141 {dimension_numbers = #tpu.dot_dimension_numbers<[1], [0], [0], [1], [0, 0, 1, 1], [], []>} : vector<64x48xbf16>, vector<48x64xbf16>, vector<64x64xf32> -> vector<64x64xf32>
    %185 = vector.extract_strided_slice %178 {offsets = [0, 8, 0], sizes = [8, 8, 48], strides = [1, 1, 1]} : vector<8x24x48xf32> to vector<8x8x48xf32>
    %186 = vector.shape_cast %185 : vector<8x8x48xf32> to vector<64x48xf32>
    %187 = arith.truncf %186 : vector<64x48xf32> to vector<64x48xbf16>
    %c0_142 = arith.constant 0 : index
    %c1_143 = arith.constant 1 : index
    %c0_144 = arith.constant 0 : index
    %c0_145 = arith.constant 0 : index
    %188 = vector.load %arg11[%c0_142, %c1_143, %c0_144, %c0_145] : memref<3x3x48x64xbf16, #tpu.memory_space<vmem>>, vector<1x1x48x64xbf16>
    %189 = vector.shape_cast %188 : vector<1x1x48x64xbf16> to vector<48x64xbf16>
    %cst_146 = arith.constant dense<0.000000e+00> : vector<64x64xf32>
    %190 = tpu.matmul %187, %189, %cst_146 {dimension_numbers = #tpu.dot_dimension_numbers<[1], [0], [0], [1], [0, 0, 1, 1], [], []>} : vector<64x48xbf16>, vector<48x64xbf16>, vector<64x64xf32> -> vector<64x64xf32>
    %191 = arith.addf %184, %190 : vector<64x64xf32>
    %192 = vector.extract_strided_slice %178 {offsets = [0, 9, 0], sizes = [8, 8, 48], strides = [1, 1, 1]} : vector<8x24x48xf32> to vector<8x8x48xf32>
    %193 = vector.shape_cast %192 : vector<8x8x48xf32> to vector<64x48xf32>
    %194 = arith.truncf %193 : vector<64x48xf32> to vector<64x48xbf16>
    %c0_147 = arith.constant 0 : index
    %c2_148 = arith.constant 2 : index
    %c0_149 = arith.constant 0 : index
    %c0_150 = arith.constant 0 : index
    %195 = vector.load %arg11[%c0_147, %c2_148, %c0_149, %c0_150] : memref<3x3x48x64xbf16, #tpu.memory_space<vmem>>, vector<1x1x48x64xbf16>
    %196 = vector.shape_cast %195 : vector<1x1x48x64xbf16> to vector<48x64xbf16>
    %cst_151 = arith.constant dense<0.000000e+00> : vector<64x64xf32>
    %197 = tpu.matmul %194, %196, %cst_151 {dimension_numbers = #tpu.dot_dimension_numbers<[1], [0], [0], [1], [0, 0, 1, 1], [], []>} : vector<64x48xbf16>, vector<48x64xbf16>, vector<64x64xf32> -> vector<64x64xf32>
    %198 = arith.addf %191, %197 : vector<64x64xf32>
    %199 = vector.extract_strided_slice %177 {offsets = [1, 0, 0], sizes = [8, 24, 48], strides = [1, 1, 1]} : vector<10x24x48xf32> to vector<8x24x48xf32>
    %200 = vector.extract_strided_slice %199 {offsets = [0, 7, 0], sizes = [8, 8, 48], strides = [1, 1, 1]} : vector<8x24x48xf32> to vector<8x8x48xf32>
    %201 = vector.shape_cast %200 : vector<8x8x48xf32> to vector<64x48xf32>
    %202 = arith.truncf %201 : vector<64x48xf32> to vector<64x48xbf16>
    %c1_152 = arith.constant 1 : index
    %c0_153 = arith.constant 0 : index
    %c0_154 = arith.constant 0 : index
    %c0_155 = arith.constant 0 : index
    %203 = vector.load %arg11[%c1_152, %c0_153, %c0_154, %c0_155] : memref<3x3x48x64xbf16, #tpu.memory_space<vmem>>, vector<1x1x48x64xbf16>
    %204 = vector.shape_cast %203 : vector<1x1x48x64xbf16> to vector<48x64xbf16>
    %cst_156 = arith.constant dense<0.000000e+00> : vector<64x64xf32>
    %205 = tpu.matmul %202, %204, %cst_156 {dimension_numbers = #tpu.dot_dimension_numbers<[1], [0], [0], [1], [0, 0, 1, 1], [], []>} : vector<64x48xbf16>, vector<48x64xbf16>, vector<64x64xf32> -> vector<64x64xf32>
    %206 = arith.addf %198, %205 : vector<64x64xf32>
    %207 = vector.extract_strided_slice %199 {offsets = [0, 8, 0], sizes = [8, 8, 48], strides = [1, 1, 1]} : vector<8x24x48xf32> to vector<8x8x48xf32>
    %208 = vector.shape_cast %207 : vector<8x8x48xf32> to vector<64x48xf32>
    %209 = arith.truncf %208 : vector<64x48xf32> to vector<64x48xbf16>
    %c1_157 = arith.constant 1 : index
    %c1_158 = arith.constant 1 : index
    %c0_159 = arith.constant 0 : index
    %c0_160 = arith.constant 0 : index
    %210 = vector.load %arg11[%c1_157, %c1_158, %c0_159, %c0_160] : memref<3x3x48x64xbf16, #tpu.memory_space<vmem>>, vector<1x1x48x64xbf16>
    %211 = vector.shape_cast %210 : vector<1x1x48x64xbf16> to vector<48x64xbf16>
    %cst_161 = arith.constant dense<0.000000e+00> : vector<64x64xf32>
    %212 = tpu.matmul %209, %211, %cst_161 {dimension_numbers = #tpu.dot_dimension_numbers<[1], [0], [0], [1], [0, 0, 1, 1], [], []>} : vector<64x48xbf16>, vector<48x64xbf16>, vector<64x64xf32> -> vector<64x64xf32>
    %213 = arith.addf %206, %212 : vector<64x64xf32>
    %214 = vector.extract_strided_slice %199 {offsets = [0, 9, 0], sizes = [8, 8, 48], strides = [1, 1, 1]} : vector<8x24x48xf32> to vector<8x8x48xf32>
    %215 = vector.shape_cast %214 : vector<8x8x48xf32> to vector<64x48xf32>
    %216 = arith.truncf %215 : vector<64x48xf32> to vector<64x48xbf16>
    %c1_162 = arith.constant 1 : index
    %c2_163 = arith.constant 2 : index
    %c0_164 = arith.constant 0 : index
    %c0_165 = arith.constant 0 : index
    %217 = vector.load %arg11[%c1_162, %c2_163, %c0_164, %c0_165] : memref<3x3x48x64xbf16, #tpu.memory_space<vmem>>, vector<1x1x48x64xbf16>
    %218 = vector.shape_cast %217 : vector<1x1x48x64xbf16> to vector<48x64xbf16>
    %cst_166 = arith.constant dense<0.000000e+00> : vector<64x64xf32>
    %219 = tpu.matmul %216, %218, %cst_166 {dimension_numbers = #tpu.dot_dimension_numbers<[1], [0], [0], [1], [0, 0, 1, 1], [], []>} : vector<64x48xbf16>, vector<48x64xbf16>, vector<64x64xf32> -> vector<64x64xf32>
    %220 = arith.addf %213, %219 : vector<64x64xf32>
    %221 = vector.extract_strided_slice %177 {offsets = [2, 0, 0], sizes = [8, 24, 48], strides = [1, 1, 1]} : vector<10x24x48xf32> to vector<8x24x48xf32>
    %222 = vector.extract_strided_slice %221 {offsets = [0, 7, 0], sizes = [8, 8, 48], strides = [1, 1, 1]} : vector<8x24x48xf32> to vector<8x8x48xf32>
    %223 = vector.shape_cast %222 : vector<8x8x48xf32> to vector<64x48xf32>
    %224 = arith.truncf %223 : vector<64x48xf32> to vector<64x48xbf16>
    %c2_167 = arith.constant 2 : index
    %c0_168 = arith.constant 0 : index
    %c0_169 = arith.constant 0 : index
    %c0_170 = arith.constant 0 : index
    %225 = vector.load %arg11[%c2_167, %c0_168, %c0_169, %c0_170] : memref<3x3x48x64xbf16, #tpu.memory_space<vmem>>, vector<1x1x48x64xbf16>
    %226 = vector.shape_cast %225 : vector<1x1x48x64xbf16> to vector<48x64xbf16>
    %cst_171 = arith.constant dense<0.000000e+00> : vector<64x64xf32>
    %227 = tpu.matmul %224, %226, %cst_171 {dimension_numbers = #tpu.dot_dimension_numbers<[1], [0], [0], [1], [0, 0, 1, 1], [], []>} : vector<64x48xbf16>, vector<48x64xbf16>, vector<64x64xf32> -> vector<64x64xf32>
    %228 = arith.addf %220, %227 : vector<64x64xf32>
    %229 = vector.extract_strided_slice %221 {offsets = [0, 8, 0], sizes = [8, 8, 48], strides = [1, 1, 1]} : vector<8x24x48xf32> to vector<8x8x48xf32>
    %230 = vector.shape_cast %229 : vector<8x8x48xf32> to vector<64x48xf32>
    %231 = arith.truncf %230 : vector<64x48xf32> to vector<64x48xbf16>
    %c2_172 = arith.constant 2 : index
    %c1_173 = arith.constant 1 : index
    %c0_174 = arith.constant 0 : index
    %c0_175 = arith.constant 0 : index
    %232 = vector.load %arg11[%c2_172, %c1_173, %c0_174, %c0_175] : memref<3x3x48x64xbf16, #tpu.memory_space<vmem>>, vector<1x1x48x64xbf16>
    %233 = vector.shape_cast %232 : vector<1x1x48x64xbf16> to vector<48x64xbf16>
    %cst_176 = arith.constant dense<0.000000e+00> : vector<64x64xf32>
    %234 = tpu.matmul %231, %233, %cst_176 {dimension_numbers = #tpu.dot_dimension_numbers<[1], [0], [0], [1], [0, 0, 1, 1], [], []>} : vector<64x48xbf16>, vector<48x64xbf16>, vector<64x64xf32> -> vector<64x64xf32>
    %235 = arith.addf %228, %234 : vector<64x64xf32>
    %236 = vector.extract_strided_slice %221 {offsets = [0, 9, 0], sizes = [8, 8, 48], strides = [1, 1, 1]} : vector<8x24x48xf32> to vector<8x8x48xf32>
    %237 = vector.shape_cast %236 : vector<8x8x48xf32> to vector<64x48xf32>
    %238 = arith.truncf %237 : vector<64x48xf32> to vector<64x48xbf16>
    %c2_177 = arith.constant 2 : index
    %c2_178 = arith.constant 2 : index
    %c0_179 = arith.constant 0 : index
    %c0_180 = arith.constant 0 : index
    %239 = vector.load %arg11[%c2_177, %c2_178, %c0_179, %c0_180] : memref<3x3x48x64xbf16, #tpu.memory_space<vmem>>, vector<1x1x48x64xbf16>
    %240 = vector.shape_cast %239 : vector<1x1x48x64xbf16> to vector<48x64xbf16>
    %cst_181 = arith.constant dense<0.000000e+00> : vector<64x64xf32>
    %241 = tpu.matmul %238, %240, %cst_181 {dimension_numbers = #tpu.dot_dimension_numbers<[1], [0], [0], [1], [0, 0, 1, 1], [], []>} : vector<64x48xbf16>, vector<48x64xbf16>, vector<64x64xf32> -> vector<64x64xf32>
    %242 = arith.addf %235, %241 : vector<64x64xf32>
    %c0_182 = arith.constant 0 : index
    %c0_183 = arith.constant 0 : index
    %243 = vector.load %arg12[%c0_182, %c0_183] : memref<1x64xf32, #tpu.memory_space<vmem>>, vector<1x64xf32>
    %244 = vector.broadcast %243 : vector<1x64xf32> to vector<64x64xf32>
    %245 = arith.mulf %242, %244 : vector<64x64xf32>
    %c0_184 = arith.constant 0 : index
    %c0_185 = arith.constant 0 : index
    %246 = vector.load %arg13[%c0_184, %c0_185] : memref<1x64xf32, #tpu.memory_space<vmem>>, vector<1x64xf32>
    %247 = vector.broadcast %246 : vector<1x64xf32> to vector<64x64xf32>
    %248 = arith.addf %245, %247 : vector<64x64xf32>
    %cst_186 = arith.constant 0.000000e+00 : f32
    %249 = vector.broadcast %cst_186 : f32 to vector<64x64xf32>
    %250 = arith.maximumf %248, %249 : vector<64x64xf32>
    %251 = arith.truncf %14 : vector<64x32xf32> to vector<64x32xbf16>
    %c0_187 = arith.constant 0 : index
    %c0_188 = arith.constant 0 : index
    %252 = vector.load %arg14[%c0_187, %c0_188] : memref<32x320xbf16, #tpu.memory_space<vmem>>, vector<32x320xbf16>
    %cst_189 = arith.constant dense<0.000000e+00> : vector<64x320xf32>
    %253 = tpu.matmul %251, %252, %cst_189 {dimension_numbers = #tpu.dot_dimension_numbers<[1], [0], [0], [1], [0, 0, 1, 1], [], []>} : vector<64x32xbf16>, vector<32x320xbf16>, vector<64x320xf32> -> vector<64x320xf32>
    %254 = arith.truncf %93 : vector<64x32xf32> to vector<64x32xbf16>
    %c0_190 = arith.constant 0 : index
    %c0_191 = arith.constant 0 : index
    %255 = vector.load %arg15[%c0_190, %c0_191] : memref<32x320xbf16, #tpu.memory_space<vmem>>, vector<32x320xbf16>
    %cst_192 = arith.constant dense<0.000000e+00> : vector<64x320xf32>
    %256 = tpu.matmul %254, %255, %cst_192 {dimension_numbers = #tpu.dot_dimension_numbers<[1], [0], [0], [1], [0, 0, 1, 1], [], []>} : vector<64x32xbf16>, vector<32x320xbf16>, vector<64x320xf32> -> vector<64x320xf32>
    %257 = arith.addf %253, %256 : vector<64x320xf32>
    %258 = arith.truncf %250 : vector<64x64xf32> to vector<64x64xbf16>
    %c0_193 = arith.constant 0 : index
    %c0_194 = arith.constant 0 : index
    %259 = vector.load %arg16[%c0_193, %c0_194] : memref<64x320xbf16, #tpu.memory_space<vmem>>, vector<64x320xbf16>
    %cst_195 = arith.constant dense<0.000000e+00> : vector<64x320xf32>
    %260 = tpu.matmul %258, %259, %cst_195 {dimension_numbers = #tpu.dot_dimension_numbers<[1], [0], [0], [1], [0, 0, 1, 1], [], []>} : vector<64x64xbf16>, vector<64x320xbf16>, vector<64x320xf32> -> vector<64x320xf32>
    %261 = arith.addf %257, %260 : vector<64x320xf32>
    %c0_196 = arith.constant 0 : index
    %c0_197 = arith.constant 0 : index
    %262 = vector.load %arg17[%c0_196, %c0_197] : memref<1x320xf32, #tpu.memory_space<vmem>>, vector<1x320xf32>
    %263 = vector.broadcast %262 : vector<1x320xf32> to vector<64x320xf32>
    %264 = arith.addf %261, %263 : vector<64x320xf32>
    %cst_198 = arith.constant 1.700000e-01 : f32
    %265 = vector.broadcast %cst_198 : f32 to vector<64x320xf32>
    %266 = arith.mulf %264, %265 : vector<64x320xf32>
    %267 = arith.addf %266, %2 : vector<64x320xf32>
    %cst_199 = arith.constant 0.000000e+00 : f32
    %268 = vector.broadcast %cst_199 : f32 to vector<64x320xf32>
    %269 = arith.maximumf %267, %268 : vector<64x320xf32>
    %270 = vector.shape_cast %269 : vector<64x320xf32> to vector<8x8x320xf32>
    %c0_200 = arith.constant 0 : index
    %c0_201 = arith.constant 0 : index
    %c0_202 = arith.constant 0 : index
    %c0_203 = arith.constant 0 : index
    %271 = vector.load %arg18[%c0_200, %c0_201, %c0_202, %c0_203] : memref<1x8x8x320xf32, #tpu.memory_space<vmem>>, vector<1x8x8x320xf32>
    %272 = vector.shape_cast %271 : vector<1x8x8x320xf32> to vector<8x8x320xf32>
    %273 = vector.shape_cast %270 : vector<8x8x320xf32> to vector<1x8x8x320xf32>
    tpu.vector_store %arg18[%c0_200, %c0_201, %c0_202, %c0_203], %273 {strides = array<i32>} : memref<1x8x8x320xf32, #tpu.memory_space<vmem>>, vector<1x8x8x320xf32>,
    return
  }
  func.func @transform_0(%arg0: i32) -> (i32, i32, i32, i32) {
    %c0_i32 = arith.constant 0 : i32
    %c0_i32_0 = arith.constant 0 : i32
    %c0_i32_1 = arith.constant 0 : i32
    %c0_i32_2 = arith.constant 0 : i32
    return %arg0, %c0_i32, %c0_i32_0, %c0_i32_1 : i32, i32, i32, i32
  }
  func.func @transform_1(%arg0: i32) -> (i32, i32) {
    %c0_i32 = arith.constant 0 : i32
    %c0_i32_0 = arith.constant 0 : i32
    %c0_i32_1 = arith.constant 0 : i32
    return %c0_i32, %c0_i32_0 : i32, i32
  }
  func.func @transform_2(%arg0: i32) -> (i32, i32) {
    %c0_i32 = arith.constant 0 : i32
    %c0_i32_0 = arith.constant 0 : i32
    %c0_i32_1 = arith.constant 0 : i32
    return %c0_i32, %c0_i32_0 : i32, i32
  }
  func.func @transform_3(%arg0: i32) -> (i32, i32) {
    %c0_i32 = arith.constant 0 : i32
    %c0_i32_0 = arith.constant 0 : i32
    %c0_i32_1 = arith.constant 0 : i32
    return %c0_i32, %c0_i32_0 : i32, i32
  }
  func.func @transform_4(%arg0: i32) -> (i32, i32, i32, i32) {
    %c0_i32 = arith.constant 0 : i32
    %c0_i32_0 = arith.constant 0 : i32
    %c0_i32_1 = arith.constant 0 : i32
    %c0_i32_2 = arith.constant 0 : i32
    %c0_i32_3 = arith.constant 0 : i32
    return %c0_i32, %c0_i32_0, %c0_i32_1, %c0_i32_2 : i32, i32, i32, i32
  }
  func.func @transform_5(%arg0: i32) -> (i32, i32) {
    %c0_i32 = arith.constant 0 : i32
    %c0_i32_0 = arith.constant 0 : i32
    %c0_i32_1 = arith.constant 0 : i32
    return %c0_i32, %c0_i32_0 : i32, i32
  }
  func.func @transform_6(%arg0: i32) -> (i32, i32) {
    %c0_i32 = arith.constant 0 : i32
    %c0_i32_0 = arith.constant 0 : i32
    %c0_i32_1 = arith.constant 0 : i32
    return %c0_i32, %c0_i32_0 : i32, i32
  }
  func.func @transform_7(%arg0: i32) -> (i32, i32, i32, i32) {
    %c0_i32 = arith.constant 0 : i32
    %c0_i32_0 = arith.constant 0 : i32
    %c0_i32_1 = arith.constant 0 : i32
    %c0_i32_2 = arith.constant 0 : i32
    %c0_i32_3 = arith.constant 0 : i32
    return %c0_i32, %c0_i32_0, %c0_i32_1, %c0_i32_2 : i32, i32, i32, i32
  }
  func.func @transform_8(%arg0: i32) -> (i32, i32) {
    %c0_i32 = arith.constant 0 : i32
    %c0_i32_0 = arith.constant 0 : i32
    %c0_i32_1 = arith.constant 0 : i32
    return %c0_i32, %c0_i32_0 : i32, i32
  }
  func.func @transform_9(%arg0: i32) -> (i32, i32) {
    %c0_i32 = arith.constant 0 : i32
    %c0_i32_0 = arith.constant 0 : i32
    %c0_i32_1 = arith.constant 0 : i32
    return %c0_i32, %c0_i32_0 : i32, i32
  }
  func.func @transform_10(%arg0: i32) -> (i32, i32, i32, i32) {
    %c0_i32 = arith.constant 0 : i32
    %c0_i32_0 = arith.constant 0 : i32
    %c0_i32_1 = arith.constant 0 : i32
    %c0_i32_2 = arith.constant 0 : i32
    %c0_i32_3 = arith.constant 0 : i32
    return %c0_i32, %c0_i32_0, %c0_i32_1, %c0_i32_2 : i32, i32, i32, i32
  }
  func.func @transform_11(%arg0: i32) -> (i32, i32) {
    %c0_i32 = arith.constant 0 : i32
    %c0_i32_0 = arith.constant 0 : i32
    %c0_i32_1 = arith.constant 0 : i32
    return %c0_i32, %c0_i32_0 : i32, i32
  }
  func.func @transform_12(%arg0: i32) -> (i32, i32) {
    %c0_i32 = arith.constant 0 : i32
    %c0_i32_0 = arith.constant 0 : i32
    %c0_i32_1 = arith.constant 0 : i32
    return %c0_i32, %c0_i32_0 : i32, i32
  }
  func.func @transform_13(%arg0: i32) -> (i32, i32) {
    %c0_i32 = arith.constant 0 : i32
    %c0_i32_0 = arith.constant 0 : i32
    %c0_i32_1 = arith.constant 0 : i32
    return %c0_i32, %c0_i32_0 : i32, i32
  }
  func.func @transform_14(%arg0: i32) -> (i32, i32) {
    %c0_i32 = arith.constant 0 : i32
    %c0_i32_0 = arith.constant 0 : i32
    %c0_i32_1 = arith.constant 0 : i32
    return %c0_i32, %c0_i32_0 : i32, i32
  }
  func.func @transform_15(%arg0: i32) -> (i32, i32) {
    %c0_i32 = arith.constant 0 : i32
    %c0_i32_0 = arith.constant 0 : i32
    %c0_i32_1 = arith.constant 0 : i32
    return %c0_i32, %c0_i32_0 : i32, i32
  }
  func.func @transform_16(%arg0: i32) -> (i32, i32) {
    %c0_i32 = arith.constant 0 : i32
    %c0_i32_0 = arith.constant 0 : i32
    %c0_i32_1 = arith.constant 0 : i32
    return %c0_i32, %c0_i32_0 : i32, i32
  }
  func.func @transform_17(%arg0: i32) -> (i32, i32, i32, i32) {
    %c0_i32 = arith.constant 0 : i32
    %c0_i32_0 = arith.constant 0 : i32
    %c0_i32_1 = arith.constant 0 : i32
    %c0_i32_2 = arith.constant 0 : i32
    return %arg0, %c0_i32, %c0_i32_0, %c0_i32_1 : i32, i32, i32, i32
  }
}

</mosaic_0001>

<llo_original>
// kernel: block35_forward.1
$region0: #{block35_forward.1}
  #allocation0 [shape = 'u32[]', space=smem, size = 0x4, offset = 0x4, fixed_abs, tag = 'smem constant byte address 0x4 - core index']
  #allocation1 [shape = 'u32[144,128]{1,0:T(1,128)}', space=vmem, size = 0x12000, scoped, tag = 'internal scratch']
  #allocation2 [shape = 'f32[10,24,32]{2,1,0:T(8,128)}', space=vmem, size = 0x1e000, scoped, tag = 'scratch operand']
  #allocation3 [shape = 'f32[10,24,48]{2,1,0:T(8,128)}', space=vmem, size = 0x1e000, scoped, tag = 'scratch operand']
  %s0 = inlined_call_operand.hbm [shape: f32[2,8,8,320], index: 0, kind: input, shape index: {}]
  %s1 = inlined_call_operand.vmem [shape: bf16[320,96], index: 1, kind: input, shape index: {}]
  %s2 = inlined_call_operand.hbm [shape: f32[1,96], index: 2, kind: input, shape index: {}]
  %s3 = inlined_call_operand.hbm [shape: f32[1,96], index: 3, kind: input, shape index: {}]
  %s4 = inlined_call_operand.hbm [shape: bf16[3,3,32,32], index: 4, kind: input, shape index: {}]
  %s5 = inlined_call_operand.hbm [shape: f32[1,32], index: 5, kind: input, shape index: {}]
  %s6 = inlined_call_operand.hbm [shape: f32[1,32], index: 6, kind: input, shape index: {}]
  %s7 = inlined_call_operand.hbm [shape: bf16[3,3,32,48], index: 7, kind: input, shape index: {}]
  %s8 = inlined_call_operand.hbm [shape: f32[1,48], index: 8, kind: input, shape index: {}]
  %s9 = inlined_call_operand.hbm [shape: f32[1,48], index: 9, kind: input, shape index: {}]
  %s10 = inlined_call_operand.vmem [shape: bf16[3,3,48,64], index: 10, kind: input, shape index: {}]
  %s11 = inlined_call_operand.hbm [shape: f32[1,64], index: 11, kind: input, shape index: {}]
  %s12 = inlined_call_operand.hbm [shape: f32[1,64], index: 12, kind: input, shape index: {}]
  %s13 = inlined_call_operand.vmem [shape: bf16[32,320], index: 13, kind: input, shape index: {}]
  %s14 = inlined_call_operand.hbm [shape: bf16[32,320], index: 14, kind: input, shape index: {}]
  %s15 = inlined_call_operand.vmem [shape: bf16[64,320], index: 15, kind: input, shape index: {}]
  %s16 = inlined_call_operand.hbm [shape: f32[1,320], index: 16, kind: input, shape index: {}]
  %s17 = inlined_call_operand.hbm [shape: f32[2,8,8,320], index: 17, kind: output, shape index: {}]
  %s18 = sld [smem:[#allocation0]]
  $region153: #{block35_forward.1} parent=0
    _
  %s20 = ssub.s32 1, %s18
  %s21 = scalar_select 0, %s20, %s18
  $region1: #{block35_forward.1} parent=0
    #allocation4 [shape = 'u8[196608]{0}', space=vmem, size = 0x30000, scoped, tag = 'input window, operand 0']
    #allocation5 [shape = 's32[2]{0}', space=sflag, size = 0x8, scoped, tag = 'scoped memory for block35_forward.1']
    #allocation6 [shape = 's32[2]{0}', space=sflag, size = 0x8, scoped, tag = 'scoped memory for block35_forward.1']
    #allocation7 [shape = 'u8[512]{0}', space=vmem, size = 0x400, scoped, tag = 'input window, operand 2, single buffered']
    #allocation8 [shape = 's32[1]{0}', space=sflag, size = 0x4, scoped, tag = 'scoped memory for block35_forward.1']
    #allocation9 [shape = 'u8[512]{0}', space=vmem, size = 0x400, scoped, tag = 'input window, operand 3, single buffered']
    #allocation10 [shape = 'u8[73728]{0}', space=vmem, size = 0x12000, scoped, tag = 'input window, operand 4, single buffered']
    #allocation11 [shape = 's32[1]{0}', space=sflag, size = 0x4, scoped, tag = 'scoped memory for block35_forward.1']
    #allocation12 [shape = 'u8[512]{0}', space=vmem, size = 0x400, scoped, tag = 'input window, operand 5, single buffered']
    #allocation13 [shape = 'u8[512]{0}', space=vmem, size = 0x400, scoped, tag = 'input window, operand 6, single buffered']
    #allocation14 [shape = 's32[1]{0}', space=sflag, size = 0x4, scoped, tag = 'scoped memory for block35_forward.1']
    #allocation15 [shape = 'u8[73728]{0}', space=vmem, size = 0x12000, scoped, tag = 'input window, operand 7, single buffered']
    #allocation16 [shape = 'u8[512]{0}', space=vmem, size = 0x400, scoped, tag = 'input window, operand 8, single buffered']
    #allocation17 [shape = 's32[1]{0}', space=sflag, size = 0x4, scoped, tag = 'scoped memory for block35_forward.1']
    #allocation18 [shape = 'u8[512]{0}', space=vmem, size = 0x400, scoped, tag = 'input window, operand 9, single buffered']
    #allocation19 [shape = 'u8[512]{0}', space=vmem, size = 0x400, scoped, tag = 'input window, operand 11, single buffered']
    #allocation20 [shape = 's32[1]{0}', space=sflag, size = 0x4, scoped, tag = 'scoped memory for block35_forward.1']
    #allocation21 [shape = 'u8[512]{0}', space=vmem, size = 0x400, scoped, tag = 'input window, operand 12, single buffered']
    #allocation22 [shape = 'u8[24576]{0}', space=vmem, size = 0x6000, scoped, tag = 'input window, operand 14, single buffered']
    #allocation23 [shape = 's32[1]{0}', space=sflag, size = 0x4, scoped, tag = 'scoped memory for block35_forward.1']
    #allocation24 [shape = 'u8[1536]{0}', space=vmem, size = 0x800, scoped, tag = 'input window, operand 16, single buffered']
    #allocation25 [shape = 'u8[196608]{0}', space=vmem, size = 0x30000, scoped, tag = 'output window, operand 0']
    %22 = vsyncpa [#allocation5], 0
    %s23 = scalar_lea.sflag [#allocation5], 1
    %24 = vsyncpa %s23, 0
    %25 = vsyncpa [#allocation8], 0
    %26 = vsyncpa [#allocation11], 0
    %27 = vsyncpa [#allocation14], 0
    %28 = vsyncpa [#allocation17], 0
    %29 = vsyncpa [#allocation20], 0
    %30 = vsyncpa [#allocation23], 0
    %31 = vsyncpa [#allocation6], 0
    %s32 = scalar_lea.sflag [#allocation6], 1
    %33 = vsyncpa %s32, 0
    loop: start=0, step=1, limit=4
    $region2: #{block35_forward.1} parent=1 // loop_pre_header
      _
    $region3: #{block35_forward.1} parent=1 // loop_header
      %s35 = sphi 0, %s39
      %p36 = scmp.ge.s32.totalorder %s35, 4
      %s45 = sphi 0, %s47
      %s48 = sphi 0, %s45
      %s49 = sphi 0, %s48
      %s65 = sphi 0, %s49
      %s69 = sphi 0, %s69
      %s71 = sphi 0, %s69
      %s72 = sphi 0, %s71
      %s86 = sphi 0, %s72
      %s90 = sphi 0, %s90
      %s92 = sphi 0, %s90
      %s93 = sphi 0, %s92
      %s107 = sphi 0, %s93
      %s111 = sphi 0, %s111
      %s113 = sphi 0, %s111
      %s114 = sphi 0, %s113
      %s128 = sphi 0, %s114
      %s132 = sphi 0, %s132
      %s134 = sphi 0, %s132
      %s135 = sphi 0, %s134
      %s149 = sphi 0, %s135
      %s153 = sphi 0, %s153
      %s155 = sphi 0, %s153
      %s156 = sphi 0, %s155
      %s170 = sphi 0, %s156
      %s174 = sphi 0, %s174
      %s176 = sphi 0, %s174
      %s177 = sphi 0, %s176
      %s191 = sphi 0, %s177
      %s195 = sphi 0, %s195
      %s197 = sphi 0, %s195
      %s198 = sphi 0, %s197
      %s212 = sphi 0, %s198
      %s216 = sphi 0, %s216
      %s218 = sphi 0, %s216
      %s219 = sphi 0, %s218
      %s233 = sphi 0, %s219
      %s237 = sphi 0, %s237
      %s239 = sphi 0, %s237
      %s240 = sphi 0, %s239
      %s254 = sphi 0, %s240
      %s258 = sphi 0, %s258
      %s260 = sphi 0, %s258
      %s261 = sphi 0, %s260
      %s275 = sphi 0, %s261
      %s279 = sphi 0, %s279
      %s281 = sphi 0, %s279
      %s282 = sphi 0, %s281
      %s296 = sphi 0, %s282
      %s300 = sphi 0, %s300
      %s302 = sphi 0, %s300
      %s303 = sphi 0, %s302
      %s317 = sphi 0, %s303
      %s321 = sphi 0, %s321
      %s323 = sphi 0, %s321
      %s324 = sphi 0, %s323
      %s338 = sphi 0, %s324
      %s342 = sphi 0, %s342
      %s344 = sphi 0, %s342
      %s345 = sphi 0, %s344
      %s359 = sphi 0, %s345
      %s363 = sphi 0, %s363
      %s365 = sphi 0, %s363
      %s366 = sphi 0, %s365
      %s380 = sphi 0, %s366
      %s384 = sphi 0, %s384
      %s386 = sphi 0, %s384
      %s387 = sphi 0, %s386
      %s401 = sphi 0, %s387
      %s407 = sphi 0, %s409
      %s410 = sphi 0, %s407
      %s411 = sphi 0, %s410
      %s427 = sphi 0, %s411
    $region4: #{block35_forward.1} parent=1 // loop_header_branch
      %38 = sbr.rel (%p36) target = $region8
    $region5: #{block35_forward.1} parent=1 // loop_body
      %s40 = ssub.s32 %s35, 1
      %s41 = ssub.s32 %s35, 2
      %s42 = sadd.s32 %s35, 1
      %s43 = ssub.s32 %s35, %s42
      %p44 = scmp.eq.s32.totalorder %s43, 0
      %s46 = sadd.s32 %s45, 1
      %s47 = scalar_select %p44, %s45, %s46
      %p50 = pneg %p44
      %p51 = scmp.eq.s32.totalorder %s35, 1
      %p52 = por %p50, %p51
      %p53 = scmp.ne.s32.totalorder %s45, %s48
      %p54 = scmp.eq.s32.totalorder %s35, 0
      %p55 = por %p53, %p54
      %p56 = scmp.ne.s32.totalorder %s45, %s48
      %p57 = scmp.eq.s32.totalorder %s40, 1
      %p58 = por %p56, %p57
      %p59 = scmp.ne.s32.totalorder %s48, %s49
      %p60 = scmp.eq.s32.totalorder %s40, 0
      %p61 = por %p59, %p60
      %p62 = scmp.ne.s32.totalorder %s48, %s49
      %p63 = scmp.eq.s32.totalorder %s41, 1
      %p64 = por %p62, %p63
      %p66 = scmp.ne.s32.totalorder %s49, %s65
      %p67 = scmp.eq.s32.totalorder %s41, 0
      %p68 = por %p66, %p67
      %s70 = sadd.s32 %s69, 1
      %p73 = scmp.eq.s32.totalorder %s35, 1
      %p74 = scmp.ne.s32.totalorder %s69, %s71
      %p75 = scmp.eq.s32.totalorder %s35, 0
      %p76 = por %p74, %p75
      %p77 = scmp.ne.s32.totalorder %s69, %s71
      %p78 = scmp.eq.s32.totalorder %s40, 1
      %p79 = por %p77, %p78
      %p80 = scmp.ne.s32.totalorder %s71, %s72
      %p81 = scmp.eq.s32.totalorder %s40, 0
      %p82 = por %p80, %p81
      %p83 = scmp.ne.s32.totalorder %s71, %s72
      %p84 = scmp.eq.s32.totalorder %s41, 1
      %p85 = por %p83, %p84
      %p87 = scmp.ne.s32.totalorder %s72, %s86
      %p88 = scmp.eq.s32.totalorder %s41, 0
      %p89 = por %p87, %p88
      %s91 = sadd.s32 %s90, 1
      %p94 = scmp.eq.s32.totalorder %s35, 1
      %p95 = scmp.ne.s32.totalorder %s90, %s92
      %p96 = scmp.eq.s32.totalorder %s35, 0
      %p97 = por %p95, %p96
      %p98 = scmp.ne.s32.totalorder %s90, %s92
      %p99 = scmp.eq.s32.totalorder %s40, 1
      %p100 = por %p98, %p99
      %p101 = scmp.ne.s32.totalorder %s92, %s93
      %p102 = scmp.eq.s32.totalorder %s40, 0
      %p103 = por %p101, %p102
      %p104 = scmp.ne.s32.totalorder %s92, %s93
      %p105 = scmp.eq.s32.totalorder %s41, 1
      %p106 = por %p104, %p105
      %p108 = scmp.ne.s32.totalorder %s93, %s107
      %p109 = scmp.eq.s32.totalorder %s41, 0
      %p110 = por %p108, %p109
      %s112 = sadd.s32 %s111, 1
      %p115 = scmp.eq.s32.totalorder %s35, 1
      %p116 = scmp.ne.s32.totalorder %s111, %s113
      %p117 = scmp.eq.s32.totalorder %s35, 0
      %p118 = por %p116, %p117
      %p119 = scmp.ne.s32.totalorder %s111, %s113
      %p120 = scmp.eq.s32.totalorder %s40, 1
      %p121 = por %p119, %p120
      %p122 = scmp.ne.s32.totalorder %s113, %s114
      %p123 = scmp.eq.s32.totalorder %s40, 0
      %p124 = por %p122, %p123
      %p125 = scmp.ne.s32.totalorder %s113, %s114
      %p126 = scmp.eq.s32.totalorder %s41, 1
      %p127 = por %p125, %p126
      %p129 = scmp.ne.s32.totalorder %s114, %s128
      %p130 = scmp.eq.s32.totalorder %s41, 0
      %p131 = por %p129, %p130
      %s133 = sadd.s32 %s132, 1
      %p136 = scmp.eq.s32.totalorder %s35, 1
      %p137 = scmp.ne.s32.totalorder %s132, %s134
      %p138 = scmp.eq.s32.totalorder %s35, 0
      %p139 = por %p137, %p138
      %p140 = scmp.ne.s32.totalorder %s132, %s134
      %p141 = scmp.eq.s32.totalorder %s40, 1
      %p142 = por %p140, %p141
      %p143 = scmp.ne.s32.totalorder %s134, %s135
      %p144 = scmp.eq.s32.totalorder %s40, 0
      %p145 = por %p143, %p144
      %p146 = scmp.ne.s32.totalorder %s134, %s135
      %p147 = scmp.eq.s32.totalorder %s41, 1
      %p148 = por %p146, %p147
      %p150 = scmp.ne.s32.totalorder %s135, %s149
      %p151 = scmp.eq.s32.totalorder %s41, 0
      %p152 = por %p150, %p151
      %s154 = sadd.s32 %s153, 1
      %p157 = scmp.eq.s32.totalorder %s35, 1
      %p158 = scmp.ne.s32.totalorder %s153, %s155
      %p159 = scmp.eq.s32.totalorder %s35, 0
      %p160 = por %p158, %p159
      %p161 = scmp.ne.s32.totalorder %s153, %s155
      %p162 = scmp.eq.s32.totalorder %s40, 1
      %p163 = por %p161, %p162
      %p164 = scmp.ne.s32.totalorder %s155, %s156
      %p165 = scmp.eq.s32.totalorder %s40, 0
      %p166 = por %p164, %p165
      %p167 = scmp.ne.s32.totalorder %s155, %s156
      %p168 = scmp.eq.s32.totalorder %s41, 1
      %p169 = por %p167, %p168
      %p171 = scmp.ne.s32.totalorder %s156, %s170
      %p172 = scmp.eq.s32.totalorder %s41, 0
      %p173 = por %p171, %p172
      %s175 = sadd.s32 %s174, 1
      %p178 = scmp.eq.s32.totalorder %s35, 1
      %p179 = scmp.ne.s32.totalorder %s174, %s176
      %p180 = scmp.eq.s32.totalorder %s35, 0
      %p181 = por %p179, %p180
      %p182 = scmp.ne.s32.totalorder %s174, %s176
      %p183 = scmp.eq.s32.totalorder %s40, 1
      %p184 = por %p182, %p183
      %p185 = scmp.ne.s32.totalorder %s176, %s177
      %p186 = scmp.eq.s32.totalorder %s40, 0
      %p187 = por %p185, %p186
      %p188 = scmp.ne.s32.totalorder %s176, %s177
      %p189 = scmp.eq.s32.totalorder %s41, 1
      %p190 = por %p188, %p189
      %p192 = scmp.ne.s32.totalorder %s177, %s191
      %p193 = scmp.eq.s32.totalorder %s41, 0
      %p194 = por %p192, %p193
      %s196 = sadd.s32 %s195, 1
      %p199 = scmp.eq.s32.totalorder %s35, 1
      %p200 = scmp.ne.s32.totalorder %s195, %s197
      %p201 = scmp.eq.s32.totalorder %s35, 0
      %p202 = por %p200, %p201
      %p203 = scmp.ne.s32.totalorder %s195, %s197
      %p204 = scmp.eq.s32.totalorder %s40, 1
      %p205 = por %p203, %p204
      %p206 = scmp.ne.s32.totalorder %s197, %s198
      %p207 = scmp.eq.s32.totalorder %s40, 0
      %p208 = por %p206, %p207
      %p209 = scmp.ne.s32.totalorder %s197, %s198
      %p210 = scmp.eq.s32.totalorder %s41, 1
      %p211 = por %p209, %p210
      %p213 = scmp.ne.s32.totalorder %s198, %s212
      %p214 = scmp.eq.s32.totalorder %s41, 0
      %p215 = por %p213, %p214
      %s217 = sadd.s32 %s216, 1
      %p220 = scmp.eq.s32.totalorder %s35, 1
      %p221 = scmp.ne.s32.totalorder %s216, %s218
      %p222 = scmp.eq.s32.totalorder %s35, 0
      %p223 = por %p221, %p222
      %p224 = scmp.ne.s32.totalorder %s216, %s218
      %p225 = scmp.eq.s32.totalorder %s40, 1
      %p226 = por %p224, %p225
      %p227 = scmp.ne.s32.totalorder %s218, %s219
      %p228 = scmp.eq.s32.totalorder %s40, 0
      %p229 = por %p227, %p228
      %p230 = scmp.ne.s32.totalorder %s218, %s219
      %p231 = scmp.eq.s32.totalorder %s41, 1
      %p232 = por %p230, %p231
      %p234 = scmp.ne.s32.totalorder %s219, %s233
      %p235 = scmp.eq.s32.totalorder %s41, 0
      %p236 = por %p234, %p235
      %s238 = sadd.s32 %s237, 1
      %p241 = scmp.eq.s32.totalorder %s35, 1
      %p242 = scmp.ne.s32.totalorder %s237, %s239
      %p243 = scmp.eq.s32.totalorder %s35, 0
      %p244 = por %p242, %p243
      %p245 = scmp.ne.s32.totalorder %s237, %s239
      %p246 = scmp.eq.s32.totalorder %s40, 1
      %p247 = por %p245, %p246
      %p248 = scmp.ne.s32.totalorder %s239, %s240
      %p249 = scmp.eq.s32.totalorder %s40, 0
      %p250 = por %p248, %p249
      %p251 = scmp.ne.s32.totalorder %s239, %s240
      %p252 = scmp.eq.s32.totalorder %s41, 1
      %p253 = por %p251, %p252
      %p255 = scmp.ne.s32.totalorder %s240, %s254
      %p256 = scmp.eq.s32.totalorder %s41, 0
      %p257 = por %p255, %p256
      %s259 = sadd.s32 %s258, 1
      %p262 = scmp.eq.s32.totalorder %s35, 1
      %p263 = scmp.ne.s32.totalorder %s258, %s260
      %p264 = scmp.eq.s32.totalorder %s35, 0
      %p265 = por %p263, %p264
      %p266 = scmp.ne.s32.totalorder %s258, %s260
      %p267 = scmp.eq.s32.totalorder %s40, 1
      %p268 = por %p266, %p267
      %p269 = scmp.ne.s32.totalorder %s260, %s261
      %p270 = scmp.eq.s32.totalorder %s40, 0
      %p271 = por %p269, %p270
      %p272 = scmp.ne.s32.totalorder %s260, %s261
      %p273 = scmp.eq.s32.totalorder %s41, 1
      %p274 = por %p272, %p273
      %p276 = scmp.ne.s32.totalorder %s261, %s275
      %p277 = scmp.eq.s32.totalorder %s41, 0
      %p278 = por %p276, %p277
      %s280 = sadd.s32 %s279, 1
      %p283 = scmp.eq.s32.totalorder %s35, 1
      %p284 = scmp.ne.s32.totalorder %s279, %s281
      %p285 = scmp.eq.s32.totalorder %s35, 0
      %p286 = por %p284, %p285
      %p287 = scmp.ne.s32.totalorder %s279, %s281
      %p288 = scmp.eq.s32.totalorder %s40, 1
      %p289 = por %p287, %p288
      %p290 = scmp.ne.s32.totalorder %s281, %s282
      %p291 = scmp.eq.s32.totalorder %s40, 0
      %p292 = por %p290, %p291
      %p293 = scmp.ne.s32.totalorder %s281, %s282
      %p294 = scmp.eq.s32.totalorder %s41, 1
      %p295 = por %p293, %p294
      %p297 = scmp.ne.s32.totalorder %s282, %s296
      %p298 = scmp.eq.s32.totalorder %s41, 0
      %p299 = por %p297, %p298
      %s301 = sadd.s32 %s300, 1
      %p304 = scmp.eq.s32.totalorder %s35, 1
      %p305 = scmp.ne.s32.totalorder %s300, %s302
      %p306 = scmp.eq.s32.totalorder %s35, 0
      %p307 = por %p305, %p306
      %p308 = scmp.ne.s32.totalorder %s300, %s302
      %p309 = scmp.eq.s32.totalorder %s40, 1
      %p310 = por %p308, %p309
      %p311 = scmp.ne.s32.totalorder %s302, %s303
      %p312 = scmp.eq.s32.totalorder %s40, 0
      %p313 = por %p311, %p312
      %p314 = scmp.ne.s32.totalorder %s302, %s303
      %p315 = scmp.eq.s32.totalorder %s41, 1
      %p316 = por %p314, %p315
      %p318 = scmp.ne.s32.totalorder %s303, %s317
      %p319 = scmp.eq.s32.totalorder %s41, 0
      %p320 = por %p318, %p319
      %s322 = sadd.s32 %s321, 1
      %p325 = scmp.eq.s32.totalorder %s35, 1
      %p326 = scmp.ne.s32.totalorder %s321, %s323
      %p327 = scmp.eq.s32.totalorder %s35, 0
      %p328 = por %p326, %p327
      %p329 = scmp.ne.s32.totalorder %s321, %s323
      %p330 = scmp.eq.s32.totalorder %s40, 1
      %p331 = por %p329, %p330
      %p332 = scmp.ne.s32.totalorder %s323, %s324
      %p333 = scmp.eq.s32.totalorder %s40, 0
      %p334 = por %p332, %p333
      %p335 = scmp.ne.s32.totalorder %s323, %s324
      %p336 = scmp.eq.s32.totalorder %s41, 1
      %p337 = por %p335, %p336
      %p339 = scmp.ne.s32.totalorder %s324, %s338
      %p340 = scmp.eq.s32.totalorder %s41, 0
      %p341 = por %p339, %p340
      %s343 = sadd.s32 %s342, 1
      %p346 = scmp.eq.s32.totalorder %s35, 1
      %p347 = scmp.ne.s32.totalorder %s342, %s344
      %p348 = scmp.eq.s32.totalorder %s35, 0
      %p349 = por %p347, %p348
      %p350 = scmp.ne.s32.totalorder %s342, %s344
      %p351 = scmp.eq.s32.totalorder %s40, 1
      %p352 = por %p350, %p351
      %p353 = scmp.ne.s32.totalorder %s344, %s345
      %p354 = scmp.eq.s32.totalorder %s40, 0
      %p355 = por %p353, %p354
      %p356 = scmp.ne.s32.totalorder %s344, %s345
      %p357 = scmp.eq.s32.totalorder %s41, 1
      %p358 = por %p356, %p357
      %p360 = scmp.ne.s32.totalorder %s345, %s359
      %p361 = scmp.eq.s32.totalorder %s41, 0
      %p362 = por %p360, %p361
      %s364 = sadd.s32 %s363, 1
      %p367 = scmp.eq.s32.totalorder %s35, 1
      %p368 = scmp.ne.s32.totalorder %s363, %s365
      %p369 = scmp.eq.s32.totalorder %s35, 0
      %p370 = por %p368, %p369
      %p371 = scmp.ne.s32.totalorder %s363, %s365
      %p372 = scmp.eq.s32.totalorder %s40, 1
      %p373 = por %p371, %p372
      %p374 = scmp.ne.s32.totalorder %s365, %s366
      %p375 = scmp.eq.s32.totalorder %s40, 0
      %p376 = por %p374, %p375
      %p377 = scmp.ne.s32.totalorder %s365, %s366
      %p378 = scmp.eq.s32.totalorder %s41, 1
      %p379 = por %p377, %p378
      %p381 = scmp.ne.s32.totalorder %s366, %s380
      %p382 = scmp.eq.s32.totalorder %s41, 0
      %p383 = por %p381, %p382
      %s385 = sadd.s32 %s384, 1
      %p388 = scmp.eq.s32.totalorder %s35, 1
      %p389 = scmp.ne.s32.totalorder %s384, %s386
      %p390 = scmp.eq.s32.totalorder %s35, 0
      %p391 = por %p389, %p390
      %p392 = scmp.ne.s32.totalorder %s384, %s386
      %p393 = scmp.eq.s32.totalorder %s40, 1
      %p394 = por %p392, %p393
      %p395 = scmp.ne.s32.totalorder %s386, %s387
      %p396 = scmp.eq.s32.totalorder %s40, 0
      %p397 = por %p395, %p396
      %p398 = scmp.ne.s32.totalorder %s386, %s387
      %p399 = scmp.eq.s32.totalorder %s41, 1
      %p400 = por %p398, %p399
      %p402 = scmp.ne.s32.totalorder %s387, %s401
      %p403 = scmp.eq.s32.totalorder %s41, 0
      %p404 = por %p402, %p403
      %s405 = ssub.s32 %s35, %s42
      %p406 = scmp.eq.s32.totalorder %s405, 0
      %s408 = sadd.s32 %s407, 1
      %s409 = scalar_select %p406, %s407, %s408
      %p412 = pneg %p406
      %p413 = scmp.eq.s32.totalorder %s35, 1
      %p414 = por %p412, %p413
      %p415 = scmp.ne.s32.totalorder %s407, %s410
      %p416 = scmp.eq.s32.totalorder %s35, 0
      %p417 = por %p415, %p416
      %p418 = scmp.ne.s32.totalorder %s407, %s410
      %p419 = scmp.eq.s32.totalorder %s40, 1
      %p420 = por %p418, %p419
      %p421 = scmp.ne.s32.totalorder %s410, %s411
      %p422 = scmp.eq.s32.totalorder %s40, 0
      %p423 = por %p421, %p422
      %p424 = scmp.ne.s32.totalorder %s410, %s411
      %p425 = scmp.eq.s32.totalorder %s41, 1
      %p426 = por %p424, %p425
      %p428 = scmp.ne.s32.totalorder %s411, %s427
      %p429 = scmp.eq.s32.totalorder %s41, 0
      %p430 = por %p428, %p429
      %p431 = scmp.le.s32.totalorder 1, %s35
      %p432 = scmp.lt.s32.totalorder %s35, 3
      %p433 = pnand %p431, %p432
      %p434 = pneg %p433
      // Predicated region
      $region9: #{block35_forward.1} parent=5 // pred_check
        _
      $region10: #{block35_forward.1} parent=5 // pred_check_branch
        %436 = sbr.rel (%p433) target = $region12
      $region11: #{block35_forward.1} parent=5 // pred_region
        %s437 = ssub.s32 %s35, 1
        // Predicated region
        $region13: #{block35_forward.1} parent=11 // pred_check
          %p438 = pneg %p82
        $region14: #{block35_forward.1} parent=11 // pred_check_branch
          %440 = sbr.rel (%p438) target = $region16
        $region15: #{block35_forward.1} parent=11 // pred_region
          _
        $region16: #{block35_forward.1} parent=11 // pred_fallthru
          _
        // Predicated region
        $region17: #{block35_forward.1} parent=11 // pred_check
          %p441 = pneg %p103
        $region18: #{block35_forward.1} parent=11 // pred_check_branch
          %443 = sbr.rel (%p441) target = $region20
        $region19: #{block35_forward.1} parent=11 // pred_region
          %s445 = ssub.s32 16, 16
          %446 = vsyncadd [#allocation8], %s445
          %s448 = sshll.u32 [#allocation7], 4
          %s449 = int_to_ptr.vmem [resolvable:$true] %s448
          %451 = dma.hbm_to_vmem [thread:$0]  %s2, 16, %s449, [#allocation8]
        $region20: #{block35_forward.1} parent=11 // pred_fallthru
          _
        // Predicated region
        $region21: #{block35_forward.1} parent=11 // pred_check
          %p452 = pneg %p124
        $region22: #{block35_forward.1} parent=11 // pred_check_branch
          %454 = sbr.rel (%p452) target = $region24
        $region23: #{block35_forward.1} parent=11 // pred_region
          %s456 = ssub.s32 16, 16
          %457 = vsyncadd [#allocation8], %s456
          %s459 = sshll.u32 [#allocation9], 4
          %s460 = int_to_ptr.vmem [resolvable:$true] %s459
          %462 = dma.hbm_to_vmem [thread:$0]  %s3, 16, %s460, [#allocation8]
        $region24: #{block35_forward.1} parent=11 // pred_fallthru
          _
        // Predicated region
        $region25: #{block35_forward.1} parent=11 // pred_check
          %p463 = pneg %p145
        $region26: #{block35_forward.1} parent=11 // pred_check_branch
          %465 = sbr.rel (%p463) target = $region28
        $region27: #{block35_forward.1} parent=11 // pred_region
          %s467 = ssub.s32 2304, 2304
          %468 = vsyncadd [#allocation11], %s467
          %s469 = sshll.u32 [#allocation10], 4
          %s470 = int_to_ptr.vmem [resolvable:$true] %s469
          %475 = dma.hbm_to_vmem [thread:$0]  %s4, 2304, %s470, [#allocation11], 64, 64, 4
        $region28: #{block35_forward.1} parent=11 // pred_fallthru
          _
        // Predicated region
        $region29: #{block35_forward.1} parent=11 // pred_check
          %p476 = pneg %p166
        $region30: #{block35_forward.1} parent=11 // pred_check_branch
          %478 = sbr.rel (%p476) target = $region32
        $region31: #{block35_forward.1} parent=11 // pred_region
          %s480 = ssub.s32 16, 16
          %481 = vsyncadd [#allocation11], %s480
          %s483 = sshll.u32 [#allocation12], 4
          %s484 = int_to_ptr.vmem [resolvable:$true] %s483
          %486 = dma.hbm_to_vmem [thread:$0]  %s5, 16, %s484, [#allocation11]
        $region32: #{block35_forward.1} parent=11 // pred_fallthru
          _
        // Predicated region
        $region33: #{block35_forward.1} parent=11 // pred_check
          %p487 = pneg %p187
        $region34: #{block35_forward.1} parent=11 // pred_check_branch
          %489 = sbr.rel (%p487) target = $region36
        $region35: #{block35_forward.1} parent=11 // pred_region
          %s491 = ssub.s32 16, 16
          %492 = vsyncadd [#allocation14], %s491
          %s494 = sshll.u32 [#allocation13], 4
          %s495 = int_to_ptr.vmem [resolvable:$true] %s494
          %497 = dma.hbm_to_vmem [thread:$0]  %s6, 16, %s495, [#allocation14]
        $region36: #{block35_forward.1} parent=11 // pred_fallthru
          _
        // Predicated region
        $region37: #{block35_forward.1} parent=11 // pred_check
          %p498 = pneg %p208
        $region38: #{block35_forward.1} parent=11 // pred_check_branch
          %500 = sbr.rel (%p498) target = $region40
        $region39: #{block35_forward.1} parent=11 // pred_region
          %s502 = ssub.s32 2304, 2304
          %503 = vsyncadd [#allocation14], %s502
          %s504 = sshll.u32 [#allocation15], 4
          %s505 = int_to_ptr.vmem [resolvable:$true] %s504
          %510 = dma.hbm_to_vmem [thread:$0]  %s7, 2304, %s505, [#allocation14], 64, 64, 4
        $region40: #{block35_forward.1} parent=11 // pred_fallthru
          _
        // Predicated region
        $region41: #{block35_forward.1} parent=11 // pred_check
          %p511 = pneg %p229
        $region42: #{block35_forward.1} parent=11 // pred_check_branch
          %513 = sbr.rel (%p511) target = $region44
        $region43: #{block35_forward.1} parent=11 // pred_region
          %s515 = ssub.s32 16, 16
          %516 = vsyncadd [#allocation17], %s515
          %s518 = sshll.u32 [#allocation16], 4
          %s519 = int_to_ptr.vmem [resolvable:$true] %s518
          %521 = dma.hbm_to_vmem [thread:$0]  %s8, 16, %s519, [#allocation17]
        $region44: #{block35_forward.1} parent=11 // pred_fallthru
          _
        // Predicated region
        $region45: #{block35_forward.1} parent=11 // pred_check
          %p522 = pneg %p250
        $region46: #{block35_forward.1} parent=11 // pred_check_branch
          %524 = sbr.rel (%p522) target = $region48
        $region47: #{block35_forward.1} parent=11 // pred_region
          %s526 = ssub.s32 16, 16
          %527 = vsyncadd [#allocation17], %s526
          %s529 = sshll.u32 [#allocation18], 4
          %s530 = int_to_ptr.vmem [resolvable:$true] %s529
          %532 = dma.hbm_to_vmem [thread:$0]  %s9, 16, %s530, [#allocation17]
        $region48: #{block35_forward.1} parent=11 // pred_fallthru
          _
        // Predicated region
        $region49: #{block35_forward.1} parent=11 // pred_check
          %p533 = pneg %p271
        $region50: #{block35_forward.1} parent=11 // pred_check_branch
          %535 = sbr.rel (%p533) target = $region52
        $region51: #{block35_forward.1} parent=11 // pred_region
          _
        $region52: #{block35_forward.1} parent=11 // pred_fallthru
          _
        // Predicated region
        $region53: #{block35_forward.1} parent=11 // pred_check
          %p536 = pneg %p292
        $region54: #{block35_forward.1} parent=11 // pred_check_branch
          %538 = sbr.rel (%p536) target = $region56
        $region55: #{block35_forward.1} parent=11 // pred_region
          %s540 = ssub.s32 16, 16
          %541 = vsyncadd [#allocation20], %s540
          %s543 = sshll.u32 [#allocation19], 4
          %s544 = int_to_ptr.vmem [resolvable:$true] %s543
          %546 = dma.hbm_to_vmem [thread:$0]  %s11, 16, %s544, [#allocation20]
        $region56: #{block35_forward.1} parent=11 // pred_fallthru
          _
        // Predicated region
        $region57: #{block35_forward.1} parent=11 // pred_check
          %p547 = pneg %p313
        $region58: #{block35_forward.1} parent=11 // pred_check_branch
          %549 = sbr.rel (%p547) target = $region60
        $region59: #{block35_forward.1} parent=11 // pred_region
          %s551 = ssub.s32 16, 16
          %552 = vsyncadd [#allocation20], %s551
          %s554 = sshll.u32 [#allocation21], 4
          %s555 = int_to_ptr.vmem [resolvable:$true] %s554
          %557 = dma.hbm_to_vmem [thread:$0]  %s12, 16, %s555, [#allocation20]
        $region60: #{block35_forward.1} parent=11 // pred_fallthru
          _
        // Predicated region
        $region61: #{block35_forward.1} parent=11 // pred_check
          %p558 = pneg %p334
        $region62: #{block35_forward.1} parent=11 // pred_check_branch
          %560 = sbr.rel (%p558) target = $region64
        $region63: #{block35_forward.1} parent=11 // pred_region
          _
        $region64: #{block35_forward.1} parent=11 // pred_fallthru
          _
        // Predicated region
        $region65: #{block35_forward.1} parent=11 // pred_check
          %p561 = pneg %p355
        $region66: #{block35_forward.1} parent=11 // pred_check_branch
          %563 = sbr.rel (%p561) target = $region68
        $region67: #{block35_forward.1} parent=11 // pred_region
          %s565 = ssub.s32 768, 768
          %566 = vsyncadd [#allocation23], %s565
          %s567 = sshll.u32 [#allocation22], 4
          %s568 = int_to_ptr.vmem [resolvable:$true] %s567
          %573 = dma.hbm_to_vmem [thread:$0]  %s14, 768, %s568, [#allocation23], 192, 192, 12
        $region68: #{block35_forward.1} parent=11 // pred_fallthru
          _
        // Predicated region
        $region69: #{block35_forward.1} parent=11 // pred_check
          %p574 = pneg %p376
        $region70: #{block35_forward.1} parent=11 // pred_check_branch
          %576 = sbr.rel (%p574) target = $region72
        $region71: #{block35_forward.1} parent=11 // pred_region
          _
        $region72: #{block35_forward.1} parent=11 // pred_fallthru
          _
        // Predicated region
        $region73: #{block35_forward.1} parent=11 // pred_check
          %p577 = pneg %p397
        $region74: #{block35_forward.1} parent=11 // pred_check_branch
          %579 = sbr.rel (%p577) target = $region76
        $region75: #{block35_forward.1} parent=11 // pred_region
          %s581 = ssub.s32 48, 48
          %582 = vsyncadd [#allocation23], %s581
          %s584 = sshll.u32 [#allocation24], 4
          %s585 = int_to_ptr.vmem [resolvable:$true] %s584
          %587 = dma.hbm_to_vmem [thread:$0]  %s16, 48, %s585, [#allocation23]
        $region76: #{block35_forward.1} parent=11 // pred_fallthru
          _
      $region12: #{block35_forward.1} parent=5 // pred_fallthru
        _
      %p588 = scmp.lt.s32.totalorder %s35, 2
      // Predicated region
      $region77: #{block35_forward.1} parent=5 // pred_check
        %p589 = pneg %p588
      $region78: #{block35_forward.1} parent=5 // pred_check_branch
        %591 = sbr.rel (%p589) target = $region80
      $region79: #{block35_forward.1} parent=5 // pred_region
        // Predicated region
        $region81: #{block35_forward.1} parent=79 // pred_check
          %p592 = pneg %p55
        $region82: #{block35_forward.1} parent=79 // pred_check_branch
          %594 = sbr.rel (%p592) target = $region84
        $region83: #{block35_forward.1} parent=79 // pred_region
          %s595 = sand.u32 %s45, 1
          %s596 = scalar_lea.sflag [#allocation5], %s595
          %s597 = sand.u32 %s45, 1
          %s598 = smul.addr %s597, 192
          %s599 = scalar_lea.vmem [#allocation4], %s598
          %s601 = ssub.s32 3072, 3072
          %602 = vsyncadd %s596, %s601
          %s603 = smul.addr %s35, 24
          %s604 = smul.addr %s603, 128
          %s605 = scalar_lea.hbm %s0, %s604
          %s606 = sshll.u32 %s599, 4
          %s607 = int_to_ptr.vmem [resolvable:$true] %s606
          %612 = dma.hbm_to_vmem [thread:$0]  %s605, 3072, %s607, %s596, 384, 384, 24
        $region84: #{block35_forward.1} parent=79 // pred_fallthru
          _
      $region80: #{block35_forward.1} parent=5 // pred_fallthru
        _
      %p613 = scmp.le.s32.totalorder 1, %s35
      %p614 = scmp.lt.s32.totalorder %s35, 3
      %p615 = pnand %p613, %p614
      %p616 = pneg %p615
      // Predicated region
      $region85: #{block35_forward.1} parent=5 // pred_check
        _
      $region86: #{block35_forward.1} parent=5 // pred_check_branch
        %618 = sbr.rel (%p615) target = $region88
      $region87: #{block35_forward.1} parent=5 // pred_region
        %s619 = ssub.s32 %s35, 1
        %s620 = sand.u32 %s48, 1
        %s621 = scalar_lea.sflag [#allocation5], %s620
        %s622 = sand.u32 %s48, 1
        %s623 = smul.addr %s622, 192
        %s624 = scalar_lea.vmem [#allocation4], %s623
        // Predicated region
        $region89: #{block35_forward.1} parent=87 // pred_check
          %p625 = pneg %p61
        $region90: #{block35_forward.1} parent=87 // pred_check_branch
          %627 = sbr.rel (%p625) target = $region92
        $region91: #{block35_forward.1} parent=87 // pred_region
          %628 = dma.done %s621, 3072
        $region92: #{block35_forward.1} parent=87 // pred_fallthru
          _
        // Predicated region
        $region93: #{block35_forward.1} parent=87 // pred_check
          %p629 = pneg %p103
        $region94: #{block35_forward.1} parent=87 // pred_check_branch
          %631 = sbr.rel (%p629) target = $region96
        $region95: #{block35_forward.1} parent=87 // pred_region
          %632 = dma.done [#allocation8], 16
        $region96: #{block35_forward.1} parent=87 // pred_fallthru
          _
        // Predicated region
        $region97: #{block35_forward.1} parent=87 // pred_check
          %p633 = pneg %p124
        $region98: #{block35_forward.1} parent=87 // pred_check_branch
          %635 = sbr.rel (%p633) target = $region100
        $region99: #{block35_forward.1} parent=87 // pred_region
          %636 = dma.done [#allocation8], 16
        $region100: #{block35_forward.1} parent=87 // pred_fallthru
          _
        // Predicated region
        $region101: #{block35_forward.1} parent=87 // pred_check
          %p637 = pneg %p145
        $region102: #{block35_forward.1} parent=87 // pred_check_branch
          %639 = sbr.rel (%p637) target = $region104
        $region103: #{block35_forward.1} parent=87 // pred_region
          %640 = dma.done [#allocation11], 2304
        $region104: #{block35_forward.1} parent=87 // pred_fallthru
          _
        // Predicated region
        $region105: #{block35_forward.1} parent=87 // pred_check
          %p641 = pneg %p166
        $region106: #{block35_forward.1} parent=87 // pred_check_branch
          %643 = sbr.rel (%p641) target = $region108
        $region107: #{block35_forward.1} parent=87 // pred_region
          %644 = dma.done [#allocation11], 16
        $region108: #{block35_forward.1} parent=87 // pred_fallthru
          _
        // Predicated region
        $region109: #{block35_forward.1} parent=87 // pred_check
          %p645 = pneg %p187
        $region110: #{block35_forward.1} parent=87 // pred_check_branch
          %647 = sbr.rel (%p645) target = $region112
        $region111: #{block35_forward.1} parent=87 // pred_region
          %648 = dma.done [#allocation14], 16
        $region112: #{block35_forward.1} parent=87 // pred_fallthru
          _
        // Predicated region
        $region113: #{block35_forward.1} parent=87 // pred_check
          %p649 = pneg %p208
        $region114: #{block35_forward.1} parent=87 // pred_check_branch
          %651 = sbr.rel (%p649) target = $region116
        $region115: #{block35_forward.1} parent=87 // pred_region
          %652 = dma.done [#allocation14], 2304
        $region116: #{block35_forward.1} parent=87 // pred_fallthru
          _
        // Predicated region
        $region117: #{block35_forward.1} parent=87 // pred_check
          %p653 = pneg %p229
        $region118: #{block35_forward.1} parent=87 // pred_check_branch
          %655 = sbr.rel (%p653) target = $region120
        $region119: #{block35_forward.1} parent=87 // pred_region
          %656 = dma.done [#allocation17], 16
        $region120: #{block35_forward.1} parent=87 // pred_fallthru
          _
        // Predicated region
        $region121: #{block35_forward.1} parent=87 // pred_check
          %p657 = pneg %p250
        $region122: #{block35_forward.1} parent=87 // pred_check_branch
          %659 = sbr.rel (%p657) target = $region124
        $region123: #{block35_forward.1} parent=87 // pred_region
          %660 = dma.done [#allocation17], 16
        $region124: #{block35_forward.1} parent=87 // pred_fallthru
          _
        // Predicated region
        $region125: #{block35_forward.1} parent=87 // pred_check
          %p661 = pneg %p292
        $region126: #{block35_forward.1} parent=87 // pred_check_branch
          %663 = sbr.rel (%p661) target = $region128
        $region127: #{block35_forward.1} parent=87 // pred_region
          %664 = dma.done [#allocation20], 16
        $region128: #{block35_forward.1} parent=87 // pred_fallthru
          _
        // Predicated region
        $region129: #{block35_forward.1} parent=87 // pred_check
          %p665 = pneg %p313
        $region130: #{block35_forward.1} parent=87 // pred_check_branch
          %667 = sbr.rel (%p665) target = $region132
        $region131: #{block35_forward.1} parent=87 // pred_region
          %668 = dma.done [#allocation20], 16
        $region132: #{block35_forward.1} parent=87 // pred_fallthru
          _
        // Predicated region
        $region133: #{block35_forward.1} parent=87 // pred_check
          %p669 = pneg %p355
        $region134: #{block35_forward.1} parent=87 // pred_check_branch
          %671 = sbr.rel (%p669) target = $region136
        $region135: #{block35_forward.1} parent=87 // pred_region
          %672 = dma.done [#allocation23], 768
        $region136: #{block35_forward.1} parent=87 // pred_fallthru
          _
        // Predicated region
        $region137: #{block35_forward.1} parent=87 // pred_check
          %p673 = pneg %p397
        $region138: #{block35_forward.1} parent=87 // pred_check_branch
          %675 = sbr.rel (%p673) target = $region140
        $region139: #{block35_forward.1} parent=87 // pred_region
          %676 = dma.done [#allocation23], 48
        $region140: #{block35_forward.1} parent=87 // pred_fallthru
          _
        %s677 = sand.u32 %s48, 1
        %s678 = scalar_lea.sflag [#allocation5], %s677
        %s679 = sand.u32 %s48, 1
        %s680 = smul.addr %s679, 192
        %s681 = scalar_lea.vmem [#allocation4], %s680
        %p682 = pneg %p61
        %p683 = pneg %p58
        %p684 = pneg %p82
        %p685 = pneg %p79
        %p686 = pneg %p103
        %p687 = pneg %p100
        %p688 = pneg %p124
        %p689 = pneg %p121
        %p690 = pneg %p145
        %p691 = pneg %p142
        %p692 = pneg %p166
        %p693 = pneg %p163
        %p694 = pneg %p187
        %p695 = pneg %p184
        %p696 = pneg %p208
        %p697 = pneg %p205
        %p698 = pneg %p229
        %p699 = pneg %p226
        %p700 = pneg %p250
        %p701 = pneg %p247
        %p702 = pneg %p271
        %p703 = pneg %p268
        %p704 = pneg %p292
        %p705 = pneg %p289
        %p706 = pneg %p313
        %p707 = pneg %p310
        %p708 = pneg %p334
        %p709 = pneg %p331
        %p710 = pneg %p355
        %p711 = pneg %p352
        %p712 = pneg %p376
        %p713 = pneg %p373
        %p714 = pneg %p397
        %p715 = pneg %p394
        %p716 = pneg %p423
        %p717 = pneg %p420
        %s718 = sand.u32 %s410, 1
        %s719 = scalar_lea.sflag [#allocation6], %s718
        %s720 = sand.u32 %s410, 1
        %s721 = smul.addr %s720, 192
        %s722 = scalar_lea.vmem [#allocation25], %s721
        %v724 = vld [vmem:[%s624] sm:$0xff]
        %v725 = vld [vmem:[%s624 + $0x8] sm:$0xff]
        %v726 = vld [vmem:[%s624 + $0x10] sm:$0xff]
        %v727 = vld [vmem:[%s624 + $0x18] sm:$0xff]
        %v728 = vld [vmem:[%s624 + $0x20] sm:$0xff]
        %v729 = vld [vmem:[%s624 + $0x28] sm:$0xff]
        %v730 = vld [vmem:[%s624 + $0x30] sm:$0xff]
        %v731 = vld [vmem:[%s624 + $0x38] sm:$0xff]
        %v732 = vld [vmem:[%s624 + $0x40] sm:$0xff]
        %v733 = vld [vmem:[%s624 + $0x48] sm:$0xff]
        %v734 = vld [vmem:[%s624 + $0x50] sm:$0xff]
        %v735 = vld [vmem:[%s624 + $0x58] sm:$0xff]
        %v736 = vld [vmem:[%s624 + $0x60] sm:$0xff]
        %v737 = vld [vmem:[%s624 + $0x68] sm:$0xff]
        %v738 = vld [vmem:[%s624 + $0x70] sm:$0xff]
        %v739 = vld [vmem:[%s624 + $0x78] sm:$0xff]
        %v740 = vld [vmem:[%s624 + $0x80] sm:$0xff]
        %v741 = vld [vmem:[%s624 + $0x88] sm:$0xff]
        %v742 = vld [vmem:[%s624 + $0x90] sm:$0xff]
        %v743 = vld [vmem:[%s624 + $0x98] sm:$0xff]
        %v744 = vld [vmem:[%s624 + $0xa0] sm:$0xff]
        %v745 = vld [vmem:[%s624 + $0xa8] sm:$0xff]
        %v746 = vld [vmem:[%s624 + $0xb0] sm:$0xff]
        %v747 = vld [vmem:[%s624 + $0xb8] sm:$0xff]
        %v748 = vpack.c.bf16 %v727, %v724
        %v749 = vpack.c.bf16 %v728, %v725
        %v750 = vpack.c.bf16 %v729, %v726
        %v751 = vpack.c.bf16 %v733, %v730
        %v752 = vpack.c.bf16 %v734, %v731
        %v753 = vpack.c.bf16 %v735, %v732
        %v754 = vpack.c.bf16 %v739, %v736
        %v755 = vpack.c.bf16 %v740, %v737
        %v756 = vpack.c.bf16 %v741, %v738
        %v757 = vpack.c.bf16 %v745, %v742
        %v758 = vpack.c.bf16 %v746, %v743
        %v759 = vpack.c.bf16 %v747, %v744
        %v760 = vld [vmem:[%s1] sm:$0xf]
        %v761 = vld [vmem:[%s1 + $0x4] sm:$0xf]
        %v762 = vld [vmem:[%s1 + $0x8] sm:$0xf]
        %v763 = vld [vmem:[%s1 + $0xc] sm:$0xf]
        %v764 = vld [vmem:[%s1 + $0x10] sm:$0xf]
        %v765 = vld [vmem:[%s1 + $0x14] sm:$0xf]
        %v766 = vld [vmem:[%s1 + $0x18] sm:$0xf]
        %v767 = vld [vmem:[%s1 + $0x1c] sm:$0xf]
        %v768 = vld [vmem:[%s1 + $0x20] sm:$0xf]
        %v769 = vld [vmem:[%s1 + $0x24] sm:$0xf]
        %v770 = vld [vmem:[%s1 + $0x28] sm:$0xf]
        %v771 = vld [vmem:[%s1 + $0x2c] sm:$0xf]
        %v772 = vld [vmem:[%s1 + $0x30] sm:$0xf]
        %v773 = vld [vmem:[%s1 + $0x34] sm:$0xf]
        %v774 = vld [vmem:[%s1 + $0x38] sm:$0xf]
        %v775 = vld [vmem:[%s1 + $0x3c] sm:$0xf]
        %v776 = vld [vmem:[%s1 + $0x40] sm:$0xf]
        %v777 = vld [vmem:[%s1 + $0x44] sm:$0xf]
        %v778 = vld [vmem:[%s1 + $0x48] sm:$0xf]
        %v779 = vld [vmem:[%s1 + $0x4c] sm:$0xf]
        %v780 = vld [vmem:[%s1 + $0x50] sm:$0xf]
        %v781 = vld [vmem:[%s1 + $0x54] sm:$0xf]
        %v782 = vld [vmem:[%s1 + $0x58] sm:$0xf]
        %v783 = vld [vmem:[%s1 + $0x5c] sm:$0xf]
        %v784 = vld [vmem:[%s1 + $0x60] sm:$0xf]
        %v785 = vld [vmem:[%s1 + $0x64] sm:$0xf]
        %v786 = vld [vmem:[%s1 + $0x68] sm:$0xf]
        %v787 = vld [vmem:[%s1 + $0x6c] sm:$0xf]
        %v788 = vld [vmem:[%s1 + $0x70] sm:$0xf]
        %v789 = vld [vmem:[%s1 + $0x74] sm:$0xf]
        %v790 = vld [vmem:[%s1 + $0x78] sm:$0xf]
        %v791 = vld [vmem:[%s1 + $0x7c] sm:$0xf]
        %v792 = vld [vmem:[%s1 + $0x80] sm:$0xf]
        %v793 = vld [vmem:[%s1 + $0x84] sm:$0xf]
        %v794 = vld [vmem:[%s1 + $0x88] sm:$0xf]
        %v795 = vld [vmem:[%s1 + $0x8c] sm:$0xf]
        %v796 = vld [vmem:[%s1 + $0x90] sm:$0xf]
        %v797 = vld [vmem:[%s1 + $0x94] sm:$0xf]
        %v798 = vld [vmem:[%s1 + $0x98] sm:$0xf]
        %v799 = vld [vmem:[%s1 + $0x9c] sm:$0xf]
        %v840 = vunpack.c.l.b16 %v760
        %v841 = vunpack.c.l.b16 %v761
        %v842 = vunpack.c.l.b16 %v762
        %v843 = vunpack.c.l.b16 %v763
        %v844 = vunpack.c.l.b16 %v764
        %v845 = vunpack.c.l.b16 %v765
        %v846 = vunpack.c.l.b16 %v766
        %v847 = vunpack.c.l.b16 %v767
        %v848 = vunpack.c.l.b16 %v768
        %v849 = vunpack.c.l.b16 %v769
        %v850 = vunpack.c.l.b16 %v770
        %v851 = vunpack.c.l.b16 %v771
        %v852 = vunpack.c.l.b16 %v772
        %v853 = vunpack.c.l.b16 %v773
        %v854 = vunpack.c.l.b16 %v774
        %v855 = vunpack.c.l.b16 %v775
        %v856 = vunpack.c.l.b16 %v776
        %v857 = vunpack.c.l.b16 %v777
        %v858 = vunpack.c.l.b16 %v778
        %v859 = vunpack.c.l.b16 %v779
        %v860 = vunpack.c.l.b16 %v780
        %v861 = vunpack.c.l.b16 %v781
        %v862 = vunpack.c.l.b16 %v782
        %v863 = vunpack.c.l.b16 %v783
        %v864 = vunpack.c.l.b16 %v784
        %v865 = vunpack.c.l.b16 %v785
        %v866 = vunpack.c.l.b16 %v786
        %v867 = vunpack.c.l.b16 %v787
        %v868 = vunpack.c.l.b16 %v788
        %v869 = vunpack.c.l.b16 %v789
        %v870 = vunpack.c.l.b16 %v790
        %v871 = vunpack.c.l.b16 %v791
        %v872 = vunpack.c.l.b16 %v792
        %v873 = vunpack.c.l.b16 %v793
        %v874 = vunpack.c.l.b16 %v794
        %v875 = vunpack.c.l.b16 %v795
        %v876 = vunpack.c.l.b16 %v796
        %v877 = vunpack.c.l.b16 %v797
        %v878 = vunpack.c.l.b16 %v798
        %v879 = vunpack.c.l.b16 %v799
        %v880 = vpack.c.b16 %v841, %v840
        %v881 = vpack.c.b16 %v843, %v842
        %v882 = vpack.c.b16 %v845, %v844
        %v883 = vpack.c.b16 %v847, %v846
        %v884 = vpack.c.b16 %v849, %v848
        %v885 = vpack.c.b16 %v851, %v850
        %v886 = vpack.c.b16 %v853, %v852
        %v887 = vpack.c.b16 %v855, %v854
        %v888 = vpack.c.b16 %v857, %v856
        %v889 = vpack.c.b16 %v859, %v858
        %v890 = vpack.c.b16 %v861, %v860
        %v891 = vpack.c.b16 %v863, %v862
        %v892 = vpack.c.b16 %v865, %v864
        %v893 = vpack.c.b16 %v867, %v866
        %v894 = vpack.c.b16 %v869, %v868
        %v895 = vpack.c.b16 %v871, %v870
        %v896 = vpack.c.b16 %v873, %v872
        %v897 = vpack.c.b16 %v875, %v874
        %v898 = vpack.c.b16 %v877, %v876
        %v899 = vpack.c.b16 %v879, %v878
        %vm920 = vcmask 523264
        %v922 = vsel %vm920, %v750, 0
        %v925 = vsel %vm920, %v753, 0
        %v928 = vsel %vm920, %v756, 0
        %v931 = vsel %vm920, %v759, 0
        %933 = vmatprep.subr.bf16.mxu0 0
        %934 = vmatpush1.bf16.msra.mxu0 %v880
        %935 = vmatprep.subr.bf16.mxu0 0
        %936 = vmatpush1.bf16.msra.mxu0 %v881
        %937 = vmatprep.subr.bf16.mxu0 0
        %938 = vmatpush1.bf16.msra.mxu0 %v882
        %939 = vmatprep.subr.bf16.mxu0 0
        %940 = vmatpush1.bf16.msra.mxu0 %v883
        %941 = vmatprep.subr.bf16.mxu0 0
        %942 = vmatpush1.bf16.msra.mxu0 %v884
        %943 = vmatprep.subr.bf16.mxu0 0
        %944 = vmatpush1.bf16.msra.mxu0 %v885
        %945 = vmatprep.subr.bf16.mxu0 0
        %946 = vmatpush1.bf16.msra.mxu0 %v886
        %947 = vmatprep.subr.bf16.mxu0 0
        %948 = vmatpush1.bf16.msra.mxu0 %v887
        %949 = vmatprep.subr.bf16.mxu0 0
        %950 = vmatpush1.bf16.msra.mxu0 %v888
        %951 = vmatprep.subr.bf16.mxu0 0
        %952 = vmatpush1.bf16.msra.mxu0 %v889
        %953 = vmatprep.subr.bf16.mxu0 0
        %954 = vmatpush1.bf16.msra.mxu0 %v890
        %955 = vmatprep.subr.bf16.mxu0 0
        %956 = vmatpush1.bf16.msra.mxu0 %v891
        %957 = vmatprep.subr.bf16.mxu0 0
        %958 = vmatpush1.bf16.msra.mxu0 %v892
        %959 = vmatprep.subr.bf16.mxu0 0
        %960 = vmatpush1.bf16.msra.mxu0 %v893
        %961 = vmatprep.subr.bf16.mxu0 0
        %962 = vmatpush1.bf16.msra.mxu0 %v894
        %963 = vmatprep.subr.bf16.mxu0 0
        %964 = vmatpush1.bf16.msra.mxu0 %v895
        %965 = vmatprep.mubr.bf16.mxu0 %v749
        %966 = vmatmul.mubr.bf16.gmra.mrb[0].mxu0 %v748
        %v967 = vpop.f32.mrb[0].mxu0
        %v968 = vadd.f32 0.0, %v967
        %v969 = vpop.f32.mrb[0].mxu0
        %v970 = vpop.f32.mrb[0].mxu0
        %v971 = vadd.f32 0.0, %v970
        %v972 = vpop.f32.mrb[0].mxu0
        %973 = vmatprep.mubr.bf16.mxu0 %v752
        %974 = vmatmul.mubr.bf16.gmra.mrb[0].mxu0 %v751
        %v975 = vpop.f32.mrb[0].mxu0
        %v976 = vadd.f32 0.0, %v975
        %v977 = vpop.f32.mrb[0].mxu0
        %v978 = vpop.f32.mrb[0].mxu0
        %v979 = vadd.f32 0.0, %v978
        %v980 = vpop.f32.mrb[0].mxu0
        %981 = vmatprep.mubr.bf16.mxu0 %v755
        %982 = vmatmul.mubr.bf16.gmra.mrb[0].mxu0 %v754
        %v983 = vpop.f32.mrb[0].mxu0
        %v984 = vadd.f32 0.0, %v983
        %v985 = vpop.f32.mrb[0].mxu0
        %v986 = vpop.f32.mrb[0].mxu0
        %v987 = vadd.f32 0.0, %v986
        %v988 = vpop.f32.mrb[0].mxu0
        %989 = vmatprep.mubr.bf16.mxu0 %v758
        %990 = vmatmul.mubr.bf16.gmra.mrb[0].mxu0 %v757
        %v991 = vpop.f32.mrb[0].mxu0
        %v992 = vadd.f32 0.0, %v991
        %v993 = vpop.f32.mrb[0].mxu0
        %v994 = vpop.f32.mrb[0].mxu0
        %v995 = vadd.f32 0.0, %v994
        %v996 = vpop.f32.mrb[0].mxu0
        %997 = vdwg.mxu0
        %998 = vmatprep.subr.bf16.mxu0 0
        %999 = vmatpush1.bf16.msra.mxu0 %v896
        %1000 = vmatprep.subr.bf16.mxu0 0
        %1001 = vmatpush1.bf16.msra.mxu0 %v897
        %1002 = vmatprep.subr.bf16.mxu0 0
        %1003 = vmatpush1.bf16.msra.mxu0 %v898
        %1004 = vmatprep.subr.bf16.mxu0 0
        %1005 = vmatpush1.bf16.msra.mxu0 %v899
        %1006 = vmatprep.subr.bf16.mxu0 0
        %1007 = vmatpush1.bf16.msra.mxu0 0
        %1008 = vmatprep.subr.bf16.mxu0 0
        %1009 = vmatpush1.bf16.msra.mxu0 0
        %1010 = vmatprep.subr.bf16.mxu0 0
        %1011 = vmatpush1.bf16.msra.mxu0 0
        %1012 = vmatprep.subr.bf16.mxu0 0
        %1013 = vmatpush1.bf16.msra.mxu0 0
        %1014 = vmatprep.subr.bf16.mxu0 0
        %1015 = vmatpush1.bf16.msra.mxu0 0
        %1016 = vmatprep.subr.bf16.mxu0 0
        %1017 = vmatpush1.bf16.msra.mxu0 0
        %1018 = vmatprep.subr.bf16.mxu0 0
        %1019 = vmatpush1.bf16.msra.mxu0 0
        %1020 = vmatprep.subr.bf16.mxu0 0
        %1021 = vmatpush1.bf16.msra.mxu0 0
        %1022 = vmatprep.subr.bf16.mxu0 0
        %1023 = vmatpush1.bf16.msra.mxu0 0
        %1024 = vmatprep.subr.bf16.mxu0 0
        %1025 = vmatpush1.bf16.msra.mxu0 0
        %1026 = vmatprep.subr.bf16.mxu0 0
        %1027 = vmatpush1.bf16.msra.mxu0 0
        %1028 = vmatprep.subr.bf16.mxu0 0
        %1029 = vmatpush1.bf16.msra.mxu0 0
        %1030 = vmatprep.mubr.bf16.mxu0 0
        %1031 = vmatmul.mubr.bf16.gmra.mrb[0].mxu0 %v922
        %v1032 = vpop.f32.mrb[0].mxu0
        %v1033 = vadd.f32 %v968, %v1032
        %v1034 = vpop.f32.mrb[0].mxu0
        %v1035 = vpop.f32.mrb[0].mxu0
        %v1036 = vadd.f32 %v971, %v1035
        %v1037 = vpop.f32.mrb[0].mxu0
        %1038 = vmatprep.mubr.bf16.mxu0 0
        %1039 = vmatmul.mubr.bf16.gmra.mrb[0].mxu0 %v925
        %v1040 = vpop.f32.mrb[0].mxu0
        %v1041 = vadd.f32 %v976, %v1040
        %v1042 = vpop.f32.mrb[0].mxu0
        %v1043 = vpop.f32.mrb[0].mxu0
        %v1044 = vadd.f32 %v979, %v1043
        %v1045 = vpop.f32.mrb[0].mxu0
        %1046 = vmatprep.mubr.bf16.mxu0 0
        %1047 = vmatmul.mubr.bf16.gmra.mrb[0].mxu0 %v928
        %v1048 = vpop.f32.mrb[0].mxu0
        %v1049 = vadd.f32 %v984, %v1048
        %v1050 = vpop.f32.mrb[0].mxu0
        %v1051 = vpop.f32.mrb[0].mxu0
        %v1052 = vadd.f32 %v987, %v1051
        %v1053 = vpop.f32.mrb[0].mxu0
        %1054 = vmatprep.mubr.bf16.mxu0 0
        %1055 = vmatmul.mubr.bf16.gmra.mrb[0].mxu0 %v931
        %v1056 = vpop.f32.mrb[0].mxu0
        %v1057 = vadd.f32 %v992, %v1056
        %v1058 = vpop.f32.mrb[0].mxu0
        %v1059 = vpop.f32.mrb[0].mxu0
        %v1060 = vadd.f32 %v995, %v1059
        %v1061 = vpop.f32.mrb[0].mxu0
        %1062 = vdwg.mxu0
        %v1063 = vld [vmem:[#allocation7] sm:$0x1]
        %v1065 = vlaneseq
        %v1066 = vshrl.u32 %v1065, 7
        %v1067 = vsub.s32 0, %v1066
        %v1068 = vrot.slane %v1063, %v1067
        %v1070 = vmul.f32 %v1033, %v1068
        %v1071 = vmul.f32 %v1036, %v1068
        %v1072 = vmul.f32 %v1041, %v1068
        %v1073 = vmul.f32 %v1044, %v1068
        %v1074 = vmul.f32 %v1049, %v1068
        %v1075 = vmul.f32 %v1052, %v1068
        %v1076 = vmul.f32 %v1057, %v1068
        %v1077 = vmul.f32 %v1060, %v1068
        %v1078 = vld [vmem:[#allocation9] sm:$0x1]
        %v1080 = vlaneseq
        %v1081 = vshrl.u32 %v1080, 7
        %v1082 = vsub.s32 0, %v1081
        %v1083 = vrot.slane %v1078, %v1082
        %v1085 = vadd.f32 %v1070, %v1083
        %v1086 = vadd.f32 %v1071, %v1083
        %v1087 = vadd.f32 %v1072, %v1083
        %v1088 = vadd.f32 %v1073, %v1083
        %v1089 = vadd.f32 %v1074, %v1083
        %v1090 = vadd.f32 %v1075, %v1083
        %v1091 = vadd.f32 %v1076, %v1083
        %v1092 = vadd.f32 %v1077, %v1083
        %v1093 = vmax.f32 %v1085, 0.0
        %v1094 = vmax.f32 %v1086, 0.0
        %v1095 = vmax.f32 %v1087, 0.0
        %v1096 = vmax.f32 %v1088, 0.0
        %v1097 = vmax.f32 %v1089, 0.0
        %v1098 = vmax.f32 %v1090, 0.0
        %v1099 = vmax.f32 %v1091, 0.0
        %v1100 = vmax.f32 %v1092, 0.0
        %vm1101 = vcmask 261120
        %1102 = vst.msk [vmem:[#allocation2] sm:$0xff] %vm1101, 0.0
        %1103 = vst.msk [vmem:[#allocation2 + $0x8] sm:$0xff] %vm1101, 0.0
        %1104 = vst.msk [vmem:[#allocation2 + $0x10] sm:$0xff] %vm1101, 0.0
        %1105 = vst.msk [vmem:[#allocation2 + $0x18] sm:$0xff] %vm1101, 0.0
        %1106 = vst.msk [vmem:[#allocation2 + $0x20] sm:$0xff] %vm1101, 0.0
        %1107 = vst.msk [vmem:[#allocation2 + $0x28] sm:$0xff] %vm1101, 0.0
        %1108 = vst.msk [vmem:[#allocation2 + $0x30] sm:$0xff] %vm1101, 0.0
        %1109 = vst.msk [vmem:[#allocation2 + $0x38] sm:$0xff] %vm1101, 0.0
        %1110 = vst.msk [vmem:[#allocation2 + $0x40] sm:$0xff] %vm1101, 0.0
        %1111 = vst.msk [vmem:[#allocation2 + $0x48] sm:$0xff] %vm1101, 0.0
        %1112 = vst.msk [vmem:[#allocation2 + $0x50] sm:$0xff] %vm1101, 0.0
        %1113 = vst.msk [vmem:[#allocation2 + $0x58] sm:$0xff] %vm1101, 0.0
        %1114 = vst.msk [vmem:[#allocation2 + $0x60] sm:$0xff] %vm1101, 0.0
        %1115 = vst.msk [vmem:[#allocation2 + $0x68] sm:$0xff] %vm1101, 0.0
        %1116 = vst.msk [vmem:[#allocation2 + $0x70] sm:$0xff] %vm1101, 0.0
        %1117 = vst.msk [vmem:[#allocation2 + $0x78] sm:$0xff] %vm1101, 0.0
        %1118 = vst.msk [vmem:[#allocation2 + $0x80] sm:$0xff] %vm1101, 0.0
        %1119 = vst.msk [vmem:[#allocation2 + $0x88] sm:$0xff] %vm1101, 0.0
        %1120 = vst.msk [vmem:[#allocation2 + $0x90] sm:$0xff] %vm1101, 0.0
        %1121 = vst.msk [vmem:[#allocation2 + $0x98] sm:$0xff] %vm1101, 0.0
        %1122 = vst.msk [vmem:[#allocation2 + $0xa0] sm:$0xff] %vm1101, 0.0
        %1123 = vst.msk [vmem:[#allocation2 + $0xa8] sm:$0xff] %vm1101, 0.0
        %1124 = vst.msk [vmem:[#allocation2 + $0xb0] sm:$0xff] %vm1101, 0.0
        %1125 = vst.msk [vmem:[#allocation2 + $0xb8] sm:$0xff] %vm1101, 0.0
        %1126 = vst.msk [vmem:[#allocation2 + $0xc0] sm:$0xff] %vm1101, 0.0
        %1127 = vst.msk [vmem:[#allocation2 + $0xc8] sm:$0xff] %vm1101, 0.0
        %1128 = vst.msk [vmem:[#allocation2 + $0xd0] sm:$0xff] %vm1101, 0.0
        %1129 = vst.msk [vmem:[#allocation2 + $0xd8] sm:$0xff] %vm1101, 0.0
        %1130 = vst.msk [vmem:[#allocation2 + $0xe0] sm:$0xff] %vm1101, 0.0
        %1131 = vst.msk [vmem:[#allocation2 + $0xe8] sm:$0xff] %vm1101, 0.0
        %1140 = vrot.lane.b32.xlu0 %v1093, 96
        %v1141 = vpop.permute.xlu0 %1140
        %1142 = vrot.lane.b32.xlu0 %v1094, 96
        %v1143 = vpop.permute.xlu0 %1142
        %1144 = vrot.lane.b32.xlu0 %v1095, 96
        %v1145 = vpop.permute.xlu0 %1144
        %1146 = vrot.lane.b32.xlu0 %v1096, 96
        %v1147 = vpop.permute.xlu0 %1146
        %1148 = vrot.lane.b32.xlu0 %v1097, 96
        %v1149 = vpop.permute.xlu0 %1148
        %1150 = vrot.lane.b32.xlu0 %v1098, 96
        %v1151 = vpop.permute.xlu0 %1150
        %1152 = vrot.lane.b32.xlu0 %v1099, 96
        %v1153 = vpop.permute.xlu0 %1152
        %1154 = vrot.lane.b32.xlu0 %v1100, 96
        %v1155 = vpop.permute.xlu0 %1154
        %s1164 = scalar_lea.vmem [#allocation2], 24
        %1165 = vst.msk [vmem:[%s1164 + $0x8] sm:$0xff] %vm1101, %v1141
        %1166 = vst.msk [vmem:[%s1164 + $0x20] sm:$0xff] %vm1101, %v1143
        %1167 = vst.msk [vmem:[%s1164 + $0x38] sm:$0xff] %vm1101, %v1145
        %1168 = vst.msk [vmem:[%s1164 + $0x50] sm:$0xff] %vm1101, %v1147
        %1169 = vst.msk [vmem:[%s1164 + $0x68] sm:$0xff] %vm1101, %v1149
        %1170 = vst.msk [vmem:[%s1164 + $0x80] sm:$0xff] %vm1101, %v1151
        %1171 = vst.msk [vmem:[%s1164 + $0x98] sm:$0xff] %vm1101, %v1153
        %1172 = vst.msk [vmem:[%s1164 + $0xb0] sm:$0xff] %vm1101, %v1155
        %v1173 = vld [vmem:[#allocation2] sm:$0xff]
        %v1174 = vld [vmem:[#allocation2 + $0x8] sm:$0xff]
        %v1175 = vld [vmem:[#allocation2 + $0x10] sm:$0xff]
        %v1176 = vld [vmem:[#allocation2 + $0x18] sm:$0xff]
        %v1177 = vld [vmem:[#allocation2 + $0x20] sm:$0xff]
        %v1178 = vld [vmem:[#allocation2 + $0x28] sm:$0xff]
        %v1179 = vld [vmem:[#allocation2 + $0x30] sm:$0xff]
        %v1180 = vld [vmem:[#allocation2 + $0x38] sm:$0xff]
        %v1181 = vld [vmem:[#allocation2 + $0x40] sm:$0xff]
        %v1182 = vld [vmem:[#allocation2 + $0x48] sm:$0xff]
        %v1183 = vld [vmem:[#allocation2 + $0x50] sm:$0xff]
        %v1184 = vld [vmem:[#allocation2 + $0x58] sm:$0xff]
        %v1185 = vld [vmem:[#allocation2 + $0x60] sm:$0xff]
        %v1186 = vld [vmem:[#allocation2 + $0x68] sm:$0xff]
        %v1187 = vld [vmem:[#allocation2 + $0x70] sm:$0xff]
        %v1188 = vld [vmem:[#allocation2 + $0x78] sm:$0xff]
        %v1189 = vld [vmem:[#allocation2 + $0x80] sm:$0xff]
        %v1190 = vld [vmem:[#allocation2 + $0x88] sm:$0xff]
        %v1191 = vld [vmem:[#allocation2 + $0x90] sm:$0xff]
        %v1192 = vld [vmem:[#allocation2 + $0x98] sm:$0xff]
        %v1193 = vld [vmem:[#allocation2 + $0xa0] sm:$0xff]
        %v1194 = vld [vmem:[#allocation2 + $0xa8] sm:$0xff]
        %v1195 = vld [vmem:[#allocation2 + $0xb0] sm:$0xff]
        %v1196 = vld [vmem:[#allocation2 + $0xb8] sm:$0xff]
        %v1197 = vld [vmem:[#allocation2 + $0xc0] sm:$0xff]
        %v1198 = vld [vmem:[#allocation2 + $0xc8] sm:$0xff]
        %v1199 = vld [vmem:[#allocation2 + $0xd0] sm:$0xff]
        %v1200 = vld [vmem:[#allocation2 + $0xd8] sm:$0xff]
        %v1201 = vld [vmem:[#allocation2 + $0xe0] sm:$0xff]
        %v1202 = vld [vmem:[#allocation2 + $0xe8] sm:$0xff]
        %vm1219 = vcmask 1040384
        %v1220 = vrot.slane %v1173, 7
        %v1221 = vrot.slane %v1174, 7
        %v1222 = vsel %vm1219, %v1220, %v1221
        %v1223 = vrot.slane %v1176, 7
        %v1224 = vrot.slane %v1177, 7
        %v1225 = vsel %vm1219, %v1223, %v1224
        %v1226 = vrot.slane %v1179, 7
        %v1227 = vrot.slane %v1180, 7
        %v1228 = vsel %vm1219, %v1226, %v1227
        %v1229 = vrot.slane %v1182, 7
        %v1230 = vrot.slane %v1183, 7
        %v1231 = vsel %vm1219, %v1229, %v1230
        %v1232 = vrot.slane %v1185, 7
        %v1233 = vrot.slane %v1186, 7
        %v1234 = vsel %vm1219, %v1232, %v1233
        %v1235 = vrot.slane %v1188, 7
        %v1236 = vrot.slane %v1189, 7
        %v1237 = vsel %vm1219, %v1235, %v1236
        %v1238 = vrot.slane %v1191, 7
        %v1239 = vrot.slane %v1192, 7
        %v1240 = vsel %vm1219, %v1238, %v1239
        %v1241 = vrot.slane %v1194, 7
        %v1242 = vrot.slane %v1195, 7
        %v1243 = vsel %vm1219, %v1241, %v1242
        %v1252 = vpack.c.bf16 %v1225, %v1222
        %v1253 = vpack.c.bf16 %v1231, %v1228
        %v1254 = vpack.c.bf16 %v1237, %v1234
        %v1255 = vpack.c.bf16 %v1243, %v1240
        %v1256 = vld [vmem:[#allocation10] sm:$0xf]
        %v1257 = vld [vmem:[#allocation10 + $0x4] sm:$0xf]
        %v1258 = vld [vmem:[#allocation10 + $0x8] sm:$0xf]
        %v1259 = vld [vmem:[#allocation10 + $0xc] sm:$0xf]
        %v1260 = vpack.c.bf16 %v1177, %v1174
        %v1261 = vpack.c.bf16 %v1183, %v1180
        %v1262 = vpack.c.bf16 %v1189, %v1186
        %v1263 = vpack.c.bf16 %v1195, %v1192
        %s1264 = scalar_lea.vmem [#allocation10], 16
        %v1265 = vld [vmem:[%s1264] sm:$0xf]
        %v1266 = vld [vmem:[%s1264 + $0x4] sm:$0xf]
        %v1267 = vld [vmem:[%s1264 + $0x8] sm:$0xf]
        %v1268 = vld [vmem:[%s1264 + $0xc] sm:$0xf]
        %v1273 = vunpack.c.l.b16 %v1265
        %v1274 = vunpack.c.l.b16 %v1266
        %v1275 = vunpack.c.l.b16 %v1267
        %v1276 = vunpack.c.l.b16 %v1268
        %v1277 = vpack.c.b16 %v1274, %v1273
        %v1278 = vpack.c.b16 %v1276, %v1275
        %v1282 = vsel %vm1101, %v1260, 0
        %v1285 = vsel %vm1101, %v1261, 0
        %v1288 = vsel %vm1101, %v1262, 0
        %v1291 = vsel %vm1101, %v1263, 0
        %1293 = vmatprep.subr.bf16.mxu0 0
        %1294 = vmatpush1.bf16.msra.mxu0 %v1277
        %1295 = vmatprep.subr.bf16.mxu0 0
        %1296 = vmatpush1.bf16.msra.mxu0 %v1278
        %1297 = vmatprep.subr.bf16.mxu0 0
        %1298 = vmatpush1.bf16.msra.mxu0 0
        %1299 = vmatprep.subr.bf16.mxu0 0
        %1300 = vmatpush1.bf16.msra.mxu0 0
        %1301 = vmatprep.subr.bf16.mxu0 0
        %1302 = vmatpush1.bf16.msra.mxu0 0
        %1303 = vmatprep.subr.bf16.mxu0 0
        %1304 = vmatpush1.bf16.msra.mxu0 0
        %1305 = vmatprep.subr.bf16.mxu0 0
        %1306 = vmatpush1.bf16.msra.mxu0 0
        %1307 = vmatprep.subr.bf16.mxu0 0
        %1308 = vmatpush1.bf16.msra.mxu0 0
        %1309 = vmatprep.subr.bf16.mxu0 0
        %1310 = vmatpush1.bf16.msra.mxu0 0
        %1311 = vmatprep.subr.bf16.mxu0 0
        %1312 = vmatpush1.bf16.msra.mxu0 0
        %1313 = vmatprep.subr.bf16.mxu0 0
        %1314 = vmatpush1.bf16.msra.mxu0 0
        %1315 = vmatprep.subr.bf16.mxu0 0
        %1316 = vmatpush1.bf16.msra.mxu0 0
        %1317 = vmatprep.subr.bf16.mxu0 0
        %1318 = vmatpush1.bf16.msra.mxu0 0
        %1319 = vmatprep.subr.bf16.mxu0 0
        %1320 = vmatpush1.bf16.msra.mxu0 0
        %1321 = vmatprep.subr.bf16.mxu0 0
        %1322 = vmatpush1.bf16.msra.mxu0 0
        %1323 = vmatprep.subr.bf16.mxu0 0
        %1324 = vmatpush1.bf16.msra.mxu0 0
        %1325 = vmatprep.mubr.bf16.mxu0 0
        %1326 = vmatmul.mubr.bf16.gmra.mrb[0].mxu0 %v1282
        %v1327 = vpop.f32.mrb[0].mxu0
        %v1328 = vadd.f32 0.0, %v1327
        %v1329 = vpop.f32.mrb[0].mxu0
        %v1330 = vpop.f32.mrb[0].mxu0
        %v1331 = vadd.f32 0.0, %v1330
        %v1332 = vpop.f32.mrb[0].mxu0
        %1333 = vmatprep.mubr.bf16.mxu0 0
        %1334 = vmatmul.mubr.bf16.gmra.mrb[0].mxu0 %v1285
        %v1335 = vpop.f32.mrb[0].mxu0
        %v1336 = vadd.f32 0.0, %v1335
        %v1337 = vpop.f32.mrb[0].mxu0
        %v1338 = vpop.f32.mrb[0].mxu0
        %v1339 = vadd.f32 0.0, %v1338
        %v1340 = vpop.f32.mrb[0].mxu0
        %1341 = vmatprep.mubr.bf16.mxu0 0
        %1342 = vmatmul.mubr.bf16.gmra.mrb[0].mxu0 %v1288
        %v1343 = vpop.f32.mrb[0].mxu0
        %v1344 = vadd.f32 0.0, %v1343
        %v1345 = vpop.f32.mrb[0].mxu0
        %v1346 = vpop.f32.mrb[0].mxu0
        %v1347 = vadd.f32 0.0, %v1346
        %v1348 = vpop.f32.mrb[0].mxu0
        %1349 = vmatprep.mubr.bf16.mxu0 0
        %1350 = vmatmul.mubr.bf16.gmra.mrb[0].mxu0 %v1291
        %v1351 = vpop.f32.mrb[0].mxu0
        %v1352 = vadd.f32 0.0, %v1351
        %v1353 = vpop.f32.mrb[0].mxu0
        %v1354 = vpop.f32.mrb[0].mxu0
        %v1355 = vadd.f32 0.0, %v1354
        %v1356 = vpop.f32.mrb[0].mxu0
        %1357 = vdwg.mxu0
        %v1362 = vunpack.c.l.b16 %v1256
        %v1363 = vunpack.c.l.b16 %v1257
        %v1364 = vunpack.c.l.b16 %v1258
        %v1365 = vunpack.c.l.b16 %v1259
        %v1366 = vpack.c.b16 %v1363, %v1362
        %v1367 = vpack.c.b16 %v1365, %v1364
        %v1371 = vsel %vm1101, %v1252, 0
        %v1374 = vsel %vm1101, %v1253, 0
        %v1377 = vsel %vm1101, %v1254, 0
        %v1380 = vsel %vm1101, %v1255, 0
        %1382 = vmatprep.subr.bf16.mxu0 0
        %1383 = vmatpush1.bf16.msra.mxu0 %v1366
        %1384 = vmatprep.subr.bf16.mxu0 0
        %1385 = vmatpush1.bf16.msra.mxu0 %v1367
        %1386 = vmatprep.subr.bf16.mxu0 0
        %1387 = vmatpush1.bf16.msra.mxu0 0
        %1388 = vmatprep.subr.bf16.mxu0 0
        %1389 = vmatpush1.bf16.msra.mxu0 0
        %1390 = vmatprep.subr.bf16.mxu0 0
        %1391 = vmatpush1.bf16.msra.mxu0 0
        %1392 = vmatprep.subr.bf16.mxu0 0
        %1393 = vmatpush1.bf16.msra.mxu0 0
        %1394 = vmatprep.subr.bf16.mxu0 0
        %1395 = vmatpush1.bf16.msra.mxu0 0
        %1396 = vmatprep.subr.bf16.mxu0 0
        %1397 = vmatpush1.bf16.msra.mxu0 0
        %1398 = vmatprep.subr.bf16.mxu0 0
        %1399 = vmatpush1.bf16.msra.mxu0 0
        %1400 = vmatprep.subr.bf16.mxu0 0
        %1401 = vmatpush1.bf16.msra.mxu0 0
        %1402 = vmatprep.subr.bf16.mxu0 0
        %1403 = vmatpush1.bf16.msra.mxu0 0
        %1404 = vmatprep.subr.bf16.mxu0 0
        %1405 = vmatpush1.bf16.msra.mxu0 0
        %1406 = vmatprep.subr.bf16.mxu0 0
        %1407 = vmatpush1.bf16.msra.mxu0 0
        %1408 = vmatprep.subr.bf16.mxu0 0
        %1409 = vmatpush1.bf16.msra.mxu0 0
        %1410 = vmatprep.subr.bf16.mxu0 0
        %1411 = vmatpush1.bf16.msra.mxu0 0
        %1412 = vmatprep.subr.bf16.mxu0 0
        %1413 = vmatpush1.bf16.msra.mxu0 0
        %1414 = vmatprep.mubr.bf16.mxu0 0
        %1415 = vmatmul.mubr.bf16.gmra.mrb[0].mxu0 %v1371
        %v1416 = vpop.f32.mrb[0].mxu0
        %v1417 = vadd.f32 %v1328, %v1416
        %v1418 = vpop.f32.mrb[0].mxu0
        %v1419 = vpop.f32.mrb[0].mxu0
        %v1420 = vadd.f32 %v1331, %v1419
        %v1421 = vpop.f32.mrb[0].mxu0
        %1422 = vmatprep.mubr.bf16.mxu0 0
        %1423 = vmatmul.mubr.bf16.gmra.mrb[0].mxu0 %v1374
        %v1424 = vpop.f32.mrb[0].mxu0
        %v1425 = vadd.f32 %v1336, %v1424
        %v1426 = vpop.f32.mrb[0].mxu0
        %v1427 = vpop.f32.mrb[0].mxu0
        %v1428 = vadd.f32 %v1339, %v1427
        %v1429 = vpop.f32.mrb[0].mxu0
        %1430 = vmatprep.mubr.bf16.mxu0 0
        %1431 = vmatmul.mubr.bf16.gmra.mrb[0].mxu0 %v1377
        %v1432 = vpop.f32.mrb[0].mxu0
        %v1433 = vadd.f32 %v1344, %v1432
        %v1434 = vpop.f32.mrb[0].mxu0
        %v1435 = vpop.f32.mrb[0].mxu0
        %v1436 = vadd.f32 %v1347, %v1435
        %v1437 = vpop.f32.mrb[0].mxu0
        %1438 = vmatprep.mubr.bf16.mxu0 0
        %1439 = vmatmul.mubr.bf16.gmra.mrb[0].mxu0 %v1380
        %v1440 = vpop.f32.mrb[0].mxu0
        %v1441 = vadd.f32 %v1352, %v1440
        %v1442 = vpop.f32.mrb[0].mxu0
        %v1443 = vpop.f32.mrb[0].mxu0
        %v1444 = vadd.f32 %v1355, %v1443
        %v1445 = vpop.f32.mrb[0].mxu0
        %1446 = vdwg.mxu0
        %vm1455 = vcmask 1046528
        %v1456 = vrot.slane %v1174, 1
        %v1457 = vrot.slane %v1175, 1
        %v1458 = vsel %vm1455, %v1456, %v1457
        %v1459 = vrot.slane %v1177, 1
        %v1460 = vrot.slane %v1178, 1
        %v1461 = vsel %vm1455, %v1459, %v1460
        %v1462 = vrot.slane %v1180, 1
        %v1463 = vrot.slane %v1181, 1
        %v1464 = vsel %vm1455, %v1462, %v1463
        %v1465 = vrot.slane %v1183, 1
        %v1466 = vrot.slane %v1184, 1
        %v1467 = vsel %vm1455, %v1465, %v1466
        %v1468 = vrot.slane %v1186, 1
        %v1469 = vrot.slane %v1187, 1
        %v1470 = vsel %vm1455, %v1468, %v1469
        %v1471 = vrot.slane %v1189, 1
        %v1472 = vrot.slane %v1190, 1
        %v1473 = vsel %vm1455, %v1471, %v1472
        %v1474 = vrot.slane %v1192, 1
        %v1475 = vrot.slane %v1193, 1
        %v1476 = vsel %vm1455, %v1474, %v1475
        %v1477 = vrot.slane %v1195, 1
        %v1478 = vrot.slane %v1196, 1
        %v1479 = vsel %vm1455, %v1477, %v1478
        %v1488 = vpack.c.bf16 %v1461, %v1458
        %v1489 = vpack.c.bf16 %v1467, %v1464
        %v1490 = vpack.c.bf16 %v1473, %v1470
        %v1491 = vpack.c.bf16 %v1479, %v1476
        %s1492 = scalar_lea.vmem [#allocation10], 32
        %v1493 = vld [vmem:[%s1492] sm:$0xf]
        %v1494 = vld [vmem:[%s1492 + $0x4] sm:$0xf]
        %v1495 = vld [vmem:[%s1492 + $0x8] sm:$0xf]
        %v1496 = vld [vmem:[%s1492 + $0xc] sm:$0xf]
        %v1501 = vunpack.c.l.b16 %v1493
        %v1502 = vunpack.c.l.b16 %v1494
        %v1503 = vunpack.c.l.b16 %v1495
        %v1504 = vunpack.c.l.b16 %v1496
        %v1505 = vpack.c.b16 %v1502, %v1501
        %v1506 = vpack.c.b16 %v1504, %v1503
        %v1510 = vsel %vm1101, %v1488, 0
        %v1513 = vsel %vm1101, %v1489, 0
        %v1516 = vsel %vm1101, %v1490, 0
        %v1519 = vsel %vm1101, %v1491, 0
        %1521 = vmatprep.subr.bf16.mxu0 0
        %1522 = vmatpush1.bf16.msra.mxu0 %v1505
        %1523 = vmatprep.subr.bf16.mxu0 0
        %1524 = vmatpush1.bf16.msra.mxu0 %v1506
        %1525 = vmatprep.subr.bf16.mxu0 0
        %1526 = vmatpush1.bf16.msra.mxu0 0
        %1527 = vmatprep.subr.bf16.mxu0 0
        %1528 = vmatpush1.bf16.msra.mxu0 0
        %1529 = vmatprep.subr.bf16.mxu0 0
        %1530 = vmatpush1.bf16.msra.mxu0 0
        %1531 = vmatprep.subr.bf16.mxu0 0
        %1532 = vmatpush1.bf16.msra.mxu0 0
        %1533 = vmatprep.subr.bf16.mxu0 0
        %1534 = vmatpush1.bf16.msra.mxu0 0
        %1535 = vmatprep.subr.bf16.mxu0 0
        %1536 = vmatpush1.bf16.msra.mxu0 0
        %1537 = vmatprep.subr.bf16.mxu0 0
        %1538 = vmatpush1.bf16.msra.mxu0 0
        %1539 = vmatprep.subr.bf16.mxu0 0
        %1540 = vmatpush1.bf16.msra.mxu0 0
        %1541 = vmatprep.subr.bf16.mxu0 0
        %1542 = vmatpush1.bf16.msra.mxu0 0
        %1543 = vmatprep.subr.bf16.mxu0 0
        %1544 = vmatpush1.bf16.msra.mxu0 0
        %1545 = vmatprep.subr.bf16.mxu0 0
        %1546 = vmatpush1.bf16.msra.mxu0 0
        %1547 = vmatprep.subr.bf16.mxu0 0
        %1548 = vmatpush1.bf16.msra.mxu0 0
        %1549 = vmatprep.subr.bf16.mxu0 0
        %1550 = vmatpush1.bf16.msra.mxu0 0
        %1551 = vmatprep.subr.bf16.mxu0 0
        %1552 = vmatpush1.bf16.msra.mxu0 0
        %1553 = vmatprep.mubr.bf16.mxu0 0
        %1554 = vmatmul.mubr.bf16.gmra.mrb[0].mxu0 %v1510
        %v1555 = vpop.f32.mrb[0].mxu0
        %v1556 = vadd.f32 0.0, %v1555
        %v1557 = vpop.f32.mrb[0].mxu0
        %v1558 = vpop.f32.mrb[0].mxu0
        %v1559 = vadd.f32 0.0, %v1558
        %v1560 = vpop.f32.mrb[0].mxu0
        %1561 = vmatprep.mubr.bf16.mxu0 0
        %1562 = vmatmul.mubr.bf16.gmra.mrb[0].mxu0 %v1513
        %v1563 = vpop.f32.mrb[0].mxu0
        %v1564 = vadd.f32 0.0, %v1563
        %v1565 = vpop.f32.mrb[0].mxu0
        %v1566 = vpop.f32.mrb[0].mxu0
        %v1567 = vadd.f32 0.0, %v1566
        %v1568 = vpop.f32.mrb[0].mxu0
        %1569 = vmatprep.mubr.bf16.mxu0 0
        %1570 = vmatmul.mubr.bf16.gmra.mrb[0].mxu0 %v1516
        %v1571 = vpop.f32.mrb[0].mxu0
        %v1572 = vadd.f32 0.0, %v1571
        %v1573 = vpop.f32.mrb[0].mxu0
        %v1574 = vpop.f32.mrb[0].mxu0
        %v1575 = vadd.f32 0.0, %v1574
        %v1576 = vpop.f32.mrb[0].mxu0
        %1577 = vmatprep.mubr.bf16.mxu0 0
        %1578 = vmatmul.mubr.bf16.gmra.mrb[0].mxu0 %v1519
        %v1579 = vpop.f32.mrb[0].mxu0
        %v1580 = vadd.f32 0.0, %v1579
        %v1581 = vpop.f32.mrb[0].mxu0
        %v1582 = vpop.f32.mrb[0].mxu0
        %v1583 = vadd.f32 0.0, %v1582
        %v1584 = vpop.f32.mrb[0].mxu0
        %1585 = vdwg.mxu0
        %v1586 = vadd.f32 %v1417, %v1556
        %v1587 = vadd.f32 %v1420, %v1559
        %v1588 = vadd.f32 %v1425, %v1564
        %v1589 = vadd.f32 %v1428, %v1567
        %v1590 = vadd.f32 %v1433, %v1572
        %v1591 = vadd.f32 %v1436, %v1575
        %v1592 = vadd.f32 %v1441, %v1580
        %v1593 = vadd.f32 %v1444, %v1583
        %v1596 = vrot.slane %v1197, 7
        %v1597 = vrot.slane %v1198, 7
        %v1598 = vsel %vm1219, %v1596, %v1597
        %v1600 = vpack.c.bf16 %v1228, %v1225
        %v1601 = vpack.c.bf16 %v1234, %v1231
        %v1602 = vpack.c.bf16 %v1240, %v1237
        %v1603 = vpack.c.bf16 %v1598, %v1243
        %s1604 = scalar_lea.vmem [#allocation10], 48
        %v1605 = vld [vmem:[%s1604] sm:$0xf]
        %v1606 = vld [vmem:[%s1604 + $0x4] sm:$0xf]
        %v1607 = vld [vmem:[%s1604 + $0x8] sm:$0xf]
        %v1608 = vld [vmem:[%s1604 + $0xc] sm:$0xf]
        %v1613 = vunpack.c.l.b16 %v1605
        %v1614 = vunpack.c.l.b16 %v1606
        %v1615 = vunpack.c.l.b16 %v1607
        %v1616 = vunpack.c.l.b16 %v1608
        %v1617 = vpack.c.b16 %v1614, %v1613
        %v1618 = vpack.c.b16 %v1616, %v1615
        %v1622 = vsel %vm1101, %v1600, 0
        %v1625 = vsel %vm1101, %v1601, 0
        %v1628 = vsel %vm1101, %v1602, 0
        %v1631 = vsel %vm1101, %v1603, 0
        %1633 = vmatprep.subr.bf16.mxu0 0
        %1634 = vmatpush1.bf16.msra.mxu0 %v1617
        %1635 = vmatprep.subr.bf16.mxu0 0
        %1636 = vmatpush1.bf16.msra.mxu0 %v1618
        %1637 = vmatprep.subr.bf16.mxu0 0
        %1638 = vmatpush1.bf16.msra.mxu0 0
        %1639 = vmatprep.subr.bf16.mxu0 0
        %1640 = vmatpush1.bf16.msra.mxu0 0
        %1641 = vmatprep.subr.bf16.mxu0 0
        %1642 = vmatpush1.bf16.msra.mxu0 0
        %1643 = vmatprep.subr.bf16.mxu0 0
        %1644 = vmatpush1.bf16.msra.mxu0 0
        %1645 = vmatprep.subr.bf16.mxu0 0
        %1646 = vmatpush1.bf16.msra.mxu0 0
        %1647 = vmatprep.subr.bf16.mxu0 0
        %1648 = vmatpush1.bf16.msra.mxu0 0
        %1649 = vmatprep.subr.bf16.mxu0 0
        %1650 = vmatpush1.bf16.msra.mxu0 0
        %1651 = vmatprep.subr.bf16.mxu0 0
        %1652 = vmatpush1.bf16.msra.mxu0 0
        %1653 = vmatprep.subr.bf16.mxu0 0
        %1654 = vmatpush1.bf16.msra.mxu0 0
        %1655 = vmatprep.subr.bf16.mxu0 0
        %1656 = vmatpush1.bf16.msra.mxu0 0
        %1657 = vmatprep.subr.bf16.mxu0 0
        %1658 = vmatpush1.bf16.msra.mxu0 0
        %1659 = vmatprep.subr.bf16.mxu0 0
        %1660 = vmatpush1.bf16.msra.mxu0 0
        %1661 = vmatprep.subr.bf16.mxu0 0
        %1662 = vmatpush1.bf16.msra.mxu0 0
        %1663 = vmatprep.subr.bf16.mxu0 0
        %1664 = vmatpush1.bf16.msra.mxu0 0
        %1665 = vmatprep.mubr.bf16.mxu0 0
        %1666 = vmatmul.mubr.bf16.gmra.mrb[0].mxu0 %v1622
        %v1667 = vpop.f32.mrb[0].mxu0
        %v1668 = vadd.f32 0.0, %v1667
        %v1669 = vpop.f32.mrb[0].mxu0
        %v1670 = vpop.f32.mrb[0].mxu0
        %v1671 = vadd.f32 0.0, %v1670
        %v1672 = vpop.f32.mrb[0].mxu0
        %1673 = vmatprep.mubr.bf16.mxu0 0
        %1674 = vmatmul.mubr.bf16.gmra.mrb[0].mxu0 %v1625
        %v1675 = vpop.f32.mrb[0].mxu0
        %v1676 = vadd.f32 0.0, %v1675
        %v1677 = vpop.f32.mrb[0].mxu0
        %v1678 = vpop.f32.mrb[0].mxu0
        %v1679 = vadd.f32 0.0, %v1678
        %v1680 = vpop.f32.mrb[0].mxu0
        %1681 = vmatprep.mubr.bf16.mxu0 0
        %1682 = vmatmul.mubr.bf16.gmra.mrb[0].mxu0 %v1628
        %v1683 = vpop.f32.mrb[0].mxu0
        %v1684 = vadd.f32 0.0, %v1683
        %v1685 = vpop.f32.mrb[0].mxu0
        %v1686 = vpop.f32.mrb[0].mxu0
        %v1687 = vadd.f32 0.0, %v1686
        %v1688 = vpop.f32.mrb[0].mxu0
        %1689 = vmatprep.mubr.bf16.mxu0 0
        %1690 = vmatmul.mubr.bf16.gmra.mrb[0].mxu0 %v1631
        %v1691 = vpop.f32.mrb[0].mxu0
        %v1692 = vadd.f32 0.0, %v1691
        %v1693 = vpop.f32.mrb[0].mxu0
        %v1694 = vpop.f32.mrb[0].mxu0
        %v1695 = vadd.f32 0.0, %v1694
        %v1696 = vpop.f32.mrb[0].mxu0
        %1697 = vdwg.mxu0
        %v1698 = vadd.f32 %v1586, %v1668
        %v1699 = vadd.f32 %v1587, %v1671
        %v1700 = vadd.f32 %v1588, %v1676
        %v1701 = vadd.f32 %v1589, %v1679
        %v1702 = vadd.f32 %v1590, %v1684
        %v1703 = vadd.f32 %v1591, %v1687
        %v1704 = vadd.f32 %v1592, %v1692
        %v1705 = vadd.f32 %v1593, %v1695
        %v1706 = vpack.c.bf16 %v1180, %v1177
        %v1707 = vpack.c.bf16 %v1186, %v1183
        %v1708 = vpack.c.bf16 %v1192, %v1189
        %v1709 = vpack.c.bf16 %v1198, %v1195
        %s1710 = scalar_lea.vmem [#allocation10], 64
        %v1711 = vld [vmem:[%s1710] sm:$0xf]
        %v1712 = vld [vmem:[%s1710 + $0x4] sm:$0xf]
        %v1713 = vld [vmem:[%s1710 + $0x8] sm:$0xf]
        %v1714 = vld [vmem:[%s1710 + $0xc] sm:$0xf]
        %v1719 = vunpack.c.l.b16 %v1711
        %v1720 = vunpack.c.l.b16 %v1712
        %v1721 = vunpack.c.l.b16 %v1713
        %v1722 = vunpack.c.l.b16 %v1714
        %v1723 = vpack.c.b16 %v1720, %v1719
        %v1724 = vpack.c.b16 %v1722, %v1721
        %v1728 = vsel %vm1101, %v1706, 0
        %v1731 = vsel %vm1101, %v1707, 0
        %v1734 = vsel %vm1101, %v1708, 0
        %v1737 = vsel %vm1101, %v1709, 0
        %1739 = vmatprep.subr.bf16.mxu0 0
        %1740 = vmatpush1.bf16.msra.mxu0 %v1723
        %1741 = vmatprep.subr.bf16.mxu0 0
        %1742 = vmatpush1.bf16.msra.mxu0 %v1724
        %1743 = vmatprep.subr.bf16.mxu0 0
        %1744 = vmatpush1.bf16.msra.mxu0 0
        %1745 = vmatprep.subr.bf16.mxu0 0
        %1746 = vmatpush1.bf16.msra.mxu0 0
        %1747 = vmatprep.subr.bf16.mxu0 0
        %1748 = vmatpush1.bf16.msra.mxu0 0
        %1749 = vmatprep.subr.bf16.mxu0 0
        %1750 = vmatpush1.bf16.msra.mxu0 0
        %1751 = vmatprep.subr.bf16.mxu0 0
        %1752 = vmatpush1.bf16.msra.mxu0 0
        %1753 = vmatprep.subr.bf16.mxu0 0
        %1754 = vmatpush1.bf16.msra.mxu0 0
        %1755 = vmatprep.subr.bf16.mxu0 0
        %1756 = vmatpush1.bf16.msra.mxu0 0
        %1757 = vmatprep.subr.bf16.mxu0 0
        %1758 = vmatpush1.bf16.msra.mxu0 0
        %1759 = vmatprep.subr.bf16.mxu0 0
        %1760 = vmatpush1.bf16.msra.mxu0 0
        %1761 = vmatprep.subr.bf16.mxu0 0
        %1762 = vmatpush1.bf16.msra.mxu0 0
        %1763 = vmatprep.subr.bf16.mxu0 0
        %1764 = vmatpush1.bf16.msra.mxu0 0
        %1765 = vmatprep.subr.bf16.mxu0 0
        %1766 = vmatpush1.bf16.msra.mxu0 0
        %1767 = vmatprep.subr.bf16.mxu0 0
        %1768 = vmatpush1.bf16.msra.mxu0 0
        %1769 = vmatprep.subr.bf16.mxu0 0
        %1770 = vmatpush1.bf16.msra.mxu0 0
        %1771 = vmatprep.mubr.bf16.mxu0 0
        %1772 = vmatmul.mubr.bf16.gmra.mrb[0].mxu0 %v1728
        %v1773 = vpop.f32.mrb[0].mxu0
        %v1774 = vadd.f32 0.0, %v1773
        %v1775 = vpop.f32.mrb[0].mxu0
        %v1776 = vpop.f32.mrb[0].mxu0
        %v1777 = vadd.f32 0.0, %v1776
        %v1778 = vpop.f32.mrb[0].mxu0
        %1779 = vmatprep.mubr.bf16.mxu0 0
        %1780 = vmatmul.mubr.bf16.gmra.mrb[0].mxu0 %v1731
        %v1781 = vpop.f32.mrb[0].mxu0
        %v1782 = vadd.f32 0.0, %v1781
        %v1783 = vpop.f32.mrb[0].mxu0
        %v1784 = vpop.f32.mrb[0].mxu0
        %v1785 = vadd.f32 0.0, %v1784
        %v1786 = vpop.f32.mrb[0].mxu0
        %1787 = vmatprep.mubr.bf16.mxu0 0
        %1788 = vmatmul.mubr.bf16.gmra.mrb[0].mxu0 %v1734
        %v1789 = vpop.f32.mrb[0].mxu0
        %v1790 = vadd.f32 0.0, %v1789
        %v1791 = vpop.f32.mrb[0].mxu0
        %v1792 = vpop.f32.mrb[0].mxu0
        %v1793 = vadd.f32 0.0, %v1792
        %v1794 = vpop.f32.mrb[0].mxu0
        %1795 = vmatprep.mubr.bf16.mxu0 0
        %1796 = vmatmul.mubr.bf16.gmra.mrb[0].mxu0 %v1737
        %v1797 = vpop.f32.mrb[0].mxu0
        %v1798 = vadd.f32 0.0, %v1797
        %v1799 = vpop.f32.mrb[0].mxu0
        %v1800 = vpop.f32.mrb[0].mxu0
        %v1801 = vadd.f32 0.0, %v1800
        %v1802 = vpop.f32.mrb[0].mxu0
        %1803 = vdwg.mxu0
        %v1804 = vadd.f32 %v1698, %v1774
        %v1805 = vadd.f32 %v1699, %v1777
        %v1806 = vadd.f32 %v1700, %v1782
        %v1807 = vadd.f32 %v1701, %v1785
        %v1808 = vadd.f32 %v1702, %v1790
        %v1809 = vadd.f32 %v1703, %v1793
        %v1810 = vadd.f32 %v1704, %v1798
        %v1811 = vadd.f32 %v1705, %v1801
        %v1813 = vrot.slane %v1198, 1
        %v1814 = vrot.slane %v1199, 1
        %v1815 = vsel %vm1455, %v1813, %v1814
        %v1817 = vpack.c.bf16 %v1464, %v1461
        %v1818 = vpack.c.bf16 %v1470, %v1467
        %v1819 = vpack.c.bf16 %v1476, %v1473
        %v1820 = vpack.c.bf16 %v1815, %v1479
        %s1821 = scalar_lea.vmem [#allocation10], 80
        %v1822 = vld [vmem:[%s1821] sm:$0xf]
        %v1823 = vld [vmem:[%s1821 + $0x4] sm:$0xf]
        %v1824 = vld [vmem:[%s1821 + $0x8] sm:$0xf]
        %v1825 = vld [vmem:[%s1821 + $0xc] sm:$0xf]
        %v1830 = vunpack.c.l.b16 %v1822
        %v1831 = vunpack.c.l.b16 %v1823
        %v1832 = vunpack.c.l.b16 %v1824
        %v1833 = vunpack.c.l.b16 %v1825
        %v1834 = vpack.c.b16 %v1831, %v1830
        %v1835 = vpack.c.b16 %v1833, %v1832
        %v1839 = vsel %vm1101, %v1817, 0
        %v1842 = vsel %vm1101, %v1818, 0
        %v1845 = vsel %vm1101, %v1819, 0
        %v1848 = vsel %vm1101, %v1820, 0
        %1850 = vmatprep.subr.bf16.mxu0 0
        %1851 = vmatpush1.bf16.msra.mxu0 %v1834
        %1852 = vmatprep.subr.bf16.mxu0 0
        %1853 = vmatpush1.bf16.msra.mxu0 %v1835
        %1854 = vmatprep.subr.bf16.mxu0 0
        %1855 = vmatpush1.bf16.msra.mxu0 0
        %1856 = vmatprep.subr.bf16.mxu0 0
        %1857 = vmatpush1.bf16.msra.mxu0 0
        %1858 = vmatprep.subr.bf16.mxu0 0
        %1859 = vmatpush1.bf16.msra.mxu0 0
        %1860 = vmatprep.subr.bf16.mxu0 0
        %1861 = vmatpush1.bf16.msra.mxu0 0
        %1862 = vmatprep.subr.bf16.mxu0 0
        %1863 = vmatpush1.bf16.msra.mxu0 0
        %1864 = vmatprep.subr.bf16.mxu0 0
        %1865 = vmatpush1.bf16.msra.mxu0 0
        %1866 = vmatprep.subr.bf16.mxu0 0
        %1867 = vmatpush1.bf16.msra.mxu0 0
        %1868 = vmatprep.subr.bf16.mxu0 0
        %1869 = vmatpush1.bf16.msra.mxu0 0
        %1870 = vmatprep.subr.bf16.mxu0 0
        %1871 = vmatpush1.bf16.msra.mxu0 0
        %1872 = vmatprep.subr.bf16.mxu0 0
        %1873 = vmatpush1.bf16.msra.mxu0 0
        %1874 = vmatprep.subr.bf16.mxu0 0
        %1875 = vmatpush1.bf16.msra.mxu0 0
        %1876 = vmatprep.subr.bf16.mxu0 0
        %1877 = vmatpush1.bf16.msra.mxu0 0
        %1878 = vmatprep.subr.bf16.mxu0 0
        %1879 = vmatpush1.bf16.msra.mxu0 0
        %1880 = vmatprep.subr.bf16.mxu0 0
        %1881 = vmatpush1.bf16.msra.mxu0 0
        %1882 = vmatprep.mubr.bf16.mxu0 0
        %1883 = vmatmul.mubr.bf16.gmra.mrb[0].mxu0 %v1839
        %v1884 = vpop.f32.mrb[0].mxu0
        %v1885 = vadd.f32 0.0, %v1884
        %v1886 = vpop.f32.mrb[0].mxu0
        %v1887 = vpop.f32.mrb[0].mxu0
        %v1888 = vadd.f32 0.0, %v1887
        %v1889 = vpop.f32.mrb[0].mxu0
        %1890 = vmatprep.mubr.bf16.mxu0 0
        %1891 = vmatmul.mubr.bf16.gmra.mrb[0].mxu0 %v1842
        %v1892 = vpop.f32.mrb[0].mxu0
        %v1893 = vadd.f32 0.0, %v1892
        %v1894 = vpop.f32.mrb[0].mxu0
        %v1895 = vpop.f32.mrb[0].mxu0
        %v1896 = vadd.f32 0.0, %v1895
        %v1897 = vpop.f32.mrb[0].mxu0
        %1898 = vmatprep.mubr.bf16.mxu0 0
        %1899 = vmatmul.mubr.bf16.gmra.mrb[0].mxu0 %v1845
        %v1900 = vpop.f32.mrb[0].mxu0
        %v1901 = vadd.f32 0.0, %v1900
        %v1902 = vpop.f32.mrb[0].mxu0
        %v1903 = vpop.f32.mrb[0].mxu0
        %v1904 = vadd.f32 0.0, %v1903
        %v1905 = vpop.f32.mrb[0].mxu0
        %1906 = vmatprep.mubr.bf16.mxu0 0
        %1907 = vmatmul.mubr.bf16.gmra.mrb[0].mxu0 %v1848
        %v1908 = vpop.f32.mrb[0].mxu0
        %v1909 = vadd.f32 0.0, %v1908
        %v1910 = vpop.f32.mrb[0].mxu0
        %v1911 = vpop.f32.mrb[0].mxu0
        %v1912 = vadd.f32 0.0, %v1911
        %v1913 = vpop.f32.mrb[0].mxu0
        %1914 = vdwg.mxu0
        %v1915 = vadd.f32 %v1804, %v1885
        %v1916 = vadd.f32 %v1805, %v1888
        %v1917 = vadd.f32 %v1806, %v1893
        %v1918 = vadd.f32 %v1807, %v1896
        %v1919 = vadd.f32 %v1808, %v1901
        %v1920 = vadd.f32 %v1809, %v1904
        %v1921 = vadd.f32 %v1810, %v1909
        %v1922 = vadd.f32 %v1811, %v1912
        %v1925 = vrot.slane %v1200, 7
        %v1926 = vrot.slane %v1201, 7
        %v1927 = vsel %vm1219, %v1925, %v1926
        %v1929 = vpack.c.bf16 %v1927, %v1598
        %s1930 = scalar_lea.vmem [#allocation10], 96
        %v1931 = vld [vmem:[%s1930] sm:$0xf]
        %v1932 = vld [vmem:[%s1930 + $0x4] sm:$0xf]
        %v1933 = vld [vmem:[%s1930 + $0x8] sm:$0xf]
        %v1934 = vld [vmem:[%s1930 + $0xc] sm:$0xf]
        %v1939 = vunpack.c.l.b16 %v1931
        %v1940 = vunpack.c.l.b16 %v1932
        %v1941 = vunpack.c.l.b16 %v1933
        %v1942 = vunpack.c.l.b16 %v1934
        %v1943 = vpack.c.b16 %v1940, %v1939
        %v1944 = vpack.c.b16 %v1942, %v1941
        %v1948 = vsel %vm1101, %v1929, 0
        %1950 = vmatprep.subr.bf16.mxu0 0
        %1951 = vmatpush1.bf16.msra.mxu0 %v1943
        %1952 = vmatprep.subr.bf16.mxu0 0
        %1953 = vmatpush1.bf16.msra.mxu0 %v1944
        %1954 = vmatprep.subr.bf16.mxu0 0
        %1955 = vmatpush1.bf16.msra.mxu0 0
        %1956 = vmatprep.subr.bf16.mxu0 0
        %1957 = vmatpush1.bf16.msra.mxu0 0
        %1958 = vmatprep.subr.bf16.mxu0 0
        %1959 = vmatpush1.bf16.msra.mxu0 0
        %1960 = vmatprep.subr.bf16.mxu0 0
        %1961 = vmatpush1.bf16.msra.mxu0 0
        %1962 = vmatprep.subr.bf16.mxu0 0
        %1963 = vmatpush1.bf16.msra.mxu0 0
        %1964 = vmatprep.subr.bf16.mxu0 0
        %1965 = vmatpush1.bf16.msra.mxu0 0
        %1966 = vmatprep.subr.bf16.mxu0 0
        %1967 = vmatpush1.bf16.msra.mxu0 0
        %1968 = vmatprep.subr.bf16.mxu0 0
        %1969 = vmatpush1.bf16.msra.mxu0 0
        %1970 = vmatprep.subr.bf16.mxu0 0
        %1971 = vmatpush1.bf16.msra.mxu0 0
        %1972 = vmatprep.subr.bf16.mxu0 0
        %1973 = vmatpush1.bf16.msra.mxu0 0
        %1974 = vmatprep.subr.bf16.mxu0 0
        %1975 = vmatpush1.bf16.msra.mxu0 0
        %1976 = vmatprep.subr.bf16.mxu0 0
        %1977 = vmatpush1.bf16.msra.mxu0 0
        %1978 = vmatprep.subr.bf16.mxu0 0
        %1979 = vmatpush1.bf16.msra.mxu0 0
        %1980 = vmatprep.subr.bf16.mxu0 0
        %1981 = vmatpush1.bf16.msra.mxu0 0
        %1982 = vmatprep.mubr.bf16.mxu0 0
        %1983 = vmatmul.mubr.bf16.gmra.mrb[0].mxu0 %v1374
        %v1984 = vpop.f32.mrb[0].mxu0
        %v1985 = vadd.f32 0.0, %v1984
        %v1986 = vpop.f32.mrb[0].mxu0
        %v1987 = vpop.f32.mrb[0].mxu0
        %v1988 = vadd.f32 0.0, %v1987
        %v1989 = vpop.f32.mrb[0].mxu0
        %1990 = vmatprep.mubr.bf16.mxu0 0
        %1991 = vmatmul.mubr.bf16.gmra.mrb[0].mxu0 %v1377
        %v1992 = vpop.f32.mrb[0].mxu0
        %v1993 = vadd.f32 0.0, %v1992
        %v1994 = vpop.f32.mrb[0].mxu0
        %v1995 = vpop.f32.mrb[0].mxu0
        %v1996 = vadd.f32 0.0, %v1995
        %v1997 = vpop.f32.mrb[0].mxu0
        %1998 = vmatprep.mubr.bf16.mxu0 0
        %1999 = vmatmul.mubr.bf16.gmra.mrb[0].mxu0 %v1380
        %v2000 = vpop.f32.mrb[0].mxu0
        %v2001 = vadd.f32 0.0, %v2000
        %v2002 = vpop.f32.mrb[0].mxu0
        %v2003 = vpop.f32.mrb[0].mxu0
        %v2004 = vadd.f32 0.0, %v2003
        %v2005 = vpop.f32.mrb[0].mxu0
        %2006 = vmatprep.mubr.bf16.mxu0 0
        %2007 = vmatmul.mubr.bf16.gmra.mrb[0].mxu0 %v1948
        %v2008 = vpop.f32.mrb[0].mxu0
        %v2009 = vadd.f32 0.0, %v2008
        %v2010 = vpop.f32.mrb[0].mxu0
        %v2011 = vpop.f32.mrb[0].mxu0
        %v2012 = vadd.f32 0.0, %v2011
        %v2013 = vpop.f32.mrb[0].mxu0
        %2014 = vdwg.mxu0
        %v2015 = vadd.f32 %v1915, %v1985
        %v2016 = vadd.f32 %v1916, %v1988
        %v2017 = vadd.f32 %v1917, %v1993
        %v2018 = vadd.f32 %v1918, %v1996
        %v2019 = vadd.f32 %v1919, %v2001
        %v2020 = vadd.f32 %v1920, %v2004
        %v2021 = vadd.f32 %v1921, %v2009
        %v2022 = vadd.f32 %v1922, %v2012
        %v2023 = vpack.c.bf16 %v1201, %v1198
        %s2024 = scalar_lea.vmem [#allocation10], 112
        %v2025 = vld [vmem:[%s2024] sm:$0xf]
        %v2026 = vld [vmem:[%s2024 + $0x4] sm:$0xf]
        %v2027 = vld [vmem:[%s2024 + $0x8] sm:$0xf]
        %v2028 = vld [vmem:[%s2024 + $0xc] sm:$0xf]
        %v2033 = vunpack.c.l.b16 %v2025
        %v2034 = vunpack.c.l.b16 %v2026
        %v2035 = vunpack.c.l.b16 %v2027
        %v2036 = vunpack.c.l.b16 %v2028
        %v2037 = vpack.c.b16 %v2034, %v2033
        %v2038 = vpack.c.b16 %v2036, %v2035
        %v2042 = vsel %vm1101, %v2023, 0
        %2044 = vmatprep.subr.bf16.mxu0 0
        %2045 = vmatpush1.bf16.msra.mxu0 %v2037
        %2046 = vmatprep.subr.bf16.mxu0 0
        %2047 = vmatpush1.bf16.msra.mxu0 %v2038
        %2048 = vmatprep.subr.bf16.mxu0 0
        %2049 = vmatpush1.bf16.msra.mxu0 0
        %2050 = vmatprep.subr.bf16.mxu0 0
        %2051 = vmatpush1.bf16.msra.mxu0 0
        %2052 = vmatprep.subr.bf16.mxu0 0
        %2053 = vmatpush1.bf16.msra.mxu0 0
        %2054 = vmatprep.subr.bf16.mxu0 0
        %2055 = vmatpush1.bf16.msra.mxu0 0
        %2056 = vmatprep.subr.bf16.mxu0 0
        %2057 = vmatpush1.bf16.msra.mxu0 0
        %2058 = vmatprep.subr.bf16.mxu0 0
        %2059 = vmatpush1.bf16.msra.mxu0 0
        %2060 = vmatprep.subr.bf16.mxu0 0
        %2061 = vmatpush1.bf16.msra.mxu0 0
        %2062 = vmatprep.subr.bf16.mxu0 0
        %2063 = vmatpush1.bf16.msra.mxu0 0
        %2064 = vmatprep.subr.bf16.mxu0 0
        %2065 = vmatpush1.bf16.msra.mxu0 0
        %2066 = vmatprep.subr.bf16.mxu0 0
        %2067 = vmatpush1.bf16.msra.mxu0 0
        %2068 = vmatprep.subr.bf16.mxu0 0
        %2069 = vmatpush1.bf16.msra.mxu0 0
        %2070 = vmatprep.subr.bf16.mxu0 0
        %2071 = vmatpush1.bf16.msra.mxu0 0
        %2072 = vmatprep.subr.bf16.mxu0 0
        %2073 = vmatpush1.bf16.msra.mxu0 0
        %2074 = vmatprep.subr.bf16.mxu0 0
        %2075 = vmatpush1.bf16.msra.mxu0 0
        %2076 = vmatprep.mubr.bf16.mxu0 0
        %2077 = vmatmul.mubr.bf16.gmra.mrb[0].mxu0 %v1285
        %v2078 = vpop.f32.mrb[0].mxu0
        %v2079 = vadd.f32 0.0, %v2078
        %v2080 = vpop.f32.mrb[0].mxu0
        %v2081 = vpop.f32.mrb[0].mxu0
        %v2082 = vadd.f32 0.0, %v2081
        %v2083 = vpop.f32.mrb[0].mxu0
        %2084 = vmatprep.mubr.bf16.mxu0 0
        %2085 = vmatmul.mubr.bf16.gmra.mrb[0].mxu0 %v1288
        %v2086 = vpop.f32.mrb[0].mxu0
        %v2087 = vadd.f32 0.0, %v2086
        %v2088 = vpop.f32.mrb[0].mxu0
        %v2089 = vpop.f32.mrb[0].mxu0
        %v2090 = vadd.f32 0.0, %v2089
        %v2091 = vpop.f32.mrb[0].mxu0
        %2092 = vmatprep.mubr.bf16.mxu0 0
        %2093 = vmatmul.mubr.bf16.gmra.mrb[0].mxu0 %v1291
        %v2094 = vpop.f32.mrb[0].mxu0
        %v2095 = vadd.f32 0.0, %v2094
        %v2096 = vpop.f32.mrb[0].mxu0
        %v2097 = vpop.f32.mrb[0].mxu0
        %v2098 = vadd.f32 0.0, %v2097
        %v2099 = vpop.f32.mrb[0].mxu0
        %2100 = vmatprep.mubr.bf16.mxu0 0
        %2101 = vmatmul.mubr.bf16.gmra.mrb[0].mxu0 %v2042
        %v2102 = vpop.f32.mrb[0].mxu0
        %v2103 = vadd.f32 0.0, %v2102
        %v2104 = vpop.f32.mrb[0].mxu0
        %v2105 = vpop.f32.mrb[0].mxu0
        %v2106 = vadd.f32 0.0, %v2105
        %v2107 = vpop.f32.mrb[0].mxu0
        %2108 = vdwg.mxu0
        %v2109 = vadd.f32 %v2015, %v2079
        %v2110 = vadd.f32 %v2016, %v2082
        %v2111 = vadd.f32 %v2017, %v2087
        %v2112 = vadd.f32 %v2018, %v2090
        %v2113 = vadd.f32 %v2019, %v2095
        %v2114 = vadd.f32 %v2020, %v2098
        %v2115 = vadd.f32 %v2021, %v2103
        %v2116 = vadd.f32 %v2022, %v2106
        %v2118 = vrot.slane %v1201, 1
        %v2119 = vrot.slane %v1202, 1
        %v2120 = vsel %vm1455, %v2118, %v2119
        %v2122 = vpack.c.bf16 %v2120, %v1815
        %s2123 = scalar_lea.vmem [#allocation10], 128
        %v2124 = vld [vmem:[%s2123] sm:$0xf]
        %v2125 = vld [vmem:[%s2123 + $0x4] sm:$0xf]
        %v2126 = vld [vmem:[%s2123 + $0x8] sm:$0xf]
        %v2127 = vld [vmem:[%s2123 + $0xc] sm:$0xf]
        %v2132 = vunpack.c.l.b16 %v2124
        %v2133 = vunpack.c.l.b16 %v2125
        %v2134 = vunpack.c.l.b16 %v2126
        %v2135 = vunpack.c.l.b16 %v2127
        %v2136 = vpack.c.b16 %v2133, %v2132
        %v2137 = vpack.c.b16 %v2135, %v2134
        %v2141 = vsel %vm1101, %v2122, 0
        %2143 = vmatprep.subr.bf16.mxu0 0
        %2144 = vmatpush1.bf16.msra.mxu0 %v2136
        %2145 = vmatprep.subr.bf16.mxu0 0
        %2146 = vmatpush1.bf16.msra.mxu0 %v2137
        %2147 = vmatprep.subr.bf16.mxu0 0
        %2148 = vmatpush1.bf16.msra.mxu0 0
        %2149 = vmatprep.subr.bf16.mxu0 0
        %2150 = vmatpush1.bf16.msra.mxu0 0
        %2151 = vmatprep.subr.bf16.mxu0 0
        %2152 = vmatpush1.bf16.msra.mxu0 0
        %2153 = vmatprep.subr.bf16.mxu0 0
        %2154 = vmatpush1.bf16.msra.mxu0 0
        %2155 = vmatprep.subr.bf16.mxu0 0
        %2156 = vmatpush1.bf16.msra.mxu0 0
        %2157 = vmatprep.subr.bf16.mxu0 0
        %2158 = vmatpush1.bf16.msra.mxu0 0
        %2159 = vmatprep.subr.bf16.mxu0 0
        %2160 = vmatpush1.bf16.msra.mxu0 0
        %2161 = vmatprep.subr.bf16.mxu0 0
        %2162 = vmatpush1.bf16.msra.mxu0 0
        %2163 = vmatprep.subr.bf16.mxu0 0
        %2164 = vmatpush1.bf16.msra.mxu0 0
        %2165 = vmatprep.subr.bf16.mxu0 0
        %2166 = vmatpush1.bf16.msra.mxu0 0
        %2167 = vmatprep.subr.bf16.mxu0 0
        %2168 = vmatpush1.bf16.msra.mxu0 0
        %2169 = vmatprep.subr.bf16.mxu0 0
        %2170 = vmatpush1.bf16.msra.mxu0 0
        %2171 = vmatprep.subr.bf16.mxu0 0
        %2172 = vmatpush1.bf16.msra.mxu0 0
        %2173 = vmatprep.subr.bf16.mxu0 0
        %2174 = vmatpush1.bf16.msra.mxu0 0
        %2175 = vmatprep.mubr.bf16.mxu0 0
        %2176 = vmatmul.mubr.bf16.gmra.mrb[0].mxu0 %v1513
        %v2177 = vpop.f32.mrb[0].mxu0
        %v2178 = vadd.f32 0.0, %v2177
        %v2179 = vpop.f32.mrb[0].mxu0
        %v2180 = vpop.f32.mrb[0].mxu0
        %v2181 = vadd.f32 0.0, %v2180
        %v2182 = vpop.f32.mrb[0].mxu0
        %2183 = vmatprep.mubr.bf16.mxu0 0
        %2184 = vmatmul.mubr.bf16.gmra.mrb[0].mxu0 %v1516
        %v2185 = vpop.f32.mrb[0].mxu0
        %v2186 = vadd.f32 0.0, %v2185
        %v2187 = vpop.f32.mrb[0].mxu0
        %v2188 = vpop.f32.mrb[0].mxu0
        %v2189 = vadd.f32 0.0, %v2188
        %v2190 = vpop.f32.mrb[0].mxu0
        %2191 = vmatprep.mubr.bf16.mxu0 0
        %2192 = vmatmul.mubr.bf16.gmra.mrb[0].mxu0 %v1519
        %v2193 = vpop.f32.mrb[0].mxu0
        %v2194 = vadd.f32 0.0, %v2193
        %v2195 = vpop.f32.mrb[0].mxu0
        %v2196 = vpop.f32.mrb[0].mxu0
        %v2197 = vadd.f32 0.0, %v2196
        %v2198 = vpop.f32.mrb[0].mxu0
        %2199 = vmatprep.mubr.bf16.mxu0 0
        %2200 = vmatmul.mubr.bf16.gmra.mrb[0].mxu0 %v2141
        %v2201 = vpop.f32.mrb[0].mxu0
        %v2202 = vadd.f32 0.0, %v2201
        %v2203 = vpop.f32.mrb[0].mxu0
        %v2204 = vpop.f32.mrb[0].mxu0
        %v2205 = vadd.f32 0.0, %v2204
        %v2206 = vpop.f32.mrb[0].mxu0
        %2207 = vdwg.mxu0
        %v2208 = vadd.f32 %v2109, %v2178
        %v2209 = vadd.f32 %v2110, %v2181
        %v2210 = vadd.f32 %v2111, %v2186
        %v2211 = vadd.f32 %v2112, %v2189
        %v2212 = vadd.f32 %v2113, %v2194
        %v2213 = vadd.f32 %v2114, %v2197
        %v2214 = vadd.f32 %v2115, %v2202
        %v2215 = vadd.f32 %v2116, %v2205
        %v2216 = vld [vmem:[#allocation12] sm:$0x1]
        %v2218 = vlaneseq
        %v2219 = vshrl.u32 %v2218, 7
        %v2220 = vsub.s32 0, %v2219
        %v2221 = vrot.slane %v2216, %v2220
        %v2223 = vmul.f32 %v2208, %v2221
        %v2224 = vmul.f32 %v2209, %v2221
        %v2225 = vmul.f32 %v2210, %v2221
        %v2226 = vmul.f32 %v2211, %v2221
        %v2227 = vmul.f32 %v2212, %v2221
        %v2228 = vmul.f32 %v2213, %v2221
        %v2229 = vmul.f32 %v2214, %v2221
        %v2230 = vmul.f32 %v2215, %v2221
        %v2231 = vld [vmem:[#allocation13] sm:$0x1]
        %v2233 = vlaneseq
        %v2234 = vshrl.u32 %v2233, 7
        %v2235 = vsub.s32 0, %v2234
        %v2236 = vrot.slane %v2231, %v2235
        %v2238 = vadd.f32 %v2223, %v2236
        %v2239 = vadd.f32 %v2224, %v2236
        %v2240 = vadd.f32 %v2225, %v2236
        %v2241 = vadd.f32 %v2226, %v2236
        %v2242 = vadd.f32 %v2227, %v2236
        %v2243 = vadd.f32 %v2228, %v2236
        %v2244 = vadd.f32 %v2229, %v2236
        %v2245 = vadd.f32 %v2230, %v2236
        %v2246 = vmax.f32 %v2238, 0.0
        %v2247 = vmax.f32 %v2239, 0.0
        %v2248 = vmax.f32 %v2240, 0.0
        %v2249 = vmax.f32 %v2241, 0.0
        %v2250 = vmax.f32 %v2242, 0.0
        %v2251 = vmax.f32 %v2243, 0.0
        %v2252 = vmax.f32 %v2244, 0.0
        %v2253 = vmax.f32 %v2245, 0.0
        %2254 = vst.msk [vmem:[#allocation2] sm:$0xff] %vm1101, 0.0
        %2255 = vst.msk [vmem:[#allocation2 + $0x8] sm:$0xff] %vm1101, 0.0
        %2256 = vst.msk [vmem:[#allocation2 + $0x10] sm:$0xff] %vm1101, 0.0
        %2257 = vst.msk [vmem:[#allocation2 + $0x18] sm:$0xff] %vm1101, 0.0
        %2258 = vst.msk [vmem:[#allocation2 + $0x20] sm:$0xff] %vm1101, 0.0
        %2259 = vst.msk [vmem:[#allocation2 + $0x28] sm:$0xff] %vm1101, 0.0
        %2260 = vst.msk [vmem:[#allocation2 + $0x30] sm:$0xff] %vm1101, 0.0
        %2261 = vst.msk [vmem:[#allocation2 + $0x38] sm:$0xff] %vm1101, 0.0
        %2262 = vst.msk [vmem:[#allocation2 + $0x40] sm:$0xff] %vm1101, 0.0
        %2263 = vst.msk [vmem:[#allocation2 + $0x48] sm:$0xff] %vm1101, 0.0
        %2264 = vst.msk [vmem:[#allocation2 + $0x50] sm:$0xff] %vm1101, 0.0
        %2265 = vst.msk [vmem:[#allocation2 + $0x58] sm:$0xff] %vm1101, 0.0
        %2266 = vst.msk [vmem:[#allocation2 + $0x60] sm:$0xff] %vm1101, 0.0
        %2267 = vst.msk [vmem:[#allocation2 + $0x68] sm:$0xff] %vm1101, 0.0
        %2268 = vst.msk [vmem:[#allocation2 + $0x70] sm:$0xff] %vm1101, 0.0
        %2269 = vst.msk [vmem:[#allocation2 + $0x78] sm:$0xff] %vm1101, 0.0
        %2270 = vst.msk [vmem:[#allocation2 + $0x80] sm:$0xff] %vm1101, 0.0
        %2271 = vst.msk [vmem:[#allocation2 + $0x88] sm:$0xff] %vm1101, 0.0
        %2272 = vst.msk [vmem:[#allocation2 + $0x90] sm:$0xff] %vm1101, 0.0
        %2273 = vst.msk [vmem:[#allocation2 + $0x98] sm:$0xff] %vm1101, 0.0
        %2274 = vst.msk [vmem:[#allocation2 + $0xa0] sm:$0xff] %vm1101, 0.0
        %2275 = vst.msk [vmem:[#allocation2 + $0xa8] sm:$0xff] %vm1101, 0.0
        %2276 = vst.msk [vmem:[#allocation2 + $0xb0] sm:$0xff] %vm1101, 0.0
        %2277 = vst.msk [vmem:[#allocation2 + $0xb8] sm:$0xff] %vm1101, 0.0
        %2278 = vst.msk [vmem:[#allocation2 + $0xc0] sm:$0xff] %vm1101, 0.0
        %2279 = vst.msk [vmem:[#allocation2 + $0xc8] sm:$0xff] %vm1101, 0.0
        %2280 = vst.msk [vmem:[#allocation2 + $0xd0] sm:$0xff] %vm1101, 0.0
        %2281 = vst.msk [vmem:[#allocation2 + $0xd8] sm:$0xff] %vm1101, 0.0
        %2282 = vst.msk [vmem:[#allocation2 + $0xe0] sm:$0xff] %vm1101, 0.0
        %2283 = vst.msk [vmem:[#allocation2 + $0xe8] sm:$0xff] %vm1101, 0.0
        %2284 = vrot.lane.b32.xlu0 %v1093, 64
        %v2285 = vpop.permute.xlu0 %2284
        %2286 = vrot.lane.b32.xlu0 %v1094, 64
        %v2287 = vpop.permute.xlu0 %2286
        %2288 = vrot.lane.b32.xlu0 %v1095, 64
        %v2289 = vpop.permute.xlu0 %2288
        %2290 = vrot.lane.b32.xlu0 %v1096, 64
        %v2291 = vpop.permute.xlu0 %2290
        %2292 = vrot.lane.b32.xlu0 %v1097, 64
        %v2293 = vpop.permute.xlu0 %2292
        %2294 = vrot.lane.b32.xlu0 %v1098, 64
        %v2295 = vpop.permute.xlu0 %2294
        %2296 = vrot.lane.b32.xlu0 %v1099, 64
        %v2297 = vpop.permute.xlu0 %2296
        %2298 = vrot.lane.b32.xlu0 %v1100, 64
        %v2299 = vpop.permute.xlu0 %2298
        %2308 = vst.msk [vmem:[%s1164 + $0x8] sm:$0xff] %vm1101, %v2285
        %2309 = vst.msk [vmem:[%s1164 + $0x20] sm:$0xff] %vm1101, %v2287
        %2310 = vst.msk [vmem:[%s1164 + $0x38] sm:$0xff] %vm1101, %v2289
        %2311 = vst.msk [vmem:[%s1164 + $0x50] sm:$0xff] %vm1101, %v2291
        %2312 = vst.msk [vmem:[%s1164 + $0x68] sm:$0xff] %vm1101, %v2293
        %2313 = vst.msk [vmem:[%s1164 + $0x80] sm:$0xff] %vm1101, %v2295
        %2314 = vst.msk [vmem:[%s1164 + $0x98] sm:$0xff] %vm1101, %v2297
        %2315 = vst.msk [vmem:[%s1164 + $0xb0] sm:$0xff] %vm1101, %v2299
        %v2316 = vld [vmem:[#allocation2] sm:$0xff]
        %v2317 = vld [vmem:[#allocation2 + $0x8] sm:$0xff]
        %v2318 = vld [vmem:[#allocation2 + $0x10] sm:$0xff]
        %v2319 = vld [vmem:[#allocation2 + $0x18] sm:$0xff]
        %v2320 = vld [vmem:[#allocation2 + $0x20] sm:$0xff]
        %v2321 = vld [vmem:[#allocation2 + $0x28] sm:$0xff]
        %v2322 = vld [vmem:[#allocation2 + $0x30] sm:$0xff]
        %v2323 = vld [vmem:[#allocation2 + $0x38] sm:$0xff]
        %v2324 = vld [vmem:[#allocation2 + $0x40] sm:$0xff]
        %v2325 = vld [vmem:[#allocation2 + $0x48] sm:$0xff]
        %v2326 = vld [vmem:[#allocation2 + $0x50] sm:$0xff]
        %v2327 = vld [vmem:[#allocation2 + $0x58] sm:$0xff]
        %v2328 = vld [vmem:[#allocation2 + $0x60] sm:$0xff]
        %v2329 = vld [vmem:[#allocation2 + $0x68] sm:$0xff]
        %v2330 = vld [vmem:[#allocation2 + $0x70] sm:$0xff]
        %v2331 = vld [vmem:[#allocation2 + $0x78] sm:$0xff]
        %v2332 = vld [vmem:[#allocation2 + $0x80] sm:$0xff]
        %v2333 = vld [vmem:[#allocation2 + $0x88] sm:$0xff]
        %v2334 = vld [vmem:[#allocation2 + $0x90] sm:$0xff]
        %v2335 = vld [vmem:[#allocation2 + $0x98] sm:$0xff]
        %v2336 = vld [vmem:[#allocation2 + $0xa0] sm:$0xff]
        %v2337 = vld [vmem:[#allocation2 + $0xa8] sm:$0xff]
        %v2338 = vld [vmem:[#allocation2 + $0xb0] sm:$0xff]
        %v2339 = vld [vmem:[#allocation2 + $0xb8] sm:$0xff]
        %v2340 = vld [vmem:[#allocation2 + $0xc0] sm:$0xff]
        %v2341 = vld [vmem:[#allocation2 + $0xc8] sm:$0xff]
        %v2342 = vld [vmem:[#allocation2 + $0xd0] sm:$0xff]
        %v2343 = vld [vmem:[#allocation2 + $0xd8] sm:$0xff]
        %v2344 = vld [vmem:[#allocation2 + $0xe0] sm:$0xff]
        %v2345 = vld [vmem:[#allocation2 + $0xe8] sm:$0xff]
        %v2362 = vrot.slane %v2316, 7
        %v2363 = vrot.slane %v2317, 7
        %v2364 = vsel %vm1219, %v2362, %v2363
        %v2365 = vrot.slane %v2319, 7
        %v2366 = vrot.slane %v2320, 7
        %v2367 = vsel %vm1219, %v2365, %v2366
        %v2368 = vrot.slane %v2322, 7
        %v2369 = vrot.slane %v2323, 7
        %v2370 = vsel %vm1219, %v2368, %v2369
        %v2371 = vrot.slane %v2325, 7
        %v2372 = vrot.slane %v2326, 7
        %v2373 = vsel %vm1219, %v2371, %v2372
        %v2374 = vrot.slane %v2328, 7
        %v2375 = vrot.slane %v2329, 7
        %v2376 = vsel %vm1219, %v2374, %v2375
        %v2377 = vrot.slane %v2331, 7
        %v2378 = vrot.slane %v2332, 7
        %v2379 = vsel %vm1219, %v2377, %v2378
        %v2380 = vrot.slane %v2334, 7
        %v2381 = vrot.slane %v2335, 7
        %v2382 = vsel %vm1219, %v2380, %v2381
        %v2383 = vrot.slane %v2337, 7
        %v2384 = vrot.slane %v2338, 7
        %v2385 = vsel %vm1219, %v2383, %v2384
        %v2394 = vpack.c.bf16 %v2367, %v2364
        %v2395 = vpack.c.bf16 %v2373, %v2370
        %v2396 = vpack.c.bf16 %v2379, %v2376
        %v2397 = vpack.c.bf16 %v2385, %v2382
        %v2398 = vld [vmem:[#allocation15] sm:$0xf]
        %v2399 = vld [vmem:[#allocation15 + $0x4] sm:$0xf]
        %v2400 = vld [vmem:[#allocation15 + $0x8] sm:$0xf]
        %v2401 = vld [vmem:[#allocation15 + $0xc] sm:$0xf]
        %v2402 = vpack.c.bf16 %v2320, %v2317
        %v2403 = vpack.c.bf16 %v2326, %v2323
        %v2404 = vpack.c.bf16 %v2332, %v2329
        %v2405 = vpack.c.bf16 %v2338, %v2335
        %s2406 = scalar_lea.vmem [#allocation15], 16
        %v2407 = vld [vmem:[%s2406] sm:$0xf]
        %v2408 = vld [vmem:[%s2406 + $0x4] sm:$0xf]
        %v2409 = vld [vmem:[%s2406 + $0x8] sm:$0xf]
        %v2410 = vld [vmem:[%s2406 + $0xc] sm:$0xf]
        %v2415 = vunpack.c.l.b16 %v2407
        %v2416 = vunpack.c.l.b16 %v2408
        %v2417 = vunpack.c.l.b16 %v2409
        %v2418 = vunpack.c.l.b16 %v2410
        %v2419 = vpack.c.b16 %v2416, %v2415
        %v2420 = vpack.c.b16 %v2418, %v2417
        %v2424 = vsel %vm1101, %v2402, 0
        %v2427 = vsel %vm1101, %v2403, 0
        %v2430 = vsel %vm1101, %v2404, 0
        %v2433 = vsel %vm1101, %v2405, 0
        %2435 = vmatprep.subr.bf16.mxu0 0
        %2436 = vmatpush1.bf16.msra.mxu0 %v2419
        %2437 = vmatprep.subr.bf16.mxu0 0
        %2438 = vmatpush1.bf16.msra.mxu0 %v2420
        %2439 = vmatprep.subr.bf16.mxu0 0
        %2440 = vmatpush1.bf16.msra.mxu0 0
        %2441 = vmatprep.subr.bf16.mxu0 0
        %2442 = vmatpush1.bf16.msra.mxu0 0
        %2443 = vmatprep.subr.bf16.mxu0 0
        %2444 = vmatpush1.bf16.msra.mxu0 0
        %2445 = vmatprep.subr.bf16.mxu0 0
        %2446 = vmatpush1.bf16.msra.mxu0 0
        %2447 = vmatprep.subr.bf16.mxu0 0
        %2448 = vmatpush1.bf16.msra.mxu0 0
        %2449 = vmatprep.subr.bf16.mxu0 0
        %2450 = vmatpush1.bf16.msra.mxu0 0
        %2451 = vmatprep.subr.bf16.mxu0 0
        %2452 = vmatpush1.bf16.msra.mxu0 0
        %2453 = vmatprep.subr.bf16.mxu0 0
        %2454 = vmatpush1.bf16.msra.mxu0 0
        %2455 = vmatprep.subr.bf16.mxu0 0
        %2456 = vmatpush1.bf16.msra.mxu0 0
        %2457 = vmatprep.subr.bf16.mxu0 0
        %2458 = vmatpush1.bf16.msra.mxu0 0
        %2459 = vmatprep.subr.bf16.mxu0 0
        %2460 = vmatpush1.bf16.msra.mxu0 0
        %2461 = vmatprep.subr.bf16.mxu0 0
        %2462 = vmatpush1.bf16.msra.mxu0 0
        %2463 = vmatprep.subr.bf16.mxu0 0
        %2464 = vmatpush1.bf16.msra.mxu0 0
        %2465 = vmatprep.subr.bf16.mxu0 0
        %2466 = vmatpush1.bf16.msra.mxu0 0
        %2467 = vmatprep.mubr.bf16.mxu0 0
        %2468 = vmatmul.mubr.bf16.gmra.mrb[0].mxu0 %v2424
        %v2469 = vpop.f32.mrb[0].mxu0
        %v2470 = vadd.f32 0.0, %v2469
        %v2471 = vpop.f32.mrb[0].mxu0
        %v2472 = vpop.f32.mrb[0].mxu0
        %v2473 = vadd.f32 0.0, %v2472
        %v2474 = vpop.f32.mrb[0].mxu0
        %2475 = vmatprep.mubr.bf16.mxu0 0
        %2476 = vmatmul.mubr.bf16.gmra.mrb[0].mxu0 %v2427
        %v2477 = vpop.f32.mrb[0].mxu0
        %v2478 = vadd.f32 0.0, %v2477
        %v2479 = vpop.f32.mrb[0].mxu0
        %v2480 = vpop.f32.mrb[0].mxu0
        %v2481 = vadd.f32 0.0, %v2480
        %v2482 = vpop.f32.mrb[0].mxu0
        %2483 = vmatprep.mubr.bf16.mxu0 0
        %2484 = vmatmul.mubr.bf16.gmra.mrb[0].mxu0 %v2430
        %v2485 = vpop.f32.mrb[0].mxu0
        %v2486 = vadd.f32 0.0, %v2485
        %v2487 = vpop.f32.mrb[0].mxu0
        %v2488 = vpop.f32.mrb[0].mxu0
        %v2489 = vadd.f32 0.0, %v2488
        %v2490 = vpop.f32.mrb[0].mxu0
        %2491 = vmatprep.mubr.bf16.mxu0 0
        %2492 = vmatmul.mubr.bf16.gmra.mrb[0].mxu0 %v2433
        %v2493 = vpop.f32.mrb[0].mxu0
        %v2494 = vadd.f32 0.0, %v2493
        %v2495 = vpop.f32.mrb[0].mxu0
        %v2496 = vpop.f32.mrb[0].mxu0
        %v2497 = vadd.f32 0.0, %v2496
        %v2498 = vpop.f32.mrb[0].mxu0
        %2499 = vdwg.mxu0
        %v2504 = vunpack.c.l.b16 %v2398
        %v2505 = vunpack.c.l.b16 %v2399
        %v2506 = vunpack.c.l.b16 %v2400
        %v2507 = vunpack.c.l.b16 %v2401
        %v2508 = vpack.c.b16 %v2505, %v2504
        %v2509 = vpack.c.b16 %v2507, %v2506
        %v2513 = vsel %vm1101, %v2394, 0
        %v2516 = vsel %vm1101, %v2395, 0
        %v2519 = vsel %vm1101, %v2396, 0
        %v2522 = vsel %vm1101, %v2397, 0
        %2524 = vmatprep.subr.bf16.mxu0 0
        %2525 = vmatpush1.bf16.msra.mxu0 %v2508
        %2526 = vmatprep.subr.bf16.mxu0 0
        %2527 = vmatpush1.bf16.msra.mxu0 %v2509
        %2528 = vmatprep.subr.bf16.mxu0 0
        %2529 = vmatpush1.bf16.msra.mxu0 0
        %2530 = vmatprep.subr.bf16.mxu0 0
        %2531 = vmatpush1.bf16.msra.mxu0 0
        %2532 = vmatprep.subr.bf16.mxu0 0
        %2533 = vmatpush1.bf16.msra.mxu0 0
        %2534 = vmatprep.subr.bf16.mxu0 0
        %2535 = vmatpush1.bf16.msra.mxu0 0
        %2536 = vmatprep.subr.bf16.mxu0 0
        %2537 = vmatpush1.bf16.msra.mxu0 0
        %2538 = vmatprep.subr.bf16.mxu0 0
        %2539 = vmatpush1.bf16.msra.mxu0 0
        %2540 = vmatprep.subr.bf16.mxu0 0
        %2541 = vmatpush1.bf16.msra.mxu0 0
        %2542 = vmatprep.subr.bf16.mxu0 0
        %2543 = vmatpush1.bf16.msra.mxu0 0
        %2544 = vmatprep.subr.bf16.mxu0 0
        %2545 = vmatpush1.bf16.msra.mxu0 0
        %2546 = vmatprep.subr.bf16.mxu0 0
        %2547 = vmatpush1.bf16.msra.mxu0 0
        %2548 = vmatprep.subr.bf16.mxu0 0
        %2549 = vmatpush1.bf16.msra.mxu0 0
        %2550 = vmatprep.subr.bf16.mxu0 0
        %2551 = vmatpush1.bf16.msra.mxu0 0
        %2552 = vmatprep.subr.bf16.mxu0 0
        %2553 = vmatpush1.bf16.msra.mxu0 0
        %2554 = vmatprep.subr.bf16.mxu0 0
        %2555 = vmatpush1.bf16.msra.mxu0 0
        %2556 = vmatprep.mubr.bf16.mxu0 0
        %2557 = vmatmul.mubr.bf16.gmra.mrb[0].mxu0 %v2513
        %v2558 = vpop.f32.mrb[0].mxu0
        %v2559 = vadd.f32 %v2470, %v2558
        %v2560 = vpop.f32.mrb[0].mxu0
        %v2561 = vpop.f32.mrb[0].mxu0
        %v2562 = vadd.f32 %v2473, %v2561
        %v2563 = vpop.f32.mrb[0].mxu0
        %2564 = vmatprep.mubr.bf16.mxu0 0
        %2565 = vmatmul.mubr.bf16.gmra.mrb[0].mxu0 %v2516
        %v2566 = vpop.f32.mrb[0].mxu0
        %v2567 = vadd.f32 %v2478, %v2566
        %v2568 = vpop.f32.mrb[0].mxu0
        %v2569 = vpop.f32.mrb[0].mxu0
        %v2570 = vadd.f32 %v2481, %v2569
        %v2571 = vpop.f32.mrb[0].mxu0
        %2572 = vmatprep.mubr.bf16.mxu0 0
        %2573 = vmatmul.mubr.bf16.gmra.mrb[0].mxu0 %v2519
        %v2574 = vpop.f32.mrb[0].mxu0
        %v2575 = vadd.f32 %v2486, %v2574
        %v2576 = vpop.f32.mrb[0].mxu0
        %v2577 = vpop.f32.mrb[0].mxu0
        %v2578 = vadd.f32 %v2489, %v2577
        %v2579 = vpop.f32.mrb[0].mxu0
        %2580 = vmatprep.mubr.bf16.mxu0 0
        %2581 = vmatmul.mubr.bf16.gmra.mrb[0].mxu0 %v2522
        %v2582 = vpop.f32.mrb[0].mxu0
        %v2583 = vadd.f32 %v2494, %v2582
        %v2584 = vpop.f32.mrb[0].mxu0
        %v2585 = vpop.f32.mrb[0].mxu0
        %v2586 = vadd.f32 %v2497, %v2585
        %v2587 = vpop.f32.mrb[0].mxu0
        %2588 = vdwg.mxu0
        %v2597 = vrot.slane %v2317, 1
        %v2598 = vrot.slane %v2318, 1
        %v2599 = vsel %vm1455, %v2597, %v2598
        %v2600 = vrot.slane %v2320, 1
        %v2601 = vrot.slane %v2321, 1
        %v2602 = vsel %vm1455, %v2600, %v2601
        %v2603 = vrot.slane %v2323, 1
        %v2604 = vrot.slane %v2324, 1
        %v2605 = vsel %vm1455, %v2603, %v2604
        %v2606 = vrot.slane %v2326, 1
        %v2607 = vrot.slane %v2327, 1
        %v2608 = vsel %vm1455, %v2606, %v2607
        %v2609 = vrot.slane %v2329, 1
        %v2610 = vrot.slane %v2330, 1
        %v2611 = vsel %vm1455, %v2609, %v2610
        %v2612 = vrot.slane %v2332, 1
        %v2613 = vrot.slane %v2333, 1
        %v2614 = vsel %vm1455, %v2612, %v2613
        %v2615 = vrot.slane %v2335, 1
        %v2616 = vrot.slane %v2336, 1
        %v2617 = vsel %vm1455, %v2615, %v2616
        %v2618 = vrot.slane %v2338, 1
        %v2619 = vrot.slane %v2339, 1
        %v2620 = vsel %vm1455, %v2618, %v2619
        %v2629 = vpack.c.bf16 %v2602, %v2599
        %v2630 = vpack.c.bf16 %v2608, %v2605
        %v2631 = vpack.c.bf16 %v2614, %v2611
        %v2632 = vpack.c.bf16 %v2620, %v2617
        %s2633 = scalar_lea.vmem [#allocation15], 32
        %v2634 = vld [vmem:[%s2633] sm:$0xf]
        %v2635 = vld [vmem:[%s2633 + $0x4] sm:$0xf]
        %v2636 = vld [vmem:[%s2633 + $0x8] sm:$0xf]
        %v2637 = vld [vmem:[%s2633 + $0xc] sm:$0xf]
        %v2642 = vunpack.c.l.b16 %v2634
        %v2643 = vunpack.c.l.b16 %v2635
        %v2644 = vunpack.c.l.b16 %v2636
        %v2645 = vunpack.c.l.b16 %v2637
        %v2646 = vpack.c.b16 %v2643, %v2642
        %v2647 = vpack.c.b16 %v2645, %v2644
        %v2651 = vsel %vm1101, %v2629, 0
        %v2654 = vsel %vm1101, %v2630, 0
        %v2657 = vsel %vm1101, %v2631, 0
        %v2660 = vsel %vm1101, %v2632, 0
        %2662 = vmatprep.subr.bf16.mxu0 0
        %2663 = vmatpush1.bf16.msra.mxu0 %v2646
        %2664 = vmatprep.subr.bf16.mxu0 0
        %2665 = vmatpush1.bf16.msra.mxu0 %v2647
        %2666 = vmatprep.subr.bf16.mxu0 0
        %2667 = vmatpush1.bf16.msra.mxu0 0
        %2668 = vmatprep.subr.bf16.mxu0 0
        %2669 = vmatpush1.bf16.msra.mxu0 0
        %2670 = vmatprep.subr.bf16.mxu0 0
        %2671 = vmatpush1.bf16.msra.mxu0 0
        %2672 = vmatprep.subr.bf16.mxu0 0
        %2673 = vmatpush1.bf16.msra.mxu0 0
        %2674 = vmatprep.subr.bf16.mxu0 0
        %2675 = vmatpush1.bf16.msra.mxu0 0
        %2676 = vmatprep.subr.bf16.mxu0 0
        %2677 = vmatpush1.bf16.msra.mxu0 0
        %2678 = vmatprep.subr.bf16.mxu0 0
        %2679 = vmatpush1.bf16.msra.mxu0 0
        %2680 = vmatprep.subr.bf16.mxu0 0
        %2681 = vmatpush1.bf16.msra.mxu0 0
        %2682 = vmatprep.subr.bf16.mxu0 0
        %2683 = vmatpush1.bf16.msra.mxu0 0
        %2684 = vmatprep.subr.bf16.mxu0 0
        %2685 = vmatpush1.bf16.msra.mxu0 0
        %2686 = vmatprep.subr.bf16.mxu0 0
        %2687 = vmatpush1.bf16.msra.mxu0 0
        %2688 = vmatprep.subr.bf16.mxu0 0
        %2689 = vmatpush1.bf16.msra.mxu0 0
        %2690 = vmatprep.subr.bf16.mxu0 0
        %2691 = vmatpush1.bf16.msra.mxu0 0
        %2692 = vmatprep.subr.bf16.mxu0 0
        %2693 = vmatpush1.bf16.msra.mxu0 0
        %2694 = vmatprep.mubr.bf16.mxu0 0
        %2695 = vmatmul.mubr.bf16.gmra.mrb[0].mxu0 %v2651
        %v2696 = vpop.f32.mrb[0].mxu0
        %v2697 = vadd.f32 0.0, %v2696
        %v2698 = vpop.f32.mrb[0].mxu0
        %v2699 = vpop.f32.mrb[0].mxu0
        %v2700 = vadd.f32 0.0, %v2699
        %v2701 = vpop.f32.mrb[0].mxu0
        %2702 = vmatprep.mubr.bf16.mxu0 0
        %2703 = vmatmul.mubr.bf16.gmra.mrb[0].mxu0 %v2654
        %v2704 = vpop.f32.mrb[0].mxu0
        %v2705 = vadd.f32 0.0, %v2704
        %v2706 = vpop.f32.mrb[0].mxu0
        %v2707 = vpop.f32.mrb[0].mxu0
        %v2708 = vadd.f32 0.0, %v2707
        %v2709 = vpop.f32.mrb[0].mxu0
        %2710 = vmatprep.mubr.bf16.mxu0 0
        %2711 = vmatmul.mubr.bf16.gmra.mrb[0].mxu0 %v2657
        %v2712 = vpop.f32.mrb[0].mxu0
        %v2713 = vadd.f32 0.0, %v2712
        %v2714 = vpop.f32.mrb[0].mxu0
        %v2715 = vpop.f32.mrb[0].mxu0
        %v2716 = vadd.f32 0.0, %v2715
        %v2717 = vpop.f32.mrb[0].mxu0
        %2718 = vmatprep.mubr.bf16.mxu0 0
        %2719 = vmatmul.mubr.bf16.gmra.mrb[0].mxu0 %v2660
        %v2720 = vpop.f32.mrb[0].mxu0
        %v2721 = vadd.f32 0.0, %v2720
        %v2722 = vpop.f32.mrb[0].mxu0
        %v2723 = vpop.f32.mrb[0].mxu0
        %v2724 = vadd.f32 0.0, %v2723
        %v2725 = vpop.f32.mrb[0].mxu0
        %2726 = vdwg.mxu0
        %v2727 = vadd.f32 %v2559, %v2697
        %v2728 = vadd.f32 %v2562, %v2700
        %v2729 = vadd.f32 %v2567, %v2705
        %v2730 = vadd.f32 %v2570, %v2708
        %v2731 = vadd.f32 %v2575, %v2713
        %v2732 = vadd.f32 %v2578, %v2716
        %v2733 = vadd.f32 %v2583, %v2721
        %v2734 = vadd.f32 %v2586, %v2724
        %v2737 = vrot.slane %v2340, 7
        %v2738 = vrot.slane %v2341, 7
        %v2739 = vsel %vm1219, %v2737, %v2738
        %v2741 = vpack.c.bf16 %v2370, %v2367
        %v2742 = vpack.c.bf16 %v2376, %v2373
        %v2743 = vpack.c.bf16 %v2382, %v2379
        %v2744 = vpack.c.bf16 %v2739, %v2385
        %s2745 = scalar_lea.vmem [#allocation15], 48
        %v2746 = vld [vmem:[%s2745] sm:$0xf]
        %v2747 = vld [vmem:[%s2745 + $0x4] sm:$0xf]
        %v2748 = vld [vmem:[%s2745 + $0x8] sm:$0xf]
        %v2749 = vld [vmem:[%s2745 + $0xc] sm:$0xf]
        %v2754 = vunpack.c.l.b16 %v2746
        %v2755 = vunpack.c.l.b16 %v2747
        %v2756 = vunpack.c.l.b16 %v2748
        %v2757 = vunpack.c.l.b16 %v2749
        %v2758 = vpack.c.b16 %v2755, %v2754
        %v2759 = vpack.c.b16 %v2757, %v2756
        %v2763 = vsel %vm1101, %v2741, 0
        %v2766 = vsel %vm1101, %v2742, 0
        %v2769 = vsel %vm1101, %v2743, 0
        %v2772 = vsel %vm1101, %v2744, 0
        %2774 = vmatprep.subr.bf16.mxu0 0
        %2775 = vmatpush1.bf16.msra.mxu0 %v2758
        %2776 = vmatprep.subr.bf16.mxu0 0
        %2777 = vmatpush1.bf16.msra.mxu0 %v2759
        %2778 = vmatprep.subr.bf16.mxu0 0
        %2779 = vmatpush1.bf16.msra.mxu0 0
        %2780 = vmatprep.subr.bf16.mxu0 0
        %2781 = vmatpush1.bf16.msra.mxu0 0
        %2782 = vmatprep.subr.bf16.mxu0 0
        %2783 = vmatpush1.bf16.msra.mxu0 0
        %2784 = vmatprep.subr.bf16.mxu0 0
        %2785 = vmatpush1.bf16.msra.mxu0 0
        %2786 = vmatprep.subr.bf16.mxu0 0
        %2787 = vmatpush1.bf16.msra.mxu0 0
        %2788 = vmatprep.subr.bf16.mxu0 0
        %2789 = vmatpush1.bf16.msra.mxu0 0
        %2790 = vmatprep.subr.bf16.mxu0 0
        %2791 = vmatpush1.bf16.msra.mxu0 0
        %2792 = vmatprep.subr.bf16.mxu0 0
        %2793 = vmatpush1.bf16.msra.mxu0 0
        %2794 = vmatprep.subr.bf16.mxu0 0
        %2795 = vmatpush1.bf16.msra.mxu0 0
        %2796 = vmatprep.subr.bf16.mxu0 0
        %2797 = vmatpush1.bf16.msra.mxu0 0
        %2798 = vmatprep.subr.bf16.mxu0 0
        %2799 = vmatpush1.bf16.msra.mxu0 0
        %2800 = vmatprep.subr.bf16.mxu0 0
        %2801 = vmatpush1.bf16.msra.mxu0 0
        %2802 = vmatprep.subr.bf16.mxu0 0
        %2803 = vmatpush1.bf16.msra.mxu0 0
        %2804 = vmatprep.subr.bf16.mxu0 0
        %2805 = vmatpush1.bf16.msra.mxu0 0
        %2806 = vmatprep.mubr.bf16.mxu0 0
        %2807 = vmatmul.mubr.bf16.gmra.mrb[0].mxu0 %v2763
        %v2808 = vpop.f32.mrb[0].mxu0
        %v2809 = vadd.f32 0.0, %v2808
        %v2810 = vpop.f32.mrb[0].mxu0
        %v2811 = vpop.f32.mrb[0].mxu0
        %v2812 = vadd.f32 0.0, %v2811
        %v2813 = vpop.f32.mrb[0].mxu0
        %2814 = vmatprep.mubr.bf16.mxu0 0
        %2815 = vmatmul.mubr.bf16.gmra.mrb[0].mxu0 %v2766
        %v2816 = vpop.f32.mrb[0].mxu0
        %v2817 = vadd.f32 0.0, %v2816
        %v2818 = vpop.f32.mrb[0].mxu0
        %v2819 = vpop.f32.mrb[0].mxu0
        %v2820 = vadd.f32 0.0, %v2819
        %v2821 = vpop.f32.mrb[0].mxu0
        %2822 = vmatprep.mubr.bf16.mxu0 0
        %2823 = vmatmul.mubr.bf16.gmra.mrb[0].mxu0 %v2769
        %v2824 = vpop.f32.mrb[0].mxu0
        %v2825 = vadd.f32 0.0, %v2824
        %v2826 = vpop.f32.mrb[0].mxu0
        %v2827 = vpop.f32.mrb[0].mxu0
        %v2828 = vadd.f32 0.0, %v2827
        %v2829 = vpop.f32.mrb[0].mxu0
        %2830 = vmatprep.mubr.bf16.mxu0 0
        %2831 = vmatmul.mubr.bf16.gmra.mrb[0].mxu0 %v2772
        %v2832 = vpop.f32.mrb[0].mxu0
        %v2833 = vadd.f32 0.0, %v2832
        %v2834 = vpop.f32.mrb[0].mxu0
        %v2835 = vpop.f32.mrb[0].mxu0
        %v2836 = vadd.f32 0.0, %v2835
        %v2837 = vpop.f32.mrb[0].mxu0
        %2838 = vdwg.mxu0
        %v2839 = vadd.f32 %v2727, %v2809
        %v2840 = vadd.f32 %v2728, %v2812
        %v2841 = vadd.f32 %v2729, %v2817
        %v2842 = vadd.f32 %v2730, %v2820
        %v2843 = vadd.f32 %v2731, %v2825
        %v2844 = vadd.f32 %v2732, %v2828
        %v2845 = vadd.f32 %v2733, %v2833
        %v2846 = vadd.f32 %v2734, %v2836
        %v2847 = vpack.c.bf16 %v2323, %v2320
        %v2848 = vpack.c.bf16 %v2329, %v2326
        %v2849 = vpack.c.bf16 %v2335, %v2332
        %v2850 = vpack.c.bf16 %v2341, %v2338
        %s2851 = scalar_lea.vmem [#allocation15], 64
        %v2852 = vld [vmem:[%s2851] sm:$0xf]
        %v2853 = vld [vmem:[%s2851 + $0x4] sm:$0xf]
        %v2854 = vld [vmem:[%s2851 + $0x8] sm:$0xf]
        %v2855 = vld [vmem:[%s2851 + $0xc] sm:$0xf]
        %v2860 = vunpack.c.l.b16 %v2852
        %v2861 = vunpack.c.l.b16 %v2853
        %v2862 = vunpack.c.l.b16 %v2854
        %v2863 = vunpack.c.l.b16 %v2855
        %v2864 = vpack.c.b16 %v2861, %v2860
        %v2865 = vpack.c.b16 %v2863, %v2862
        %v2869 = vsel %vm1101, %v2847, 0
        %v2872 = vsel %vm1101, %v2848, 0
        %v2875 = vsel %vm1101, %v2849, 0
        %v2878 = vsel %vm1101, %v2850, 0
        %2880 = vmatprep.subr.bf16.mxu0 0
        %2881 = vmatpush1.bf16.msra.mxu0 %v2864
        %2882 = vmatprep.subr.bf16.mxu0 0
        %2883 = vmatpush1.bf16.msra.mxu0 %v2865
        %2884 = vmatprep.subr.bf16.mxu0 0
        %2885 = vmatpush1.bf16.msra.mxu0 0
        %2886 = vmatprep.subr.bf16.mxu0 0
        %2887 = vmatpush1.bf16.msra.mxu0 0
        %2888 = vmatprep.subr.bf16.mxu0 0
        %2889 = vmatpush1.bf16.msra.mxu0 0
        %2890 = vmatprep.subr.bf16.mxu0 0
        %2891 = vmatpush1.bf16.msra.mxu0 0
        %2892 = vmatprep.subr.bf16.mxu0 0
        %2893 = vmatpush1.bf16.msra.mxu0 0
        %2894 = vmatprep.subr.bf16.mxu0 0
        %2895 = vmatpush1.bf16.msra.mxu0 0
        %2896 = vmatprep.subr.bf16.mxu0 0
        %2897 = vmatpush1.bf16.msra.mxu0 0
        %2898 = vmatprep.subr.bf16.mxu0 0
        %2899 = vmatpush1.bf16.msra.mxu0 0
        %2900 = vmatprep.subr.bf16.mxu0 0
        %2901 = vmatpush1.bf16.msra.mxu0 0
        %2902 = vmatprep.subr.bf16.mxu0 0
        %2903 = vmatpush1.bf16.msra.mxu0 0
        %2904 = vmatprep.subr.bf16.mxu0 0
        %2905 = vmatpush1.bf16.msra.mxu0 0
        %2906 = vmatprep.subr.bf16.mxu0 0
        %2907 = vmatpush1.bf16.msra.mxu0 0
        %2908 = vmatprep.subr.bf16.mxu0 0
        %2909 = vmatpush1.bf16.msra.mxu0 0
        %2910 = vmatprep.subr.bf16.mxu0 0
        %2911 = vmatpush1.bf16.msra.mxu0 0
        %2912 = vmatprep.mubr.bf16.mxu0 0
        %2913 = vmatmul.mubr.bf16.gmra.mrb[0].mxu0 %v2869
        %v2914 = vpop.f32.mrb[0].mxu0
        %v2915 = vadd.f32 0.0, %v2914
        %v2916 = vpop.f32.mrb[0].mxu0
        %v2917 = vpop.f32.mrb[0].mxu0
        %v2918 = vadd.f32 0.0, %v2917
        %v2919 = vpop.f32.mrb[0].mxu0
        %2920 = vmatprep.mubr.bf16.mxu0 0
        %2921 = vmatmul.mubr.bf16.gmra.mrb[0].mxu0 %v2872
        %v2922 = vpop.f32.mrb[0].mxu0
        %v2923 = vadd.f32 0.0, %v2922
        %v2924 = vpop.f32.mrb[0].mxu0
        %v2925 = vpop.f32.mrb[0].mxu0
        %v2926 = vadd.f32 0.0, %v2925
        %v2927 = vpop.f32.mrb[0].mxu0
        %2928 = vmatprep.mubr.bf16.mxu0 0
        %2929 = vmatmul.mubr.bf16.gmra.mrb[0].mxu0 %v2875
        %v2930 = vpop.f32.mrb[0].mxu0
        %v2931 = vadd.f32 0.0, %v2930
        %v2932 = vpop.f32.mrb[0].mxu0
        %v2933 = vpop.f32.mrb[0].mxu0
        %v2934 = vadd.f32 0.0, %v2933
        %v2935 = vpop.f32.mrb[0].mxu0
        %2936 = vmatprep.mubr.bf16.mxu0 0
        %2937 = vmatmul.mubr.bf16.gmra.mrb[0].mxu0 %v2878
        %v2938 = vpop.f32.mrb[0].mxu0
        %v2939 = vadd.f32 0.0, %v2938
        %v2940 = vpop.f32.mrb[0].mxu0
        %v2941 = vpop.f32.mrb[0].mxu0
        %v2942 = vadd.f32 0.0, %v2941
        %v2943 = vpop.f32.mrb[0].mxu0
        %2944 = vdwg.mxu0
        %v2945 = vadd.f32 %v2839, %v2915
        %v2946 = vadd.f32 %v2840, %v2918
        %v2947 = vadd.f32 %v2841, %v2923
        %v2948 = vadd.f32 %v2842, %v2926
        %v2949 = vadd.f32 %v2843, %v2931
        %v2950 = vadd.f32 %v2844, %v2934
        %v2951 = vadd.f32 %v2845, %v2939
        %v2952 = vadd.f32 %v2846, %v2942
        %v2954 = vrot.slane %v2341, 1
        %v2955 = vrot.slane %v2342, 1
        %v2956 = vsel %vm1455, %v2954, %v2955
        %v2958 = vpack.c.bf16 %v2605, %v2602
        %v2959 = vpack.c.bf16 %v2611, %v2608
        %v2960 = vpack.c.bf16 %v2617, %v2614
        %v2961 = vpack.c.bf16 %v2956, %v2620
        %s2962 = scalar_lea.vmem [#allocation15], 80
        %v2963 = vld [vmem:[%s2962] sm:$0xf]
        %v2964 = vld [vmem:[%s2962 + $0x4] sm:$0xf]
        %v2965 = vld [vmem:[%s2962 + $0x8] sm:$0xf]
        %v2966 = vld [vmem:[%s2962 + $0xc] sm:$0xf]
        %v2971 = vunpack.c.l.b16 %v2963
        %v2972 = vunpack.c.l.b16 %v2964
        %v2973 = vunpack.c.l.b16 %v2965
        %v2974 = vunpack.c.l.b16 %v2966
        %v2975 = vpack.c.b16 %v2972, %v2971
        %v2976 = vpack.c.b16 %v2974, %v2973
        %v2980 = vsel %vm1101, %v2958, 0
        %v2983 = vsel %vm1101, %v2959, 0
        %v2986 = vsel %vm1101, %v2960, 0
        %v2989 = vsel %vm1101, %v2961, 0
        %2991 = vmatprep.subr.bf16.mxu0 0
        %2992 = vmatpush1.bf16.msra.mxu0 %v2975
        %2993 = vmatprep.subr.bf16.mxu0 0
        %2994 = vmatpush1.bf16.msra.mxu0 %v2976
        %2995 = vmatprep.subr.bf16.mxu0 0
        %2996 = vmatpush1.bf16.msra.mxu0 0
        %2997 = vmatprep.subr.bf16.mxu0 0
        %2998 = vmatpush1.bf16.msra.mxu0 0
        %2999 = vmatprep.subr.bf16.mxu0 0
        %3000 = vmatpush1.bf16.msra.mxu0 0
        %3001 = vmatprep.subr.bf16.mxu0 0
        %3002 = vmatpush1.bf16.msra.mxu0 0
        %3003 = vmatprep.subr.bf16.mxu0 0
        %3004 = vmatpush1.bf16.msra.mxu0 0
        %3005 = vmatprep.subr.bf16.mxu0 0
        %3006 = vmatpush1.bf16.msra.mxu0 0
        %3007 = vmatprep.subr.bf16.mxu0 0
        %3008 = vmatpush1.bf16.msra.mxu0 0
        %3009 = vmatprep.subr.bf16.mxu0 0
        %3010 = vmatpush1.bf16.msra.mxu0 0
        %3011 = vmatprep.subr.bf16.mxu0 0
        %3012 = vmatpush1.bf16.msra.mxu0 0
        %3013 = vmatprep.subr.bf16.mxu0 0
        %3014 = vmatpush1.bf16.msra.mxu0 0
        %3015 = vmatprep.subr.bf16.mxu0 0
        %3016 = vmatpush1.bf16.msra.mxu0 0
        %3017 = vmatprep.subr.bf16.mxu0 0
        %3018 = vmatpush1.bf16.msra.mxu0 0
        %3019 = vmatprep.subr.bf16.mxu0 0
        %3020 = vmatpush1.bf16.msra.mxu0 0
        %3021 = vmatprep.subr.bf16.mxu0 0
        %3022 = vmatpush1.bf16.msra.mxu0 0
        %3023 = vmatprep.mubr.bf16.mxu0 0
        %3024 = vmatmul.mubr.bf16.gmra.mrb[0].mxu0 %v2980
        %v3025 = vpop.f32.mrb[0].mxu0
        %v3026 = vadd.f32 0.0, %v3025
        %v3027 = vpop.f32.mrb[0].mxu0
        %v3028 = vpop.f32.mrb[0].mxu0
        %v3029 = vadd.f32 0.0, %v3028
        %v3030 = vpop.f32.mrb[0].mxu0
        %3031 = vmatprep.mubr.bf16.mxu0 0
        %3032 = vmatmul.mubr.bf16.gmra.mrb[0].mxu0 %v2983
        %v3033 = vpop.f32.mrb[0].mxu0
        %v3034 = vadd.f32 0.0, %v3033
        %v3035 = vpop.f32.mrb[0].mxu0
        %v3036 = vpop.f32.mrb[0].mxu0
        %v3037 = vadd.f32 0.0, %v3036
        %v3038 = vpop.f32.mrb[0].mxu0
        %3039 = vmatprep.mubr.bf16.mxu0 0
        %3040 = vmatmul.mubr.bf16.gmra.mrb[0].mxu0 %v2986
        %v3041 = vpop.f32.mrb[0].mxu0
        %v3042 = vadd.f32 0.0, %v3041
        %v3043 = vpop.f32.mrb[0].mxu0
        %v3044 = vpop.f32.mrb[0].mxu0
        %v3045 = vadd.f32 0.0, %v3044
        %v3046 = vpop.f32.mrb[0].mxu0
        %3047 = vmatprep.mubr.bf16.mxu0 0
        %3048 = vmatmul.mubr.bf16.gmra.mrb[0].mxu0 %v2989
        %v3049 = vpop.f32.mrb[0].mxu0
        %v3050 = vadd.f32 0.0, %v3049
        %v3051 = vpop.f32.mrb[0].mxu0
        %v3052 = vpop.f32.mrb[0].mxu0
        %v3053 = vadd.f32 0.0, %v3052
        %v3054 = vpop.f32.mrb[0].mxu0
        %3055 = vdwg.mxu0
        %v3056 = vadd.f32 %v2945, %v3026
        %v3057 = vadd.f32 %v2946, %v3029
        %v3058 = vadd.f32 %v2947, %v3034
        %v3059 = vadd.f32 %v2948, %v3037
        %v3060 = vadd.f32 %v2949, %v3042
        %v3061 = vadd.f32 %v2950, %v3045
        %v3062 = vadd.f32 %v2951, %v3050
        %v3063 = vadd.f32 %v2952, %v3053
        %v3066 = vrot.slane %v2343, 7
        %v3067 = vrot.slane %v2344, 7
        %v3068 = vsel %vm1219, %v3066, %v3067
        %v3070 = vpack.c.bf16 %v3068, %v2739
        %s3071 = scalar_lea.vmem [#allocation15], 96
        %v3072 = vld [vmem:[%s3071] sm:$0xf]
        %v3073 = vld [vmem:[%s3071 + $0x4] sm:$0xf]
        %v3074 = vld [vmem:[%s3071 + $0x8] sm:$0xf]
        %v3075 = vld [vmem:[%s3071 + $0xc] sm:$0xf]
        %v3080 = vunpack.c.l.b16 %v3072
        %v3081 = vunpack.c.l.b16 %v3073
        %v3082 = vunpack.c.l.b16 %v3074
        %v3083 = vunpack.c.l.b16 %v3075
        %v3084 = vpack.c.b16 %v3081, %v3080
        %v3085 = vpack.c.b16 %v3083, %v3082
        %v3089 = vsel %vm1101, %v3070, 0
        %3091 = vmatprep.subr.bf16.mxu0 0
        %3092 = vmatpush1.bf16.msra.mxu0 %v3084
        %3093 = vmatprep.subr.bf16.mxu0 0
        %3094 = vmatpush1.bf16.msra.mxu0 %v3085
        %3095 = vmatprep.subr.bf16.mxu0 0
        %3096 = vmatpush1.bf16.msra.mxu0 0
        %3097 = vmatprep.subr.bf16.mxu0 0
        %3098 = vmatpush1.bf16.msra.mxu0 0
        %3099 = vmatprep.subr.bf16.mxu0 0
        %3100 = vmatpush1.bf16.msra.mxu0 0
        %3101 = vmatprep.subr.bf16.mxu0 0
        %3102 = vmatpush1.bf16.msra.mxu0 0
        %3103 = vmatprep.subr.bf16.mxu0 0
        %3104 = vmatpush1.bf16.msra.mxu0 0
        %3105 = vmatprep.subr.bf16.mxu0 0
        %3106 = vmatpush1.bf16.msra.mxu0 0
        %3107 = vmatprep.subr.bf16.mxu0 0
        %3108 = vmatpush1.bf16.msra.mxu0 0
        %3109 = vmatprep.subr.bf16.mxu0 0
        %3110 = vmatpush1.bf16.msra.mxu0 0
        %3111 = vmatprep.subr.bf16.mxu0 0
        %3112 = vmatpush1.bf16.msra.mxu0 0
        %3113 = vmatprep.subr.bf16.mxu0 0
        %3114 = vmatpush1.bf16.msra.mxu0 0
        %3115 = vmatprep.subr.bf16.mxu0 0
        %3116 = vmatpush1.bf16.msra.mxu0 0
        %3117 = vmatprep.subr.bf16.mxu0 0
        %3118 = vmatpush1.bf16.msra.mxu0 0
        %3119 = vmatprep.subr.bf16.mxu0 0
        %3120 = vmatpush1.bf16.msra.mxu0 0
        %3121 = vmatprep.subr.bf16.mxu0 0
        %3122 = vmatpush1.bf16.msra.mxu0 0
        %3123 = vmatprep.mubr.bf16.mxu0 0
        %3124 = vmatmul.mubr.bf16.gmra.mrb[0].mxu0 %v2516
        %v3125 = vpop.f32.mrb[0].mxu0
        %v3126 = vadd.f32 0.0, %v3125
        %v3127 = vpop.f32.mrb[0].mxu0
        %v3128 = vpop.f32.mrb[0].mxu0
        %v3129 = vadd.f32 0.0, %v3128
        %v3130 = vpop.f32.mrb[0].mxu0
        %3131 = vmatprep.mubr.bf16.mxu0 0
        %3132 = vmatmul.mubr.bf16.gmra.mrb[0].mxu0 %v2519
        %v3133 = vpop.f32.mrb[0].mxu0
        %v3134 = vadd.f32 0.0, %v3133
        %v3135 = vpop.f32.mrb[0].mxu0
        %v3136 = vpop.f32.mrb[0].mxu0
        %v3137 = vadd.f32 0.0, %v3136
        %v3138 = vpop.f32.mrb[0].mxu0
        %3139 = vmatprep.mubr.bf16.mxu0 0
        %3140 = vmatmul.mubr.bf16.gmra.mrb[0].mxu0 %v2522
        %v3141 = vpop.f32.mrb[0].mxu0
        %v3142 = vadd.f32 0.0, %v3141
        %v3143 = vpop.f32.mrb[0].mxu0
        %v3144 = vpop.f32.mrb[0].mxu0
        %v3145 = vadd.f32 0.0, %v3144
        %v3146 = vpop.f32.mrb[0].mxu0
        %3147 = vmatprep.mubr.bf16.mxu0 0
        %3148 = vmatmul.mubr.bf16.gmra.mrb[0].mxu0 %v3089
        %v3149 = vpop.f32.mrb[0].mxu0
        %v3150 = vadd.f32 0.0, %v3149
        %v3151 = vpop.f32.mrb[0].mxu0
        %v3152 = vpop.f32.mrb[0].mxu0
        %v3153 = vadd.f32 0.0, %v3152
        %v3154 = vpop.f32.mrb[0].mxu0
        %3155 = vdwg.mxu0
        %v3156 = vadd.f32 %v3056, %v3126
        %v3157 = vadd.f32 %v3057, %v3129
        %v3158 = vadd.f32 %v3058, %v3134
        %v3159 = vadd.f32 %v3059, %v3137
        %v3160 = vadd.f32 %v3060, %v3142
        %v3161 = vadd.f32 %v3061, %v3145
        %v3162 = vadd.f32 %v3062, %v3150
        %v3163 = vadd.f32 %v3063, %v3153
        %v3164 = vpack.c.bf16 %v2344, %v2341
        %s3165 = scalar_lea.vmem [#allocation15], 112
        %v3166 = vld [vmem:[%s3165] sm:$0xf]
        %v3167 = vld [vmem:[%s3165 + $0x4] sm:$0xf]
        %v3168 = vld [vmem:[%s3165 + $0x8] sm:$0xf]
        %v3169 = vld [vmem:[%s3165 + $0xc] sm:$0xf]
        %v3174 = vunpack.c.l.b16 %v3166
        %v3175 = vunpack.c.l.b16 %v3167
        %v3176 = vunpack.c.l.b16 %v3168
        %v3177 = vunpack.c.l.b16 %v3169
        %v3178 = vpack.c.b16 %v3175, %v3174
        %v3179 = vpack.c.b16 %v3177, %v3176
        %v3183 = vsel %vm1101, %v3164, 0
        %3185 = vmatprep.subr.bf16.mxu0 0
        %3186 = vmatpush1.bf16.msra.mxu0 %v3178
        %3187 = vmatprep.subr.bf16.mxu0 0
        %3188 = vmatpush1.bf16.msra.mxu0 %v3179
        %3189 = vmatprep.subr.bf16.mxu0 0
        %3190 = vmatpush1.bf16.msra.mxu0 0
        %3191 = vmatprep.subr.bf16.mxu0 0
        %3192 = vmatpush1.bf16.msra.mxu0 0
        %3193 = vmatprep.subr.bf16.mxu0 0
        %3194 = vmatpush1.bf16.msra.mxu0 0
        %3195 = vmatprep.subr.bf16.mxu0 0
        %3196 = vmatpush1.bf16.msra.mxu0 0
        %3197 = vmatprep.subr.bf16.mxu0 0
        %3198 = vmatpush1.bf16.msra.mxu0 0
        %3199 = vmatprep.subr.bf16.mxu0 0
        %3200 = vmatpush1.bf16.msra.mxu0 0
        %3201 = vmatprep.subr.bf16.mxu0 0
        %3202 = vmatpush1.bf16.msra.mxu0 0
        %3203 = vmatprep.subr.bf16.mxu0 0
        %3204 = vmatpush1.bf16.msra.mxu0 0
        %3205 = vmatprep.subr.bf16.mxu0 0
        %3206 = vmatpush1.bf16.msra.mxu0 0
        %3207 = vmatprep.subr.bf16.mxu0 0
        %3208 = vmatpush1.bf16.msra.mxu0 0
        %3209 = vmatprep.subr.bf16.mxu0 0
        %3210 = vmatpush1.bf16.msra.mxu0 0
        %3211 = vmatprep.subr.bf16.mxu0 0
        %3212 = vmatpush1.bf16.msra.mxu0 0
        %3213 = vmatprep.subr.bf16.mxu0 0
        %3214 = vmatpush1.bf16.msra.mxu0 0
        %3215 = vmatprep.subr.bf16.mxu0 0
        %3216 = vmatpush1.bf16.msra.mxu0 0
        %3217 = vmatprep.mubr.bf16.mxu0 0
        %3218 = vmatmul.mubr.bf16.gmra.mrb[0].mxu0 %v2427
        %v3219 = vpop.f32.mrb[0].mxu0
        %v3220 = vadd.f32 0.0, %v3219
        %v3221 = vpop.f32.mrb[0].mxu0
        %v3222 = vpop.f32.mrb[0].mxu0
        %v3223 = vadd.f32 0.0, %v3222
        %v3224 = vpop.f32.mrb[0].mxu0
        %3225 = vmatprep.mubr.bf16.mxu0 0
        %3226 = vmatmul.mubr.bf16.gmra.mrb[0].mxu0 %v2430
        %v3227 = vpop.f32.mrb[0].mxu0
        %v3228 = vadd.f32 0.0, %v3227
        %v3229 = vpop.f32.mrb[0].mxu0
        %v3230 = vpop.f32.mrb[0].mxu0
        %v3231 = vadd.f32 0.0, %v3230
        %v3232 = vpop.f32.mrb[0].mxu0
        %3233 = vmatprep.mubr.bf16.mxu0 0
        %3234 = vmatmul.mubr.bf16.gmra.mrb[0].mxu0 %v2433
        %v3235 = vpop.f32.mrb[0].mxu0
        %v3236 = vadd.f32 0.0, %v3235
        %v3237 = vpop.f32.mrb[0].mxu0
        %v3238 = vpop.f32.mrb[0].mxu0
        %v3239 = vadd.f32 0.0, %v3238
        %v3240 = vpop.f32.mrb[0].mxu0
        %3241 = vmatprep.mubr.bf16.mxu0 0
        %3242 = vmatmul.mubr.bf16.gmra.mrb[0].mxu0 %v3183
        %v3243 = vpop.f32.mrb[0].mxu0
        %v3244 = vadd.f32 0.0, %v3243
        %v3245 = vpop.f32.mrb[0].mxu0
        %v3246 = vpop.f32.mrb[0].mxu0
        %v3247 = vadd.f32 0.0, %v3246
        %v3248 = vpop.f32.mrb[0].mxu0
        %3249 = vdwg.mxu0
        %v3250 = vadd.f32 %v3156, %v3220
        %v3251 = vadd.f32 %v3157, %v3223
        %v3252 = vadd.f32 %v3158, %v3228
        %v3253 = vadd.f32 %v3159, %v3231
        %v3254 = vadd.f32 %v3160, %v3236
        %v3255 = vadd.f32 %v3161, %v3239
        %v3256 = vadd.f32 %v3162, %v3244
        %v3257 = vadd.f32 %v3163, %v3247
        %v3259 = vrot.slane %v2344, 1
        %v3260 = vrot.slane %v2345, 1
        %v3261 = vsel %vm1455, %v3259, %v3260
        %v3263 = vpack.c.bf16 %v3261, %v2956
        %s3264 = scalar_lea.vmem [#allocation15], 128
        %v3265 = vld [vmem:[%s3264] sm:$0xf]
        %v3266 = vld [vmem:[%s3264 + $0x4] sm:$0xf]
        %v3267 = vld [vmem:[%s3264 + $0x8] sm:$0xf]
        %v3268 = vld [vmem:[%s3264 + $0xc] sm:$0xf]
        %v3273 = vunpack.c.l.b16 %v3265
        %v3274 = vunpack.c.l.b16 %v3266
        %v3275 = vunpack.c.l.b16 %v3267
        %v3276 = vunpack.c.l.b16 %v3268
        %v3277 = vpack.c.b16 %v3274, %v3273
        %v3278 = vpack.c.b16 %v3276, %v3275
        %v3282 = vsel %vm1101, %v3263, 0
        %3284 = vmatprep.subr.bf16.mxu0 0
        %3285 = vmatpush1.bf16.msra.mxu0 %v3277
        %3286 = vmatprep.subr.bf16.mxu0 0
        %3287 = vmatpush1.bf16.msra.mxu0 %v3278
        %3288 = vmatprep.subr.bf16.mxu0 0
        %3289 = vmatpush1.bf16.msra.mxu0 0
        %3290 = vmatprep.subr.bf16.mxu0 0
        %3291 = vmatpush1.bf16.msra.mxu0 0
        %3292 = vmatprep.subr.bf16.mxu0 0
        %3293 = vmatpush1.bf16.msra.mxu0 0
        %3294 = vmatprep.subr.bf16.mxu0 0
        %3295 = vmatpush1.bf16.msra.mxu0 0
        %3296 = vmatprep.subr.bf16.mxu0 0
        %3297 = vmatpush1.bf16.msra.mxu0 0
        %3298 = vmatprep.subr.bf16.mxu0 0
        %3299 = vmatpush1.bf16.msra.mxu0 0
        %3300 = vmatprep.subr.bf16.mxu0 0
        %3301 = vmatpush1.bf16.msra.mxu0 0
        %3302 = vmatprep.subr.bf16.mxu0 0
        %3303 = vmatpush1.bf16.msra.mxu0 0
        %3304 = vmatprep.subr.bf16.mxu0 0
        %3305 = vmatpush1.bf16.msra.mxu0 0
        %3306 = vmatprep.subr.bf16.mxu0 0
        %3307 = vmatpush1.bf16.msra.mxu0 0
        %3308 = vmatprep.subr.bf16.mxu0 0
        %3309 = vmatpush1.bf16.msra.mxu0 0
        %3310 = vmatprep.subr.bf16.mxu0 0
        %3311 = vmatpush1.bf16.msra.mxu0 0
        %3312 = vmatprep.subr.bf16.mxu0 0
        %3313 = vmatpush1.bf16.msra.mxu0 0
        %3314 = vmatprep.subr.bf16.mxu0 0
        %3315 = vmatpush1.bf16.msra.mxu0 0
        %3316 = vmatprep.mubr.bf16.mxu0 0
        %3317 = vmatmul.mubr.bf16.gmra.mrb[0].mxu0 %v2654
        %v3318 = vpop.f32.mrb[0].mxu0
        %v3319 = vadd.f32 0.0, %v3318
        %v3320 = vpop.f32.mrb[0].mxu0
        %v3321 = vpop.f32.mrb[0].mxu0
        %v3322 = vadd.f32 0.0, %v3321
        %v3323 = vpop.f32.mrb[0].mxu0
        %3324 = vmatprep.mubr.bf16.mxu0 0
        %3325 = vmatmul.mubr.bf16.gmra.mrb[0].mxu0 %v2657
        %v3326 = vpop.f32.mrb[0].mxu0
        %v3327 = vadd.f32 0.0, %v3326
        %v3328 = vpop.f32.mrb[0].mxu0
        %v3329 = vpop.f32.mrb[0].mxu0
        %v3330 = vadd.f32 0.0, %v3329
        %v3331 = vpop.f32.mrb[0].mxu0
        %3332 = vmatprep.mubr.bf16.mxu0 0
        %3333 = vmatmul.mubr.bf16.gmra.mrb[0].mxu0 %v2660
        %v3334 = vpop.f32.mrb[0].mxu0
        %v3335 = vadd.f32 0.0, %v3334
        %v3336 = vpop.f32.mrb[0].mxu0
        %v3337 = vpop.f32.mrb[0].mxu0
        %v3338 = vadd.f32 0.0, %v3337
        %v3339 = vpop.f32.mrb[0].mxu0
        %3340 = vmatprep.mubr.bf16.mxu0 0
        %3341 = vmatmul.mubr.bf16.gmra.mrb[0].mxu0 %v3282
        %v3342 = vpop.f32.mrb[0].mxu0
        %v3343 = vadd.f32 0.0, %v3342
        %v3344 = vpop.f32.mrb[0].mxu0
        %v3345 = vpop.f32.mrb[0].mxu0
        %v3346 = vadd.f32 0.0, %v3345
        %v3347 = vpop.f32.mrb[0].mxu0
        %3348 = vdwg.mxu0
        %v3349 = vadd.f32 %v3250, %v3319
        %v3350 = vadd.f32 %v3251, %v3322
        %v3351 = vadd.f32 %v3252, %v3327
        %v3352 = vadd.f32 %v3253, %v3330
        %v3353 = vadd.f32 %v3254, %v3335
        %v3354 = vadd.f32 %v3255, %v3338
        %v3355 = vadd.f32 %v3256, %v3343
        %v3356 = vadd.f32 %v3257, %v3346
        %v3357 = vld [vmem:[#allocation16] sm:$0x1]
        %v3359 = vlaneseq
        %v3360 = vshrl.u32 %v3359, 7
        %v3361 = vsub.s32 0, %v3360
        %v3362 = vrot.slane %v3357, %v3361
        %v3364 = vmul.f32 %v3349, %v3362
        %v3365 = vmul.f32 %v3350, %v3362
        %v3366 = vmul.f32 %v3351, %v3362
        %v3367 = vmul.f32 %v3352, %v3362
        %v3368 = vmul.f32 %v3353, %v3362
        %v3369 = vmul.f32 %v3354, %v3362
        %v3370 = vmul.f32 %v3355, %v3362
        %v3371 = vmul.f32 %v3356, %v3362
        %v3372 = vld [vmem:[#allocation18] sm:$0x1]
        %v3374 = vlaneseq
        %v3375 = vshrl.u32 %v3374, 7
        %v3376 = vsub.s32 0, %v3375
        %v3377 = vrot.slane %v3372, %v3376
        %v3379 = vadd.f32 %v3364, %v3377
        %v3380 = vadd.f32 %v3365, %v3377
        %v3381 = vadd.f32 %v3366, %v3377
        %v3382 = vadd.f32 %v3367, %v3377
        %v3383 = vadd.f32 %v3368, %v3377
        %v3384 = vadd.f32 %v3369, %v3377
        %v3385 = vadd.f32 %v3370, %v3377
        %v3386 = vadd.f32 %v3371, %v3377
        %v3387 = vmax.f32 %v3379, 0.0
        %v3388 = vmax.f32 %v3380, 0.0
        %v3389 = vmax.f32 %v3381, 0.0
        %v3390 = vmax.f32 %v3382, 0.0
        %v3391 = vmax.f32 %v3383, 0.0
        %v3392 = vmax.f32 %v3384, 0.0
        %v3393 = vmax.f32 %v3385, 0.0
        %v3394 = vmax.f32 %v3386, 0.0
        %vm3395 = vcmask 392192
        %3396 = vst.msk [vmem:[#allocation3] sm:$0xff] %vm3395, 0.0
        %3397 = vst.msk [vmem:[#allocation3 + $0x8] sm:$0xff] %vm3395, 0.0
        %3398 = vst.msk [vmem:[#allocation3 + $0x10] sm:$0xff] %vm3395, 0.0
        %3399 = vst.msk [vmem:[#allocation3 + $0x18] sm:$0xff] %vm3395, 0.0
        %3400 = vst.msk [vmem:[#allocation3 + $0x20] sm:$0xff] %vm3395, 0.0
        %3401 = vst.msk [vmem:[#allocation3 + $0x28] sm:$0xff] %vm3395, 0.0
        %3402 = vst.msk [vmem:[#allocation3 + $0x30] sm:$0xff] %vm3395, 0.0
        %3403 = vst.msk [vmem:[#allocation3 + $0x38] sm:$0xff] %vm3395, 0.0
        %3404 = vst.msk [vmem:[#allocation3 + $0x40] sm:$0xff] %vm3395, 0.0
        %3405 = vst.msk [vmem:[#allocation3 + $0x48] sm:$0xff] %vm3395, 0.0
        %3406 = vst.msk [vmem:[#allocation3 + $0x50] sm:$0xff] %vm3395, 0.0
        %3407 = vst.msk [vmem:[#allocation3 + $0x58] sm:$0xff] %vm3395, 0.0
        %3408 = vst.msk [vmem:[#allocation3 + $0x60] sm:$0xff] %vm3395, 0.0
        %3409 = vst.msk [vmem:[#allocation3 + $0x68] sm:$0xff] %vm3395, 0.0
        %3410 = vst.msk [vmem:[#allocation3 + $0x70] sm:$0xff] %vm3395, 0.0
        %3411 = vst.msk [vmem:[#allocation3 + $0x78] sm:$0xff] %vm3395, 0.0
        %3412 = vst.msk [vmem:[#allocation3 + $0x80] sm:$0xff] %vm3395, 0.0
        %3413 = vst.msk [vmem:[#allocation3 + $0x88] sm:$0xff] %vm3395, 0.0
        %3414 = vst.msk [vmem:[#allocation3 + $0x90] sm:$0xff] %vm3395, 0.0
        %3415 = vst.msk [vmem:[#allocation3 + $0x98] sm:$0xff] %vm3395, 0.0
        %3416 = vst.msk [vmem:[#allocation3 + $0xa0] sm:$0xff] %vm3395, 0.0
        %3417 = vst.msk [vmem:[#allocation3 + $0xa8] sm:$0xff] %vm3395, 0.0
        %3418 = vst.msk [vmem:[#allocation3 + $0xb0] sm:$0xff] %vm3395, 0.0
        %3419 = vst.msk [vmem:[#allocation3 + $0xb8] sm:$0xff] %vm3395, 0.0
        %3420 = vst.msk [vmem:[#allocation3 + $0xc0] sm:$0xff] %vm3395, 0.0
        %3421 = vst.msk [vmem:[#allocation3 + $0xc8] sm:$0xff] %vm3395, 0.0
        %3422 = vst.msk [vmem:[#allocation3 + $0xd0] sm:$0xff] %vm3395, 0.0
        %3423 = vst.msk [vmem:[#allocation3 + $0xd8] sm:$0xff] %vm3395, 0.0
        %3424 = vst.msk [vmem:[#allocation3 + $0xe0] sm:$0xff] %vm3395, 0.0
        %3425 = vst.msk [vmem:[#allocation3 + $0xe8] sm:$0xff] %vm3395, 0.0
        %s3426 = scalar_lea.vmem [#allocation3], 24
        %3427 = vst.msk [vmem:[%s3426 + $0x8] sm:$0xff] %vm3395, %v3387
        %3428 = vst.msk [vmem:[%s3426 + $0x20] sm:$0xff] %vm3395, %v3388
        %3429 = vst.msk [vmem:[%s3426 + $0x38] sm:$0xff] %vm3395, %v3389
        %3430 = vst.msk [vmem:[%s3426 + $0x50] sm:$0xff] %vm3395, %v3390
        %3431 = vst.msk [vmem:[%s3426 + $0x68] sm:$0xff] %vm3395, %v3391
        %3432 = vst.msk [vmem:[%s3426 + $0x80] sm:$0xff] %vm3395, %v3392
        %3433 = vst.msk [vmem:[%s3426 + $0x98] sm:$0xff] %vm3395, %v3393
        %3434 = vst.msk [vmem:[%s3426 + $0xb0] sm:$0xff] %vm3395, %v3394
        %v3435 = vld [vmem:[#allocation3] sm:$0xff]
        %v3436 = vld [vmem:[#allocation3 + $0x8] sm:$0xff]
        %v3437 = vld [vmem:[#allocation3 + $0x10] sm:$0xff]
        %v3438 = vld [vmem:[#allocation3 + $0x18] sm:$0xff]
        %v3439 = vld [vmem:[#allocation3 + $0x20] sm:$0xff]
        %v3440 = vld [vmem:[#allocation3 + $0x28] sm:$0xff]
        %v3441 = vld [vmem:[#allocation3 + $0x30] sm:$0xff]
        %v3442 = vld [vmem:[#allocation3 + $0x38] sm:$0xff]
        %v3443 = vld [vmem:[#allocation3 + $0x40] sm:$0xff]
        %v3444 = vld [vmem:[#allocation3 + $0x48] sm:$0xff]
        %v3445 = vld [vmem:[#allocation3 + $0x50] sm:$0xff]
        %v3446 = vld [vmem:[#allocation3 + $0x58] sm:$0xff]
        %v3447 = vld [vmem:[#allocation3 + $0x60] sm:$0xff]
        %v3448 = vld [vmem:[#allocation3 + $0x68] sm:$0xff]
        %v3449 = vld [vmem:[#allocation3 + $0x70] sm:$0xff]
        %v3450 = vld [vmem:[#allocation3 + $0x78] sm:$0xff]
        %v3451 = vld [vmem:[#allocation3 + $0x80] sm:$0xff]
        %v3452 = vld [vmem:[#allocation3 + $0x88] sm:$0xff]
        %v3453 = vld [vmem:[#allocation3 + $0x90] sm:$0xff]
        %v3454 = vld [vmem:[#allocation3 + $0x98] sm:$0xff]
        %v3455 = vld [vmem:[#allocation3 + $0xa0] sm:$0xff]
        %v3456 = vld [vmem:[#allocation3 + $0xa8] sm:$0xff]
        %v3457 = vld [vmem:[#allocation3 + $0xb0] sm:$0xff]
        %v3458 = vld [vmem:[#allocation3 + $0xb8] sm:$0xff]
        %v3459 = vld [vmem:[#allocation3 + $0xc0] sm:$0xff]
        %v3460 = vld [vmem:[#allocation3 + $0xc8] sm:$0xff]
        %v3461 = vld [vmem:[#allocation3 + $0xd0] sm:$0xff]
        %v3462 = vld [vmem:[#allocation3 + $0xd8] sm:$0xff]
        %v3463 = vld [vmem:[#allocation3 + $0xe0] sm:$0xff]
        %v3464 = vld [vmem:[#allocation3 + $0xe8] sm:$0xff]
        %v3481 = vrot.slane %v3435, 7
        %v3482 = vrot.slane %v3436, 7
        %v3483 = vsel %vm1219, %v3481, %v3482
        %v3484 = vrot.slane %v3438, 7
        %v3485 = vrot.slane %v3439, 7
        %v3486 = vsel %vm1219, %v3484, %v3485
        %v3487 = vrot.slane %v3441, 7
        %v3488 = vrot.slane %v3442, 7
        %v3489 = vsel %vm1219, %v3487, %v3488
        %v3490 = vrot.slane %v3444, 7
        %v3491 = vrot.slane %v3445, 7
        %v3492 = vsel %vm1219, %v3490, %v3491
        %v3493 = vrot.slane %v3447, 7
        %v3494 = vrot.slane %v3448, 7
        %v3495 = vsel %vm1219, %v3493, %v3494
        %v3496 = vrot.slane %v3450, 7
        %v3497 = vrot.slane %v3451, 7
        %v3498 = vsel %vm1219, %v3496, %v3497
        %v3499 = vrot.slane %v3453, 7
        %v3500 = vrot.slane %v3454, 7
        %v3501 = vsel %vm1219, %v3499, %v3500
        %v3502 = vrot.slane %v3456, 7
        %v3503 = vrot.slane %v3457, 7
        %v3504 = vsel %vm1219, %v3502, %v3503
        %v3513 = vpack.c.bf16 %v3486, %v3483
        %v3514 = vpack.c.bf16 %v3492, %v3489
        %v3515 = vpack.c.bf16 %v3498, %v3495
        %v3516 = vpack.c.bf16 %v3504, %v3501
        %v3517 = vld [vmem:[%s10] sm:$0xf]
        %v3518 = vld [vmem:[%s10 + $0x4] sm:$0xf]
        %v3519 = vld [vmem:[%s10 + $0x8] sm:$0xf]
        %v3520 = vld [vmem:[%s10 + $0xc] sm:$0xf]
        %v3521 = vld [vmem:[%s10 + $0x10] sm:$0xf]
        %v3522 = vld [vmem:[%s10 + $0x14] sm:$0xf]
        %v3523 = vpack.c.bf16 %v3439, %v3436
        %v3524 = vpack.c.bf16 %v3445, %v3442
        %v3525 = vpack.c.bf16 %v3451, %v3448
        %v3526 = vpack.c.bf16 %v3457, %v3454
        %s3527 = scalar_lea.vmem %s10, 24
        %v3528 = vld [vmem:[%s3527] sm:$0xf]
        %v3529 = vld [vmem:[%s3527 + $0x4] sm:$0xf]
        %v3530 = vld [vmem:[%s3527 + $0x8] sm:$0xf]
        %v3531 = vld [vmem:[%s3527 + $0xc] sm:$0xf]
        %v3532 = vld [vmem:[%s3527 + $0x10] sm:$0xf]
        %v3533 = vld [vmem:[%s3527 + $0x14] sm:$0xf]
        %v3540 = vunpack.c.l.b16 %v3528
        %v3541 = vunpack.c.l.b16 %v3529
        %v3542 = vunpack.c.l.b16 %v3530
        %v3543 = vunpack.c.l.b16 %v3531
        %v3544 = vunpack.c.l.b16 %v3532
        %v3545 = vunpack.c.l.b16 %v3533
        %v3546 = vpack.c.b16 %v3541, %v3540
        %v3547 = vpack.c.b16 %v3543, %v3542
        %v3548 = vpack.c.b16 %v3545, %v3544
        %v3553 = vsel %vm3395, %v3523, 0
        %v3556 = vsel %vm3395, %v3524, 0
        %v3559 = vsel %vm3395, %v3525, 0
        %v3562 = vsel %vm3395, %v3526, 0
        %3564 = vmatprep.subr.bf16.mxu0 0
        %3565 = vmatpush1.bf16.msra.mxu0 %v3546
        %3566 = vmatprep.subr.bf16.mxu0 0
        %3567 = vmatpush1.bf16.msra.mxu0 %v3547
        %3568 = vmatprep.subr.bf16.mxu0 0
        %3569 = vmatpush1.bf16.msra.mxu0 %v3548
        %3570 = vmatprep.subr.bf16.mxu0 0
        %3571 = vmatpush1.bf16.msra.mxu0 0
        %3572 = vmatprep.subr.bf16.mxu0 0
        %3573 = vmatpush1.bf16.msra.mxu0 0
        %3574 = vmatprep.subr.bf16.mxu0 0
        %3575 = vmatpush1.bf16.msra.mxu0 0
        %3576 = vmatprep.subr.bf16.mxu0 0
        %3577 = vmatpush1.bf16.msra.mxu0 0
        %3578 = vmatprep.subr.bf16.mxu0 0
        %3579 = vmatpush1.bf16.msra.mxu0 0
        %3580 = vmatprep.subr.bf16.mxu0 0
        %3581 = vmatpush1.bf16.msra.mxu0 0
        %3582 = vmatprep.subr.bf16.mxu0 0
        %3583 = vmatpush1.bf16.msra.mxu0 0
        %3584 = vmatprep.subr.bf16.mxu0 0
        %3585 = vmatpush1.bf16.msra.mxu0 0
        %3586 = vmatprep.subr.bf16.mxu0 0
        %3587 = vmatpush1.bf16.msra.mxu0 0
        %3588 = vmatprep.subr.bf16.mxu0 0
        %3589 = vmatpush1.bf16.msra.mxu0 0
        %3590 = vmatprep.subr.bf16.mxu0 0
        %3591 = vmatpush1.bf16.msra.mxu0 0
        %3592 = vmatprep.subr.bf16.mxu0 0
        %3593 = vmatpush1.bf16.msra.mxu0 0
        %3594 = vmatprep.subr.bf16.mxu0 0
        %3595 = vmatpush1.bf16.msra.mxu0 0
        %3596 = vmatprep.mubr.bf16.mxu0 0
        %3597 = vmatmul.mubr.bf16.gmra.mrb[0].mxu0 %v3553
        %v3598 = vpop.f32.mrb[0].mxu0
        %v3599 = vadd.f32 0.0, %v3598
        %v3600 = vpop.f32.mrb[0].mxu0
        %v3601 = vpop.f32.mrb[0].mxu0
        %v3602 = vadd.f32 0.0, %v3601
        %v3603 = vpop.f32.mrb[0].mxu0
        %3604 = vmatprep.mubr.bf16.mxu0 0
        %3605 = vmatmul.mubr.bf16.gmra.mrb[0].mxu0 %v3556
        %v3606 = vpop.f32.mrb[0].mxu0
        %v3607 = vadd.f32 0.0, %v3606
        %v3608 = vpop.f32.mrb[0].mxu0
        %v3609 = vpop.f32.mrb[0].mxu0
        %v3610 = vadd.f32 0.0, %v3609
        %v3611 = vpop.f32.mrb[0].mxu0
        %3612 = vmatprep.mubr.bf16.mxu0 0
        %3613 = vmatmul.mubr.bf16.gmra.mrb[0].mxu0 %v3559
        %v3614 = vpop.f32.mrb[0].mxu0
        %v3615 = vadd.f32 0.0, %v3614
        %v3616 = vpop.f32.mrb[0].mxu0
        %v3617 = vpop.f32.mrb[0].mxu0
        %v3618 = vadd.f32 0.0, %v3617
        %v3619 = vpop.f32.mrb[0].mxu0
        %3620 = vmatprep.mubr.bf16.mxu0 0
        %3621 = vmatmul.mubr.bf16.gmra.mrb[0].mxu0 %v3562
        %v3622 = vpop.f32.mrb[0].mxu0
        %v3623 = vadd.f32 0.0, %v3622
        %v3624 = vpop.f32.mrb[0].mxu0
        %v3625 = vpop.f32.mrb[0].mxu0
        %v3626 = vadd.f32 0.0, %v3625
        %v3627 = vpop.f32.mrb[0].mxu0
        %3628 = vdwg.mxu0
        %v3635 = vunpack.c.l.b16 %v3517
        %v3636 = vunpack.c.l.b16 %v3518
        %v3637 = vunpack.c.l.b16 %v3519
        %v3638 = vunpack.c.l.b16 %v3520
        %v3639 = vunpack.c.l.b16 %v3521
        %v3640 = vunpack.c.l.b16 %v3522
        %v3641 = vpack.c.b16 %v3636, %v3635
        %v3642 = vpack.c.b16 %v3638, %v3637
        %v3643 = vpack.c.b16 %v3640, %v3639
        %v3648 = vsel %vm3395, %v3513, 0
        %v3651 = vsel %vm3395, %v3514, 0
        %v3654 = vsel %vm3395, %v3515, 0
        %v3657 = vsel %vm3395, %v3516, 0
        %3659 = vmatprep.subr.bf16.mxu0 0
        %3660 = vmatpush1.bf16.msra.mxu0 %v3641
        %3661 = vmatprep.subr.bf16.mxu0 0
        %3662 = vmatpush1.bf16.msra.mxu0 %v3642
        %3663 = vmatprep.subr.bf16.mxu0 0
        %3664 = vmatpush1.bf16.msra.mxu0 %v3643
        %3665 = vmatprep.subr.bf16.mxu0 0
        %3666 = vmatpush1.bf16.msra.mxu0 0
        %3667 = vmatprep.subr.bf16.mxu0 0
        %3668 = vmatpush1.bf16.msra.mxu0 0
        %3669 = vmatprep.subr.bf16.mxu0 0
        %3670 = vmatpush1.bf16.msra.mxu0 0
        %3671 = vmatprep.subr.bf16.mxu0 0
        %3672 = vmatpush1.bf16.msra.mxu0 0
        %3673 = vmatprep.subr.bf16.mxu0 0
        %3674 = vmatpush1.bf16.msra.mxu0 0
        %3675 = vmatprep.subr.bf16.mxu0 0
        %3676 = vmatpush1.bf16.msra.mxu0 0
        %3677 = vmatprep.subr.bf16.mxu0 0
        %3678 = vmatpush1.bf16.msra.mxu0 0
        %3679 = vmatprep.subr.bf16.mxu0 0
        %3680 = vmatpush1.bf16.msra.mxu0 0
        %3681 = vmatprep.subr.bf16.mxu0 0
        %3682 = vmatpush1.bf16.msra.mxu0 0
        %3683 = vmatprep.subr.bf16.mxu0 0
        %3684 = vmatpush1.bf16.msra.mxu0 0
        %3685 = vmatprep.subr.bf16.mxu0 0
        %3686 = vmatpush1.bf16.msra.mxu0 0
        %3687 = vmatprep.subr.bf16.mxu0 0
        %3688 = vmatpush1.bf16.msra.mxu0 0
        %3689 = vmatprep.subr.bf16.mxu0 0
        %3690 = vmatpush1.bf16.msra.mxu0 0
        %3691 = vmatprep.mubr.bf16.mxu0 0
        %3692 = vmatmul.mubr.bf16.gmra.mrb[0].mxu0 %v3648
        %v3693 = vpop.f32.mrb[0].mxu0
        %v3694 = vadd.f32 %v3599, %v3693
        %v3695 = vpop.f32.mrb[0].mxu0
        %v3696 = vpop.f32.mrb[0].mxu0
        %v3697 = vadd.f32 %v3602, %v3696
        %v3698 = vpop.f32.mrb[0].mxu0
        %3699 = vmatprep.mubr.bf16.mxu0 0
        %3700 = vmatmul.mubr.bf16.gmra.mrb[0].mxu0 %v3651
        %v3701 = vpop.f32.mrb[0].mxu0
        %v3702 = vadd.f32 %v3607, %v3701
        %v3703 = vpop.f32.mrb[0].mxu0
        %v3704 = vpop.f32.mrb[0].mxu0
        %v3705 = vadd.f32 %v3610, %v3704
        %v3706 = vpop.f32.mrb[0].mxu0
        %3707 = vmatprep.mubr.bf16.mxu0 0
        %3708 = vmatmul.mubr.bf16.gmra.mrb[0].mxu0 %v3654
        %v3709 = vpop.f32.mrb[0].mxu0
        %v3710 = vadd.f32 %v3615, %v3709
        %v3711 = vpop.f32.mrb[0].mxu0
        %v3712 = vpop.f32.mrb[0].mxu0
        %v3713 = vadd.f32 %v3618, %v3712
        %v3714 = vpop.f32.mrb[0].mxu0
        %3715 = vmatprep.mubr.bf16.mxu0 0
        %3716 = vmatmul.mubr.bf16.gmra.mrb[0].mxu0 %v3657
        %v3717 = vpop.f32.mrb[0].mxu0
        %v3718 = vadd.f32 %v3623, %v3717
        %v3719 = vpop.f32.mrb[0].mxu0
        %v3720 = vpop.f32.mrb[0].mxu0
        %v3721 = vadd.f32 %v3626, %v3720
        %v3722 = vpop.f32.mrb[0].mxu0
        %3723 = vdwg.mxu0
        %v3732 = vrot.slane %v3436, 1
        %v3733 = vrot.slane %v3437, 1
        %v3734 = vsel %vm1455, %v3732, %v3733
        %v3735 = vrot.slane %v3439, 1
        %v3736 = vrot.slane %v3440, 1
        %v3737 = vsel %vm1455, %v3735, %v3736
        %v3738 = vrot.slane %v3442, 1
        %v3739 = vrot.slane %v3443, 1
        %v3740 = vsel %vm1455, %v3738, %v3739
        %v3741 = vrot.slane %v3445, 1
        %v3742 = vrot.slane %v3446, 1
        %v3743 = vsel %vm1455, %v3741, %v3742
        %v3744 = vrot.slane %v3448, 1
        %v3745 = vrot.slane %v3449, 1
        %v3746 = vsel %vm1455, %v3744, %v3745
        %v3747 = vrot.slane %v3451, 1
        %v3748 = vrot.slane %v3452, 1
        %v3749 = vsel %vm1455, %v3747, %v3748
        %v3750 = vrot.slane %v3454, 1
        %v3751 = vrot.slane %v3455, 1
        %v3752 = vsel %vm1455, %v3750, %v3751
        %v3753 = vrot.slane %v3457, 1
        %v3754 = vrot.slane %v3458, 1
        %v3755 = vsel %vm1455, %v3753, %v3754
        %v3764 = vpack.c.bf16 %v3737, %v3734
        %v3765 = vpack.c.bf16 %v3743, %v3740
        %v3766 = vpack.c.bf16 %v3749, %v3746
        %v3767 = vpack.c.bf16 %v3755, %v3752
        %s3768 = scalar_lea.vmem %s10, 48
        %v3769 = vld [vmem:[%s3768] sm:$0xf]
        %v3770 = vld [vmem:[%s3768 + $0x4] sm:$0xf]
        %v3771 = vld [vmem:[%s3768 + $0x8] sm:$0xf]
        %v3772 = vld [vmem:[%s3768 + $0xc] sm:$0xf]
        %v3773 = vld [vmem:[%s3768 + $0x10] sm:$0xf]
        %v3774 = vld [vmem:[%s3768 + $0x14] sm:$0xf]
        %v3781 = vunpack.c.l.b16 %v3769
        %v3782 = vunpack.c.l.b16 %v3770
        %v3783 = vunpack.c.l.b16 %v3771
        %v3784 = vunpack.c.l.b16 %v3772
        %v3785 = vunpack.c.l.b16 %v3773
        %v3786 = vunpack.c.l.b16 %v3774
        %v3787 = vpack.c.b16 %v3782, %v3781
        %v3788 = vpack.c.b16 %v3784, %v3783
        %v3789 = vpack.c.b16 %v3786, %v3785
        %v3794 = vsel %vm3395, %v3764, 0
        %v3797 = vsel %vm3395, %v3765, 0
        %v3800 = vsel %vm3395, %v3766, 0
        %v3803 = vsel %vm3395, %v3767, 0
        %3805 = vmatprep.subr.bf16.mxu0 0
        %3806 = vmatpush1.bf16.msra.mxu0 %v3787
        %3807 = vmatprep.subr.bf16.mxu0 0
        %3808 = vmatpush1.bf16.msra.mxu0 %v3788
        %3809 = vmatprep.subr.bf16.mxu0 0
        %3810 = vmatpush1.bf16.msra.mxu0 %v3789
        %3811 = vmatprep.subr.bf16.mxu0 0
        %3812 = vmatpush1.bf16.msra.mxu0 0
        %3813 = vmatprep.subr.bf16.mxu0 0
        %3814 = vmatpush1.bf16.msra.mxu0 0
        %3815 = vmatprep.subr.bf16.mxu0 0
        %3816 = vmatpush1.bf16.msra.mxu0 0
        %3817 = vmatprep.subr.bf16.mxu0 0
        %3818 = vmatpush1.bf16.msra.mxu0 0
        %3819 = vmatprep.subr.bf16.mxu0 0
        %3820 = vmatpush1.bf16.msra.mxu0 0
        %3821 = vmatprep.subr.bf16.mxu0 0
        %3822 = vmatpush1.bf16.msra.mxu0 0
        %3823 = vmatprep.subr.bf16.mxu0 0
        %3824 = vmatpush1.bf16.msra.mxu0 0
        %3825 = vmatprep.subr.bf16.mxu0 0
        %3826 = vmatpush1.bf16.msra.mxu0 0
        %3827 = vmatprep.subr.bf16.mxu0 0
        %3828 = vmatpush1.bf16.msra.mxu0 0
        %3829 = vmatprep.subr.bf16.mxu0 0
        %3830 = vmatpush1.bf16.msra.mxu0 0
        %3831 = vmatprep.subr.bf16.mxu0 0
        %3832 = vmatpush1.bf16.msra.mxu0 0
        %3833 = vmatprep.subr.bf16.mxu0 0
        %3834 = vmatpush1.bf16.msra.mxu0 0
        %3835 = vmatprep.subr.bf16.mxu0 0
        %3836 = vmatpush1.bf16.msra.mxu0 0
        %3837 = vmatprep.mubr.bf16.mxu0 0
        %3838 = vmatmul.mubr.bf16.gmra.mrb[0].mxu0 %v3794
        %v3839 = vpop.f32.mrb[0].mxu0
        %v3840 = vadd.f32 0.0, %v3839
        %v3841 = vpop.f32.mrb[0].mxu0
        %v3842 = vpop.f32.mrb[0].mxu0
        %v3843 = vadd.f32 0.0, %v3842
        %v3844 = vpop.f32.mrb[0].mxu0
        %3845 = vmatprep.mubr.bf16.mxu0 0
        %3846 = vmatmul.mubr.bf16.gmra.mrb[0].mxu0 %v3797
        %v3847 = vpop.f32.mrb[0].mxu0
        %v3848 = vadd.f32 0.0, %v3847
        %v3849 = vpop.f32.mrb[0].mxu0
        %v3850 = vpop.f32.mrb[0].mxu0
        %v3851 = vadd.f32 0.0, %v3850
        %v3852 = vpop.f32.mrb[0].mxu0
        %3853 = vmatprep.mubr.bf16.mxu0 0
        %3854 = vmatmul.mubr.bf16.gmra.mrb[0].mxu0 %v3800
        %v3855 = vpop.f32.mrb[0].mxu0
        %v3856 = vadd.f32 0.0, %v3855
        %v3857 = vpop.f32.mrb[0].mxu0
        %v3858 = vpop.f32.mrb[0].mxu0
        %v3859 = vadd.f32 0.0, %v3858
        %v3860 = vpop.f32.mrb[0].mxu0
        %3861 = vmatprep.mubr.bf16.mxu0 0
        %3862 = vmatmul.mubr.bf16.gmra.mrb[0].mxu0 %v3803
        %v3863 = vpop.f32.mrb[0].mxu0
        %v3864 = vadd.f32 0.0, %v3863
        %v3865 = vpop.f32.mrb[0].mxu0
        %v3866 = vpop.f32.mrb[0].mxu0
        %v3867 = vadd.f32 0.0, %v3866
        %v3868 = vpop.f32.mrb[0].mxu0
        %3869 = vdwg.mxu0
        %v3870 = vadd.f32 %v3694, %v3840
        %v3871 = vadd.f32 %v3697, %v3843
        %v3872 = vadd.f32 %v3702, %v3848
        %v3873 = vadd.f32 %v3705, %v3851
        %v3874 = vadd.f32 %v3710, %v3856
        %v3875 = vadd.f32 %v3713, %v3859
        %v3876 = vadd.f32 %v3718, %v3864
        %v3877 = vadd.f32 %v3721, %v3867
        %v3880 = vrot.slane %v3459, 7
        %v3881 = vrot.slane %v3460, 7
        %v3882 = vsel %vm1219, %v3880, %v3881
        %v3884 = vpack.c.bf16 %v3489, %v3486
        %v3885 = vpack.c.bf16 %v3495, %v3492
        %v3886 = vpack.c.bf16 %v3501, %v3498
        %v3887 = vpack.c.bf16 %v3882, %v3504
        %s3888 = scalar_lea.vmem %s10, 72
        %v3889 = vld [vmem:[%s3888] sm:$0xf]
        %v3890 = vld [vmem:[%s3888 + $0x4] sm:$0xf]
        %v3891 = vld [vmem:[%s3888 + $0x8] sm:$0xf]
        %v3892 = vld [vmem:[%s3888 + $0xc] sm:$0xf]
        %v3893 = vld [vmem:[%s3888 + $0x10] sm:$0xf]
        %v3894 = vld [vmem:[%s3888 + $0x14] sm:$0xf]
        %v3901 = vunpack.c.l.b16 %v3889
        %v3902 = vunpack.c.l.b16 %v3890
        %v3903 = vunpack.c.l.b16 %v3891
        %v3904 = vunpack.c.l.b16 %v3892
        %v3905 = vunpack.c.l.b16 %v3893
        %v3906 = vunpack.c.l.b16 %v3894
        %v3907 = vpack.c.b16 %v3902, %v3901
        %v3908 = vpack.c.b16 %v3904, %v3903
        %v3909 = vpack.c.b16 %v3906, %v3905
        %v3914 = vsel %vm3395, %v3884, 0
        %v3917 = vsel %vm3395, %v3885, 0
        %v3920 = vsel %vm3395, %v3886, 0
        %v3923 = vsel %vm3395, %v3887, 0
        %3925 = vmatprep.subr.bf16.mxu0 0
        %3926 = vmatpush1.bf16.msra.mxu0 %v3907
        %3927 = vmatprep.subr.bf16.mxu0 0
        %3928 = vmatpush1.bf16.msra.mxu0 %v3908
        %3929 = vmatprep.subr.bf16.mxu0 0
        %3930 = vmatpush1.bf16.msra.mxu0 %v3909
        %3931 = vmatprep.subr.bf16.mxu0 0
        %3932 = vmatpush1.bf16.msra.mxu0 0
        %3933 = vmatprep.subr.bf16.mxu0 0
        %3934 = vmatpush1.bf16.msra.mxu0 0
        %3935 = vmatprep.subr.bf16.mxu0 0
        %3936 = vmatpush1.bf16.msra.mxu0 0
        %3937 = vmatprep.subr.bf16.mxu0 0
        %3938 = vmatpush1.bf16.msra.mxu0 0
        %3939 = vmatprep.subr.bf16.mxu0 0
        %3940 = vmatpush1.bf16.msra.mxu0 0
        %3941 = vmatprep.subr.bf16.mxu0 0
        %3942 = vmatpush1.bf16.msra.mxu0 0
        %3943 = vmatprep.subr.bf16.mxu0 0
        %3944 = vmatpush1.bf16.msra.mxu0 0
        %3945 = vmatprep.subr.bf16.mxu0 0
        %3946 = vmatpush1.bf16.msra.mxu0 0
        %3947 = vmatprep.subr.bf16.mxu0 0
        %3948 = vmatpush1.bf16.msra.mxu0 0
        %3949 = vmatprep.subr.bf16.mxu0 0
        %3950 = vmatpush1.bf16.msra.mxu0 0
        %3951 = vmatprep.subr.bf16.mxu0 0
        %3952 = vmatpush1.bf16.msra.mxu0 0
        %3953 = vmatprep.subr.bf16.mxu0 0
        %3954 = vmatpush1.bf16.msra.mxu0 0
        %3955 = vmatprep.subr.bf16.mxu0 0
        %3956 = vmatpush1.bf16.msra.mxu0 0
        %3957 = vmatprep.mubr.bf16.mxu0 0
        %3958 = vmatmul.mubr.bf16.gmra.mrb[0].mxu0 %v3914
        %v3959 = vpop.f32.mrb[0].mxu0
        %v3960 = vadd.f32 0.0, %v3959
        %v3961 = vpop.f32.mrb[0].mxu0
        %v3962 = vpop.f32.mrb[0].mxu0
        %v3963 = vadd.f32 0.0, %v3962
        %v3964 = vpop.f32.mrb[0].mxu0
        %3965 = vmatprep.mubr.bf16.mxu0 0
        %3966 = vmatmul.mubr.bf16.gmra.mrb[0].mxu0 %v3917
        %v3967 = vpop.f32.mrb[0].mxu0
        %v3968 = vadd.f32 0.0, %v3967
        %v3969 = vpop.f32.mrb[0].mxu0
        %v3970 = vpop.f32.mrb[0].mxu0
        %v3971 = vadd.f32 0.0, %v3970
        %v3972 = vpop.f32.mrb[0].mxu0
        %3973 = vmatprep.mubr.bf16.mxu0 0
        %3974 = vmatmul.mubr.bf16.gmra.mrb[0].mxu0 %v3920
        %v3975 = vpop.f32.mrb[0].mxu0
        %v3976 = vadd.f32 0.0, %v3975
        %v3977 = vpop.f32.mrb[0].mxu0
        %v3978 = vpop.f32.mrb[0].mxu0
        %v3979 = vadd.f32 0.0, %v3978
        %v3980 = vpop.f32.mrb[0].mxu0
        %3981 = vmatprep.mubr.bf16.mxu0 0
        %3982 = vmatmul.mubr.bf16.gmra.mrb[0].mxu0 %v3923
        %v3983 = vpop.f32.mrb[0].mxu0
        %v3984 = vadd.f32 0.0, %v3983
        %v3985 = vpop.f32.mrb[0].mxu0
        %v3986 = vpop.f32.mrb[0].mxu0
        %v3987 = vadd.f32 0.0, %v3986
        %v3988 = vpop.f32.mrb[0].mxu0
        %3989 = vdwg.mxu0
        %v3990 = vadd.f32 %v3870, %v3960
        %v3991 = vadd.f32 %v3871, %v3963
        %v3992 = vadd.f32 %v3872, %v3968
        %v3993 = vadd.f32 %v3873, %v3971
        %v3994 = vadd.f32 %v3874, %v3976
        %v3995 = vadd.f32 %v3875, %v3979
        %v3996 = vadd.f32 %v3876, %v3984
        %v3997 = vadd.f32 %v3877, %v3987
        %v3998 = vpack.c.bf16 %v3442, %v3439
        %v3999 = vpack.c.bf16 %v3448, %v3445
        %v4000 = vpack.c.bf16 %v3454, %v3451
        %v4001 = vpack.c.bf16 %v3460, %v3457
        %s4002 = scalar_lea.vmem %s10, 96
        %v4003 = vld [vmem:[%s4002] sm:$0xf]
        %v4004 = vld [vmem:[%s4002 + $0x4] sm:$0xf]
        %v4005 = vld [vmem:[%s4002 + $0x8] sm:$0xf]
        %v4006 = vld [vmem:[%s4002 + $0xc] sm:$0xf]
        %v4007 = vld [vmem:[%s4002 + $0x10] sm:$0xf]
        %v4008 = vld [vmem:[%s4002 + $0x14] sm:$0xf]
        %v4015 = vunpack.c.l.b16 %v4003
        %v4016 = vunpack.c.l.b16 %v4004
        %v4017 = vunpack.c.l.b16 %v4005
        %v4018 = vunpack.c.l.b16 %v4006
        %v4019 = vunpack.c.l.b16 %v4007
        %v4020 = vunpack.c.l.b16 %v4008
        %v4021 = vpack.c.b16 %v4016, %v4015
        %v4022 = vpack.c.b16 %v4018, %v4017
        %v4023 = vpack.c.b16 %v4020, %v4019
        %v4028 = vsel %vm3395, %v3998, 0
        %v4031 = vsel %vm3395, %v3999, 0
        %v4034 = vsel %vm3395, %v4000, 0
        %v4037 = vsel %vm3395, %v4001, 0
        %4039 = vmatprep.subr.bf16.mxu0 0
        %4040 = vmatpush1.bf16.msra.mxu0 %v4021
        %4041 = vmatprep.subr.bf16.mxu0 0
        %4042 = vmatpush1.bf16.msra.mxu0 %v4022
        %4043 = vmatprep.subr.bf16.mxu0 0
        %4044 = vmatpush1.bf16.msra.mxu0 %v4023
        %4045 = vmatprep.subr.bf16.mxu0 0
        %4046 = vmatpush1.bf16.msra.mxu0 0
        %4047 = vmatprep.subr.bf16.mxu0 0
        %4048 = vmatpush1.bf16.msra.mxu0 0
        %4049 = vmatprep.subr.bf16.mxu0 0
        %4050 = vmatpush1.bf16.msra.mxu0 0
        %4051 = vmatprep.subr.bf16.mxu0 0
        %4052 = vmatpush1.bf16.msra.mxu0 0
        %4053 = vmatprep.subr.bf16.mxu0 0
        %4054 = vmatpush1.bf16.msra.mxu0 0
        %4055 = vmatprep.subr.bf16.mxu0 0
        %4056 = vmatpush1.bf16.msra.mxu0 0
        %4057 = vmatprep.subr.bf16.mxu0 0
        %4058 = vmatpush1.bf16.msra.mxu0 0
        %4059 = vmatprep.subr.bf16.mxu0 0
        %4060 = vmatpush1.bf16.msra.mxu0 0
        %4061 = vmatprep.subr.bf16.mxu0 0
        %4062 = vmatpush1.bf16.msra.mxu0 0
        %4063 = vmatprep.subr.bf16.mxu0 0
        %4064 = vmatpush1.bf16.msra.mxu0 0
        %4065 = vmatprep.subr.bf16.mxu0 0
        %4066 = vmatpush1.bf16.msra.mxu0 0
        %4067 = vmatprep.subr.bf16.mxu0 0
        %4068 = vmatpush1.bf16.msra.mxu0 0
        %4069 = vmatprep.subr.bf16.mxu0 0
        %4070 = vmatpush1.bf16.msra.mxu0 0
        %4071 = vmatprep.mubr.bf16.mxu0 0
        %4072 = vmatmul.mubr.bf16.gmra.mrb[0].mxu0 %v4028
        %v4073 = vpop.f32.mrb[0].mxu0
        %v4074 = vadd.f32 0.0, %v4073
        %v4075 = vpop.f32.mrb[0].mxu0
        %v4076 = vpop.f32.mrb[0].mxu0
        %v4077 = vadd.f32 0.0, %v4076
        %v4078 = vpop.f32.mrb[0].mxu0
        %4079 = vmatprep.mubr.bf16.mxu0 0
        %4080 = vmatmul.mubr.bf16.gmra.mrb[0].mxu0 %v4031
        %v4081 = vpop.f32.mrb[0].mxu0
        %v4082 = vadd.f32 0.0, %v4081
        %v4083 = vpop.f32.mrb[0].mxu0
        %v4084 = vpop.f32.mrb[0].mxu0
        %v4085 = vadd.f32 0.0, %v4084
        %v4086 = vpop.f32.mrb[0].mxu0
        %4087 = vmatprep.mubr.bf16.mxu0 0
        %4088 = vmatmul.mubr.bf16.gmra.mrb[0].mxu0 %v4034
        %v4089 = vpop.f32.mrb[0].mxu0
        %v4090 = vadd.f32 0.0, %v4089
        %v4091 = vpop.f32.mrb[0].mxu0
        %v4092 = vpop.f32.mrb[0].mxu0
        %v4093 = vadd.f32 0.0, %v4092
        %v4094 = vpop.f32.mrb[0].mxu0
        %4095 = vmatprep.mubr.bf16.mxu0 0
        %4096 = vmatmul.mubr.bf16.gmra.mrb[0].mxu0 %v4037
        %v4097 = vpop.f32.mrb[0].mxu0
        %v4098 = vadd.f32 0.0, %v4097
        %v4099 = vpop.f32.mrb[0].mxu0
        %v4100 = vpop.f32.mrb[0].mxu0
        %v4101 = vadd.f32 0.0, %v4100
        %v4102 = vpop.f32.mrb[0].mxu0
        %4103 = vdwg.mxu0
        %v4104 = vadd.f32 %v3990, %v4074
        %v4105 = vadd.f32 %v3991, %v4077
        %v4106 = vadd.f32 %v3992, %v4082
        %v4107 = vadd.f32 %v3993, %v4085
        %v4108 = vadd.f32 %v3994, %v4090
        %v4109 = vadd.f32 %v3995, %v4093
        %v4110 = vadd.f32 %v3996, %v4098
        %v4111 = vadd.f32 %v3997, %v4101
        %v4113 = vrot.slane %v3460, 1
        %v4114 = vrot.slane %v3461, 1
        %v4115 = vsel %vm1455, %v4113, %v4114
        %v4117 = vpack.c.bf16 %v3740, %v3737
        %v4118 = vpack.c.bf16 %v3746, %v3743
        %v4119 = vpack.c.bf16 %v3752, %v3749
        %v4120 = vpack.c.bf16 %v4115, %v3755
        %s4121 = scalar_lea.vmem %s10, 120
        %v4122 = vld [vmem:[%s4121] sm:$0xf]
        %v4123 = vld [vmem:[%s4121 + $0x4] sm:$0xf]
        %v4124 = vld [vmem:[%s4121 + $0x8] sm:$0xf]
        %v4125 = vld [vmem:[%s4121 + $0xc] sm:$0xf]
        %v4126 = vld [vmem:[%s4121 + $0x10] sm:$0xf]
        %v4127 = vld [vmem:[%s4121 + $0x14] sm:$0xf]
        %v4134 = vunpack.c.l.b16 %v4122
        %v4135 = vunpack.c.l.b16 %v4123
        %v4136 = vunpack.c.l.b16 %v4124
        %v4137 = vunpack.c.l.b16 %v4125
        %v4138 = vunpack.c.l.b16 %v4126
        %v4139 = vunpack.c.l.b16 %v4127
        %v4140 = vpack.c.b16 %v4135, %v4134
        %v4141 = vpack.c.b16 %v4137, %v4136
        %v4142 = vpack.c.b16 %v4139, %v4138
        %v4147 = vsel %vm3395, %v4117, 0
        %v4150 = vsel %vm3395, %v4118, 0
        %v4153 = vsel %vm3395, %v4119, 0
        %v4156 = vsel %vm3395, %v4120, 0
        %4158 = vmatprep.subr.bf16.mxu0 0
        %4159 = vmatpush1.bf16.msra.mxu0 %v4140
        %4160 = vmatprep.subr.bf16.mxu0 0
        %4161 = vmatpush1.bf16.msra.mxu0 %v4141
        %4162 = vmatprep.subr.bf16.mxu0 0
        %4163 = vmatpush1.bf16.msra.mxu0 %v4142
        %4164 = vmatprep.subr.bf16.mxu0 0
        %4165 = vmatpush1.bf16.msra.mxu0 0
        %4166 = vmatprep.subr.bf16.mxu0 0
        %4167 = vmatpush1.bf16.msra.mxu0 0
        %4168 = vmatprep.subr.bf16.mxu0 0
        %4169 = vmatpush1.bf16.msra.mxu0 0
        %4170 = vmatprep.subr.bf16.mxu0 0
        %4171 = vmatpush1.bf16.msra.mxu0 0
        %4172 = vmatprep.subr.bf16.mxu0 0
        %4173 = vmatpush1.bf16.msra.mxu0 0
        %4174 = vmatprep.subr.bf16.mxu0 0
        %4175 = vmatpush1.bf16.msra.mxu0 0
        %4176 = vmatprep.subr.bf16.mxu0 0
        %4177 = vmatpush1.bf16.msra.mxu0 0
        %4178 = vmatprep.subr.bf16.mxu0 0
        %4179 = vmatpush1.bf16.msra.mxu0 0
        %4180 = vmatprep.subr.bf16.mxu0 0
        %4181 = vmatpush1.bf16.msra.mxu0 0
        %4182 = vmatprep.subr.bf16.mxu0 0
        %4183 = vmatpush1.bf16.msra.mxu0 0
        %4184 = vmatprep.subr.bf16.mxu0 0
        %4185 = vmatpush1.bf16.msra.mxu0 0
        %4186 = vmatprep.subr.bf16.mxu0 0
        %4187 = vmatpush1.bf16.msra.mxu0 0
        %4188 = vmatprep.subr.bf16.mxu0 0
        %4189 = vmatpush1.bf16.msra.mxu0 0
        %4190 = vmatprep.mubr.bf16.mxu0 0
        %4191 = vmatmul.mubr.bf16.gmra.mrb[0].mxu0 %v4147
        %v4192 = vpop.f32.mrb[0].mxu0
        %v4193 = vadd.f32 0.0, %v4192
        %v4194 = vpop.f32.mrb[0].mxu0
        %v4195 = vpop.f32.mrb[0].mxu0
        %v4196 = vadd.f32 0.0, %v4195
        %v4197 = vpop.f32.mrb[0].mxu0
        %4198 = vmatprep.mubr.bf16.mxu0 0
        %4199 = vmatmul.mubr.bf16.gmra.mrb[0].mxu0 %v4150
        %v4200 = vpop.f32.mrb[0].mxu0
        %v4201 = vadd.f32 0.0, %v4200
        %v4202 = vpop.f32.mrb[0].mxu0
        %v4203 = vpop.f32.mrb[0].mxu0
        %v4204 = vadd.f32 0.0, %v4203
        %v4205 = vpop.f32.mrb[0].mxu0
        %4206 = vmatprep.mubr.bf16.mxu0 0
        %4207 = vmatmul.mubr.bf16.gmra.mrb[0].mxu0 %v4153
        %v4208 = vpop.f32.mrb[0].mxu0
        %v4209 = vadd.f32 0.0, %v4208
        %v4210 = vpop.f32.mrb[0].mxu0
        %v4211 = vpop.f32.mrb[0].mxu0
        %v4212 = vadd.f32 0.0, %v4211
        %v4213 = vpop.f32.mrb[0].mxu0
        %4214 = vmatprep.mubr.bf16.mxu0 0
        %4215 = vmatmul.mubr.bf16.gmra.mrb[0].mxu0 %v4156
        %v4216 = vpop.f32.mrb[0].mxu0
        %v4217 = vadd.f32 0.0, %v4216
        %v4218 = vpop.f32.mrb[0].mxu0
        %v4219 = vpop.f32.mrb[0].mxu0
        %v4220 = vadd.f32 0.0, %v4219
        %v4221 = vpop.f32.mrb[0].mxu0
        %4222 = vdwg.mxu0
        %v4223 = vadd.f32 %v4104, %v4193
        %v4224 = vadd.f32 %v4105, %v4196
        %v4225 = vadd.f32 %v4106, %v4201
        %v4226 = vadd.f32 %v4107, %v4204
        %v4227 = vadd.f32 %v4108, %v4209
        %v4228 = vadd.f32 %v4109, %v4212
        %v4229 = vadd.f32 %v4110, %v4217
        %v4230 = vadd.f32 %v4111, %v4220
        %v4233 = vrot.slane %v3462, 7
        %v4234 = vrot.slane %v3463, 7
        %v4235 = vsel %vm1219, %v4233, %v4234
        %v4237 = vpack.c.bf16 %v4235, %v3882
        %s4238 = scalar_lea.vmem %s10, 144
        %v4239 = vld [vmem:[%s4238] sm:$0xf]
        %v4240 = vld [vmem:[%s4238 + $0x4] sm:$0xf]
        %v4241 = vld [vmem:[%s4238 + $0x8] sm:$0xf]
        %v4242 = vld [vmem:[%s4238 + $0xc] sm:$0xf]
        %v4243 = vld [vmem:[%s4238 + $0x10] sm:$0xf]
        %v4244 = vld [vmem:[%s4238 + $0x14] sm:$0xf]
        %v4251 = vunpack.c.l.b16 %v4239
        %v4252 = vunpack.c.l.b16 %v4240
        %v4253 = vunpack.c.l.b16 %v4241
        %v4254 = vunpack.c.l.b16 %v4242
        %v4255 = vunpack.c.l.b16 %v4243
        %v4256 = vunpack.c.l.b16 %v4244
        %v4257 = vpack.c.b16 %v4252, %v4251
        %v4258 = vpack.c.b16 %v4254, %v4253
        %v4259 = vpack.c.b16 %v4256, %v4255
        %v4264 = vsel %vm3395, %v4237, 0
        %4266 = vmatprep.subr.bf16.mxu0 0
        %4267 = vmatpush1.bf16.msra.mxu0 %v4257
        %4268 = vmatprep.subr.bf16.mxu0 0
        %4269 = vmatpush1.bf16.msra.mxu0 %v4258
        %4270 = vmatprep.subr.bf16.mxu0 0
        %4271 = vmatpush1.bf16.msra.mxu0 %v4259
        %4272 = vmatprep.subr.bf16.mxu0 0
        %4273 = vmatpush1.bf16.msra.mxu0 0
        %4274 = vmatprep.subr.bf16.mxu0 0
        %4275 = vmatpush1.bf16.msra.mxu0 0
        %4276 = vmatprep.subr.bf16.mxu0 0
        %4277 = vmatpush1.bf16.msra.mxu0 0
        %4278 = vmatprep.subr.bf16.mxu0 0
        %4279 = vmatpush1.bf16.msra.mxu0 0
        %4280 = vmatprep.subr.bf16.mxu0 0
        %4281 = vmatpush1.bf16.msra.mxu0 0
        %4282 = vmatprep.subr.bf16.mxu0 0
        %4283 = vmatpush1.bf16.msra.mxu0 0
        %4284 = vmatprep.subr.bf16.mxu0 0
        %4285 = vmatpush1.bf16.msra.mxu0 0
        %4286 = vmatprep.subr.bf16.mxu0 0
        %4287 = vmatpush1.bf16.msra.mxu0 0
        %4288 = vmatprep.subr.bf16.mxu0 0
        %4289 = vmatpush1.bf16.msra.mxu0 0
        %4290 = vmatprep.subr.bf16.mxu0 0
        %4291 = vmatpush1.bf16.msra.mxu0 0
        %4292 = vmatprep.subr.bf16.mxu0 0
        %4293 = vmatpush1.bf16.msra.mxu0 0
        %4294 = vmatprep.subr.bf16.mxu0 0
        %4295 = vmatpush1.bf16.msra.mxu0 0
        %4296 = vmatprep.subr.bf16.mxu0 0
        %4297 = vmatpush1.bf16.msra.mxu0 0
        %4298 = vmatprep.mubr.bf16.mxu0 0
        %4299 = vmatmul.mubr.bf16.gmra.mrb[0].mxu0 %v3651
        %v4300 = vpop.f32.mrb[0].mxu0
        %v4301 = vadd.f32 0.0, %v4300
        %v4302 = vpop.f32.mrb[0].mxu0
        %v4303 = vpop.f32.mrb[0].mxu0
        %v4304 = vadd.f32 0.0, %v4303
        %v4305 = vpop.f32.mrb[0].mxu0
        %4306 = vmatprep.mubr.bf16.mxu0 0
        %4307 = vmatmul.mubr.bf16.gmra.mrb[0].mxu0 %v3654
        %v4308 = vpop.f32.mrb[0].mxu0
        %v4309 = vadd.f32 0.0, %v4308
        %v4310 = vpop.f32.mrb[0].mxu0
        %v4311 = vpop.f32.mrb[0].mxu0
        %v4312 = vadd.f32 0.0, %v4311
        %v4313 = vpop.f32.mrb[0].mxu0
        %4314 = vmatprep.mubr.bf16.mxu0 0
        %4315 = vmatmul.mubr.bf16.gmra.mrb[0].mxu0 %v3657
        %v4316 = vpop.f32.mrb[0].mxu0
        %v4317 = vadd.f32 0.0, %v4316
        %v4318 = vpop.f32.mrb[0].mxu0
        %v4319 = vpop.f32.mrb[0].mxu0
        %v4320 = vadd.f32 0.0, %v4319
        %v4321 = vpop.f32.mrb[0].mxu0
        %4322 = vmatprep.mubr.bf16.mxu0 0
        %4323 = vmatmul.mubr.bf16.gmra.mrb[0].mxu0 %v4264
        %v4324 = vpop.f32.mrb[0].mxu0
        %v4325 = vadd.f32 0.0, %v4324
        %v4326 = vpop.f32.mrb[0].mxu0
        %v4327 = vpop.f32.mrb[0].mxu0
        %v4328 = vadd.f32 0.0, %v4327
        %v4329 = vpop.f32.mrb[0].mxu0
        %4330 = vdwg.mxu0
        %v4331 = vadd.f32 %v4223, %v4301
        %v4332 = vadd.f32 %v4224, %v4304
        %v4333 = vadd.f32 %v4225, %v4309
        %v4334 = vadd.f32 %v4226, %v4312
        %v4335 = vadd.f32 %v4227, %v4317
        %v4336 = vadd.f32 %v4228, %v4320
        %v4337 = vadd.f32 %v4229, %v4325
        %v4338 = vadd.f32 %v4230, %v4328
        %v4339 = vpack.c.bf16 %v3463, %v3460
        %s4340 = scalar_lea.vmem %s10, 168
        %v4341 = vld [vmem:[%s4340] sm:$0xf]
        %v4342 = vld [vmem:[%s4340 + $0x4] sm:$0xf]
        %v4343 = vld [vmem:[%s4340 + $0x8] sm:$0xf]
        %v4344 = vld [vmem:[%s4340 + $0xc] sm:$0xf]
        %v4345 = vld [vmem:[%s4340 + $0x10] sm:$0xf]
        %v4346 = vld [vmem:[%s4340 + $0x14] sm:$0xf]
        %v4353 = vunpack.c.l.b16 %v4341
        %v4354 = vunpack.c.l.b16 %v4342
        %v4355 = vunpack.c.l.b16 %v4343
        %v4356 = vunpack.c.l.b16 %v4344
        %v4357 = vunpack.c.l.b16 %v4345
        %v4358 = vunpack.c.l.b16 %v4346
        %v4359 = vpack.c.b16 %v4354, %v4353
        %v4360 = vpack.c.b16 %v4356, %v4355
        %v4361 = vpack.c.b16 %v4358, %v4357
        %v4366 = vsel %vm3395, %v4339, 0
        %4368 = vmatprep.subr.bf16.mxu0 0
        %4369 = vmatpush1.bf16.msra.mxu0 %v4359
        %4370 = vmatprep.subr.bf16.mxu0 0
        %4371 = vmatpush1.bf16.msra.mxu0 %v4360
        %4372 = vmatprep.subr.bf16.mxu0 0
        %4373 = vmatpush1.bf16.msra.mxu0 %v4361
        %4374 = vmatprep.subr.bf16.mxu0 0
        %4375 = vmatpush1.bf16.msra.mxu0 0
        %4376 = vmatprep.subr.bf16.mxu0 0
        %4377 = vmatpush1.bf16.msra.mxu0 0
        %4378 = vmatprep.subr.bf16.mxu0 0
        %4379 = vmatpush1.bf16.msra.mxu0 0
        %4380 = vmatprep.subr.bf16.mxu0 0
        %4381 = vmatpush1.bf16.msra.mxu0 0
        %4382 = vmatprep.subr.bf16.mxu0 0
        %4383 = vmatpush1.bf16.msra.mxu0 0
        %4384 = vmatprep.subr.bf16.mxu0 0
        %4385 = vmatpush1.bf16.msra.mxu0 0
        %4386 = vmatprep.subr.bf16.mxu0 0
        %4387 = vmatpush1.bf16.msra.mxu0 0
        %4388 = vmatprep.subr.bf16.mxu0 0
        %4389 = vmatpush1.bf16.msra.mxu0 0
        %4390 = vmatprep.subr.bf16.mxu0 0
        %4391 = vmatpush1.bf16.msra.mxu0 0
        %4392 = vmatprep.subr.bf16.mxu0 0
        %4393 = vmatpush1.bf16.msra.mxu0 0
        %4394 = vmatprep.subr.bf16.mxu0 0
        %4395 = vmatpush1.bf16.msra.mxu0 0
        %4396 = vmatprep.subr.bf16.mxu0 0
        %4397 = vmatpush1.bf16.msra.mxu0 0
        %4398 = vmatprep.subr.bf16.mxu0 0
        %4399 = vmatpush1.bf16.msra.mxu0 0
        %4400 = vmatprep.mubr.bf16.mxu0 0
        %4401 = vmatmul.mubr.bf16.gmra.mrb[0].mxu0 %v3556
        %v4402 = vpop.f32.mrb[0].mxu0
        %v4403 = vadd.f32 0.0, %v4402
        %v4404 = vpop.f32.mrb[0].mxu0
        %v4405 = vpop.f32.mrb[0].mxu0
        %v4406 = vadd.f32 0.0, %v4405
        %v4407 = vpop.f32.mrb[0].mxu0
        %4408 = vmatprep.mubr.bf16.mxu0 0
        %4409 = vmatmul.mubr.bf16.gmra.mrb[0].mxu0 %v3559
        %v4410 = vpop.f32.mrb[0].mxu0
        %v4411 = vadd.f32 0.0, %v4410
        %v4412 = vpop.f32.mrb[0].mxu0
        %v4413 = vpop.f32.mrb[0].mxu0
        %v4414 = vadd.f32 0.0, %v4413
        %v4415 = vpop.f32.mrb[0].mxu0
        %4416 = vmatprep.mubr.bf16.mxu0 0
        %4417 = vmatmul.mubr.bf16.gmra.mrb[0].mxu0 %v3562
        %v4418 = vpop.f32.mrb[0].mxu0
        %v4419 = vadd.f32 0.0, %v4418
        %v4420 = vpop.f32.mrb[0].mxu0
        %v4421 = vpop.f32.mrb[0].mxu0
        %v4422 = vadd.f32 0.0, %v4421
        %v4423 = vpop.f32.mrb[0].mxu0
        %4424 = vmatprep.mubr.bf16.mxu0 0
        %4425 = vmatmul.mubr.bf16.gmra.mrb[0].mxu0 %v4366
        %v4426 = vpop.f32.mrb[0].mxu0
        %v4427 = vadd.f32 0.0, %v4426
        %v4428 = vpop.f32.mrb[0].mxu0
        %v4429 = vpop.f32.mrb[0].mxu0
        %v4430 = vadd.f32 0.0, %v4429
        %v4431 = vpop.f32.mrb[0].mxu0
        %4432 = vdwg.mxu0
        %v4433 = vadd.f32 %v4331, %v4403
        %v4434 = vadd.f32 %v4332, %v4406
        %v4435 = vadd.f32 %v4333, %v4411
        %v4436 = vadd.f32 %v4334, %v4414
        %v4437 = vadd.f32 %v4335, %v4419
        %v4438 = vadd.f32 %v4336, %v4422
        %v4439 = vadd.f32 %v4337, %v4427
        %v4440 = vadd.f32 %v4338, %v4430
        %v4442 = vrot.slane %v3463, 1
        %v4443 = vrot.slane %v3464, 1
        %v4444 = vsel %vm1455, %v4442, %v4443
        %v4446 = vpack.c.bf16 %v4444, %v4115
        %s4447 = scalar_lea.vmem %s10, 192
        %v4448 = vld [vmem:[%s4447] sm:$0xf]
        %v4449 = vld [vmem:[%s4447 + $0x4] sm:$0xf]
        %v4450 = vld [vmem:[%s4447 + $0x8] sm:$0xf]
        %v4451 = vld [vmem:[%s4447 + $0xc] sm:$0xf]
        %v4452 = vld [vmem:[%s4447 + $0x10] sm:$0xf]
        %v4453 = vld [vmem:[%s4447 + $0x14] sm:$0xf]
        %v4460 = vunpack.c.l.b16 %v4448
        %v4461 = vunpack.c.l.b16 %v4449
        %v4462 = vunpack.c.l.b16 %v4450
        %v4463 = vunpack.c.l.b16 %v4451
        %v4464 = vunpack.c.l.b16 %v4452
        %v4465 = vunpack.c.l.b16 %v4453
        %v4466 = vpack.c.b16 %v4461, %v4460
        %v4467 = vpack.c.b16 %v4463, %v4462
        %v4468 = vpack.c.b16 %v4465, %v4464
        %v4473 = vsel %vm3395, %v4446, 0
        %4475 = vmatprep.subr.bf16.mxu0 0
        %4476 = vmatpush1.bf16.msra.mxu0 %v4466
        %4477 = vmatprep.subr.bf16.mxu0 0
        %4478 = vmatpush1.bf16.msra.mxu0 %v4467
        %4479 = vmatprep.subr.bf16.mxu0 0
        %4480 = vmatpush1.bf16.msra.mxu0 %v4468
        %4481 = vmatprep.subr.bf16.mxu0 0
        %4482 = vmatpush1.bf16.msra.mxu0 0
        %4483 = vmatprep.subr.bf16.mxu0 0
        %4484 = vmatpush1.bf16.msra.mxu0 0
        %4485 = vmatprep.subr.bf16.mxu0 0
        %4486 = vmatpush1.bf16.msra.mxu0 0
        %4487 = vmatprep.subr.bf16.mxu0 0
        %4488 = vmatpush1.bf16.msra.mxu0 0
        %4489 = vmatprep.subr.bf16.mxu0 0
        %4490 = vmatpush1.bf16.msra.mxu0 0
        %4491 = vmatprep.subr.bf16.mxu0 0
        %4492 = vmatpush1.bf16.msra.mxu0 0
        %4493 = vmatprep.subr.bf16.mxu0 0
        %4494 = vmatpush1.bf16.msra.mxu0 0
        %4495 = vmatprep.subr.bf16.mxu0 0
        %4496 = vmatpush1.bf16.msra.mxu0 0
        %4497 = vmatprep.subr.bf16.mxu0 0
        %4498 = vmatpush1.bf16.msra.mxu0 0
        %4499 = vmatprep.subr.bf16.mxu0 0
        %4500 = vmatpush1.bf16.msra.mxu0 0
        %4501 = vmatprep.subr.bf16.mxu0 0
        %4502 = vmatpush1.bf16.msra.mxu0 0
        %4503 = vmatprep.subr.bf16.mxu0 0
        %4504 = vmatpush1.bf16.msra.mxu0 0
        %4505 = vmatprep.subr.bf16.mxu0 0
        %4506 = vmatpush1.bf16.msra.mxu0 0
        %4507 = vmatprep.mubr.bf16.mxu0 0
        %4508 = vmatmul.mubr.bf16.gmra.mrb[0].mxu0 %v3797
        %v4509 = vpop.f32.mrb[0].mxu0
        %v4510 = vadd.f32 0.0, %v4509
        %v4511 = vpop.f32.mrb[0].mxu0
        %v4512 = vpop.f32.mrb[0].mxu0
        %v4513 = vadd.f32 0.0, %v4512
        %v4514 = vpop.f32.mrb[0].mxu0
        %4515 = vmatprep.mubr.bf16.mxu0 0
        %4516 = vmatmul.mubr.bf16.gmra.mrb[0].mxu0 %v3800
        %v4517 = vpop.f32.mrb[0].mxu0
        %v4518 = vadd.f32 0.0, %v4517
        %v4519 = vpop.f32.mrb[0].mxu0
        %v4520 = vpop.f32.mrb[0].mxu0
        %v4521 = vadd.f32 0.0, %v4520
        %v4522 = vpop.f32.mrb[0].mxu0
        %4523 = vmatprep.mubr.bf16.mxu0 0
        %4524 = vmatmul.mubr.bf16.gmra.mrb[0].mxu0 %v3803
        %v4525 = vpop.f32.mrb[0].mxu0
        %v4526 = vadd.f32 0.0, %v4525
        %v4527 = vpop.f32.mrb[0].mxu0
        %v4528 = vpop.f32.mrb[0].mxu0
        %v4529 = vadd.f32 0.0, %v4528
        %v4530 = vpop.f32.mrb[0].mxu0
        %4531 = vmatprep.mubr.bf16.mxu0 0
        %4532 = vmatmul.mubr.bf16.gmra.mrb[0].mxu0 %v4473
        %v4533 = vpop.f32.mrb[0].mxu0
        %v4534 = vadd.f32 0.0, %v4533
        %v4535 = vpop.f32.mrb[0].mxu0
        %v4536 = vpop.f32.mrb[0].mxu0
        %v4537 = vadd.f32 0.0, %v4536
        %v4538 = vpop.f32.mrb[0].mxu0
        %4539 = vdwg.mxu0
        %v4540 = vadd.f32 %v4433, %v4510
        %v4541 = vadd.f32 %v4434, %v4513
        %v4542 = vadd.f32 %v4435, %v4518
        %v4543 = vadd.f32 %v4436, %v4521
        %v4544 = vadd.f32 %v4437, %v4526
        %v4545 = vadd.f32 %v4438, %v4529
        %v4546 = vadd.f32 %v4439, %v4534
        %v4547 = vadd.f32 %v4440, %v4537
        %v4548 = vld [vmem:[#allocation19] sm:$0x1]
        %v4550 = vlaneseq
        %v4551 = vshrl.u32 %v4550, 7
        %v4552 = vsub.s32 0, %v4551
        %v4553 = vrot.slane %v4548, %v4552
        %v4555 = vmul.f32 %v4540, %v4553
        %v4556 = vmul.f32 %v4541, %v4553
        %v4557 = vmul.f32 %v4542, %v4553
        %v4558 = vmul.f32 %v4543, %v4553
        %v4559 = vmul.f32 %v4544, %v4553
        %v4560 = vmul.f32 %v4545, %v4553
        %v4561 = vmul.f32 %v4546, %v4553
        %v4562 = vmul.f32 %v4547, %v4553
        %v4563 = vld [vmem:[#allocation21] sm:$0x1]
        %v4565 = vlaneseq
        %v4566 = vshrl.u32 %v4565, 7
        %v4567 = vsub.s32 0, %v4566
        %v4568 = vrot.slane %v4563, %v4567
        %v4570 = vadd.f32 %v4555, %v4568
        %v4571 = vadd.f32 %v4556, %v4568
        %v4572 = vadd.f32 %v4557, %v4568
        %v4573 = vadd.f32 %v4558, %v4568
        %v4574 = vadd.f32 %v4559, %v4568
        %v4575 = vadd.f32 %v4560, %v4568
        %v4576 = vadd.f32 %v4561, %v4568
        %v4577 = vadd.f32 %v4562, %v4568
        %v4578 = vmax.f32 %v4570, 0.0
        %v4579 = vmax.f32 %v4571, 0.0
        %v4580 = vmax.f32 %v4572, 0.0
        %v4581 = vmax.f32 %v4573, 0.0
        %v4582 = vmax.f32 %v4574, 0.0
        %v4583 = vmax.f32 %v4575, 0.0
        %v4584 = vmax.f32 %v4576, 0.0
        %v4585 = vmax.f32 %v4577, 0.0
        %v4586 = vpack.c.bf16 %v1094, %v1093
        %v4587 = vpack.c.bf16 %v1096, %v1095
        %v4588 = vpack.c.bf16 %v1098, %v1097
        %v4589 = vpack.c.bf16 %v1100, %v1099
        %v4590 = vld [vmem:[%s13] sm:$0xff]
        %v4591 = vld [vmem:[%s13 + $0x8] sm:$0xf]
        %v4592 = vld [vmem:[%s13 + $0xc] sm:$0xff]
        %v4593 = vld [vmem:[%s13 + $0x14] sm:$0xf]
        %v4594 = vld [vmem:[%s13 + $0x18] sm:$0xff]
        %v4595 = vld [vmem:[%s13 + $0x20] sm:$0xf]
        %v4596 = vld [vmem:[%s13 + $0x24] sm:$0xff]
        %v4597 = vld [vmem:[%s13 + $0x2c] sm:$0xf]
        %v4598 = vpack.c.bf16 %v2247, %v2246
        %v4599 = vpack.c.bf16 %v2249, %v2248
        %v4600 = vpack.c.bf16 %v2251, %v2250
        %v4601 = vpack.c.bf16 %v2253, %v2252
        %v4602 = vld [vmem:[#allocation22] sm:$0xff]
        %v4603 = vld [vmem:[#allocation22 + $0x8] sm:$0xf]
        %v4604 = vld [vmem:[#allocation22 + $0xc] sm:$0xff]
        %v4605 = vld [vmem:[#allocation22 + $0x14] sm:$0xf]
        %v4606 = vld [vmem:[#allocation22 + $0x18] sm:$0xff]
        %v4607 = vld [vmem:[#allocation22 + $0x20] sm:$0xf]
        %v4608 = vld [vmem:[#allocation22 + $0x24] sm:$0xff]
        %v4609 = vld [vmem:[#allocation22 + $0x2c] sm:$0xf]
        %v4618 = vunpack.c.l.b16 %v4602
        %v4619 = vunpack.c.h.b16 %v4602
        %v4620 = vunpack.c.l.b16 %v4603
        %v4621 = vunpack.c.l.b16 %v4604
        %v4622 = vunpack.c.h.b16 %v4604
        %v4623 = vunpack.c.l.b16 %v4605
        %v4624 = vunpack.c.l.b16 %v4606
        %v4625 = vunpack.c.h.b16 %v4606
        %v4626 = vunpack.c.l.b16 %v4607
        %v4627 = vunpack.c.l.b16 %v4608
        %v4628 = vunpack.c.h.b16 %v4608
        %v4629 = vunpack.c.l.b16 %v4609
        %v4630 = vpack.c.b16 %v4621, %v4618
        %v4631 = vpack.c.b16 %v4622, %v4619
        %v4632 = vpack.c.b16 %v4623, %v4620
        %v4633 = vpack.c.b16 %v4627, %v4624
        %v4634 = vpack.c.b16 %v4628, %v4625
        %v4635 = vpack.c.b16 %v4629, %v4626
        %v4643 = vsel %vm1101, %v4598, 0
        %v4646 = vsel %vm1101, %v4599, 0
        %v4649 = vsel %vm1101, %v4600, 0
        %v4652 = vsel %vm1101, %v4601, 0
        %4654 = vmatprep.subr.bf16.mxu0 %v4631
        %4655 = vmatpush1.bf16.msra.mxu0 %v4630
        %4656 = vmatprep.subr.bf16.mxu0 %v4634
        %4657 = vmatpush1.bf16.msra.mxu0 %v4633
        %4658 = vmatprep.subr.bf16.mxu0 0
        %4659 = vmatpush1.bf16.msra.mxu0 0
        %4660 = vmatprep.subr.bf16.mxu0 0
        %4661 = vmatpush1.bf16.msra.mxu0 0
        %4662 = vmatprep.subr.bf16.mxu0 0
        %4663 = vmatpush1.bf16.msra.mxu0 0
        %4664 = vmatprep.subr.bf16.mxu0 0
        %4665 = vmatpush1.bf16.msra.mxu0 0
        %4666 = vmatprep.subr.bf16.mxu0 0
        %4667 = vmatpush1.bf16.msra.mxu0 0
        %4668 = vmatprep.subr.bf16.mxu0 0
        %4669 = vmatpush1.bf16.msra.mxu0 0
        %4670 = vmatprep.subr.bf16.mxu0 0
        %4671 = vmatpush1.bf16.msra.mxu0 0
        %4672 = vmatprep.subr.bf16.mxu0 0
        %4673 = vmatpush1.bf16.msra.mxu0 0
        %4674 = vmatprep.subr.bf16.mxu0 0
        %4675 = vmatpush1.bf16.msra.mxu0 0
        %4676 = vmatprep.subr.bf16.mxu0 0
        %4677 = vmatpush1.bf16.msra.mxu0 0
        %4678 = vmatprep.subr.bf16.mxu0 0
        %4679 = vmatpush1.bf16.msra.mxu0 0
        %4680 = vmatprep.subr.bf16.mxu0 0
        %4681 = vmatpush1.bf16.msra.mxu0 0
        %4682 = vmatprep.subr.bf16.mxu0 0
        %4683 = vmatpush1.bf16.msra.mxu0 0
        %4684 = vmatprep.subr.bf16.mxu0 0
        %4685 = vmatpush1.bf16.msra.mxu0 0
        %4686 = vmatprep.mubr.bf16.mxu0 0
        %4687 = vmatmul.mubr.bf16.gmra.mrb[0].mxu0 %v4643
        %v4688 = vpop.f32.mrb[0].mxu0
        %v4689 = vadd.f32 0.0, %v4688
        %v4690 = vpop.f32.mrb[0].mxu0
        %v4691 = vadd.f32 0.0, %v4690
        %v4692 = vpop.f32.mrb[0].mxu0
        %v4693 = vadd.f32 0.0, %v4692
        %v4694 = vpop.f32.mrb[0].mxu0
        %v4695 = vadd.f32 0.0, %v4694
        %4696 = vmatprep.mubr.bf16.mxu0 0
        %4697 = vmatmul.mubr.bf16.gmra.mrb[0].mxu0 %v4646
        %v4698 = vpop.f32.mrb[0].mxu0
        %v4699 = vadd.f32 0.0, %v4698
        %v4700 = vpop.f32.mrb[0].mxu0
        %v4701 = vadd.f32 0.0, %v4700
        %v4702 = vpop.f32.mrb[0].mxu0
        %v4703 = vadd.f32 0.0, %v4702
        %v4704 = vpop.f32.mrb[0].mxu0
        %v4705 = vadd.f32 0.0, %v4704
        %4706 = vmatprep.mubr.bf16.mxu0 0
        %4707 = vmatmul.mubr.bf16.gmra.mrb[0].mxu0 %v4649
        %v4708 = vpop.f32.mrb[0].mxu0
        %v4709 = vadd.f32 0.0, %v4708
        %v4710 = vpop.f32.mrb[0].mxu0
        %v4711 = vadd.f32 0.0, %v4710
        %v4712 = vpop.f32.mrb[0].mxu0
        %v4713 = vadd.f32 0.0, %v4712
        %v4714 = vpop.f32.mrb[0].mxu0
        %v4715 = vadd.f32 0.0, %v4714
        %4716 = vmatprep.mubr.bf16.mxu0 0
        %4717 = vmatmul.mubr.bf16.gmra.mrb[0].mxu0 %v4652
        %v4718 = vpop.f32.mrb[0].mxu0
        %v4719 = vadd.f32 0.0, %v4718
        %v4720 = vpop.f32.mrb[0].mxu0
        %v4721 = vadd.f32 0.0, %v4720
        %v4722 = vpop.f32.mrb[0].mxu0
        %v4723 = vadd.f32 0.0, %v4722
        %v4724 = vpop.f32.mrb[0].mxu0
        %v4725 = vadd.f32 0.0, %v4724
        %4726 = vdwg.mxu0
        %4727 = vmatprep.subr.bf16.mxu0 0
        %4728 = vmatpush1.bf16.msra.mxu0 %v4632
        %4729 = vmatprep.subr.bf16.mxu0 0
        %4730 = vmatpush1.bf16.msra.mxu0 %v4635
        %4731 = vmatprep.subr.bf16.mxu0 0
        %4732 = vmatpush1.bf16.msra.mxu0 0
        %4733 = vmatprep.subr.bf16.mxu0 0
        %4734 = vmatpush1.bf16.msra.mxu0 0
        %4735 = vmatprep.subr.bf16.mxu0 0
        %4736 = vmatpush1.bf16.msra.mxu0 0
        %4737 = vmatprep.subr.bf16.mxu0 0
        %4738 = vmatpush1.bf16.msra.mxu0 0
        %4739 = vmatprep.subr.bf16.mxu0 0
        %4740 = vmatpush1.bf16.msra.mxu0 0
        %4741 = vmatprep.subr.bf16.mxu0 0
        %4742 = vmatpush1.bf16.msra.mxu0 0
        %4743 = vmatprep.subr.bf16.mxu0 0
        %4744 = vmatpush1.bf16.msra.mxu0 0
        %4745 = vmatprep.subr.bf16.mxu0 0
        %4746 = vmatpush1.bf16.msra.mxu0 0
        %4747 = vmatprep.subr.bf16.mxu0 0
        %4748 = vmatpush1.bf16.msra.mxu0 0
        %4749 = vmatprep.subr.bf16.mxu0 0
        %4750 = vmatpush1.bf16.msra.mxu0 0
        %4751 = vmatprep.subr.bf16.mxu0 0
        %4752 = vmatpush1.bf16.msra.mxu0 0
        %4753 = vmatprep.subr.bf16.mxu0 0
        %4754 = vmatpush1.bf16.msra.mxu0 0
        %4755 = vmatprep.subr.bf16.mxu0 0
        %4756 = vmatpush1.bf16.msra.mxu0 0
        %4757 = vmatprep.subr.bf16.mxu0 0
        %4758 = vmatpush1.bf16.msra.mxu0 0
        %4759 = vmatprep.mubr.bf16.mxu0 0
        %4760 = vmatmul.mubr.bf16.gmra.mrb[0].mxu0 %v4643
        %v4761 = vpop.f32.mrb[0].mxu0
        %v4762 = vadd.f32 0.0, %v4761
        %v4763 = vpop.f32.mrb[0].mxu0
        %v4764 = vpop.f32.mrb[0].mxu0
        %v4765 = vadd.f32 0.0, %v4764
        %v4766 = vpop.f32.mrb[0].mxu0
        %4767 = vmatprep.mubr.bf16.mxu0 0
        %4768 = vmatmul.mubr.bf16.gmra.mrb[0].mxu0 %v4646
        %v4769 = vpop.f32.mrb[0].mxu0
        %v4770 = vadd.f32 0.0, %v4769
        %v4771 = vpop.f32.mrb[0].mxu0
        %v4772 = vpop.f32.mrb[0].mxu0
        %v4773 = vadd.f32 0.0, %v4772
        %v4774 = vpop.f32.mrb[0].mxu0
        %4775 = vmatprep.mubr.bf16.mxu0 0
        %4776 = vmatmul.mubr.bf16.gmra.mrb[0].mxu0 %v4649
        %v4777 = vpop.f32.mrb[0].mxu0
        %v4778 = vadd.f32 0.0, %v4777
        %v4779 = vpop.f32.mrb[0].mxu0
        %v4780 = vpop.f32.mrb[0].mxu0
        %v4781 = vadd.f32 0.0, %v4780
        %v4782 = vpop.f32.mrb[0].mxu0
        %4783 = vmatprep.mubr.bf16.mxu0 0
        %4784 = vmatmul.mubr.bf16.gmra.mrb[0].mxu0 %v4652
        %v4785 = vpop.f32.mrb[0].mxu0
        %v4786 = vadd.f32 0.0, %v4785
        %v4787 = vpop.f32.mrb[0].mxu0
        %v4788 = vpop.f32.mrb[0].mxu0
        %v4789 = vadd.f32 0.0, %v4788
        %v4790 = vpop.f32.mrb[0].mxu0
        %4791 = vdwg.mxu0
        %v4800 = vunpack.c.l.b16 %v4590
        %v4801 = vunpack.c.h.b16 %v4590
        %v4802 = vunpack.c.l.b16 %v4591
        %v4803 = vunpack.c.l.b16 %v4592
        %v4804 = vunpack.c.h.b16 %v4592
        %v4805 = vunpack.c.l.b16 %v4593
        %v4806 = vunpack.c.l.b16 %v4594
        %v4807 = vunpack.c.h.b16 %v4594
        %v4808 = vunpack.c.l.b16 %v4595
        %v4809 = vunpack.c.l.b16 %v4596
        %v4810 = vunpack.c.h.b16 %v4596
        %v4811 = vunpack.c.l.b16 %v4597
        %v4812 = vpack.c.b16 %v4803, %v4800
        %v4813 = vpack.c.b16 %v4804, %v4801
        %v4814 = vpack.c.b16 %v4805, %v4802
        %v4815 = vpack.c.b16 %v4809, %v4806
        %v4816 = vpack.c.b16 %v4810, %v4807
        %v4817 = vpack.c.b16 %v4811, %v4808
        %v4825 = vsel %vm1101, %v4586, 0
        %v4828 = vsel %vm1101, %v4587, 0
        %v4831 = vsel %vm1101, %v4588, 0
        %v4834 = vsel %vm1101, %v4589, 0
        %4836 = vmatprep.subr.bf16.mxu0 %v4813
        %4837 = vmatpush1.bf16.msra.mxu0 %v4812
        %4838 = vmatprep.subr.bf16.mxu0 %v4816
        %4839 = vmatpush1.bf16.msra.mxu0 %v4815
        %4840 = vmatprep.subr.bf16.mxu0 0
        %4841 = vmatpush1.bf16.msra.mxu0 0
        %4842 = vmatprep.subr.bf16.mxu0 0
        %4843 = vmatpush1.bf16.msra.mxu0 0
        %4844 = vmatprep.subr.bf16.mxu0 0
        %4845 = vmatpush1.bf16.msra.mxu0 0
        %4846 = vmatprep.subr.bf16.mxu0 0
        %4847 = vmatpush1.bf16.msra.mxu0 0
        %4848 = vmatprep.subr.bf16.mxu0 0
        %4849 = vmatpush1.bf16.msra.mxu0 0
        %4850 = vmatprep.subr.bf16.mxu0 0
        %4851 = vmatpush1.bf16.msra.mxu0 0
        %4852 = vmatprep.subr.bf16.mxu0 0
        %4853 = vmatpush1.bf16.msra.mxu0 0
        %4854 = vmatprep.subr.bf16.mxu0 0
        %4855 = vmatpush1.bf16.msra.mxu0 0
        %4856 = vmatprep.subr.bf16.mxu0 0
        %4857 = vmatpush1.bf16.msra.mxu0 0
        %4858 = vmatprep.subr.bf16.mxu0 0
        %4859 = vmatpush1.bf16.msra.mxu0 0
        %4860 = vmatprep.subr.bf16.mxu0 0
        %4861 = vmatpush1.bf16.msra.mxu0 0
        %4862 = vmatprep.subr.bf16.mxu0 0
        %4863 = vmatpush1.bf16.msra.mxu0 0
        %4864 = vmatprep.subr.bf16.mxu0 0
        %4865 = vmatpush1.bf16.msra.mxu0 0
        %4866 = vmatprep.subr.bf16.mxu0 0
        %4867 = vmatpush1.bf16.msra.mxu0 0
        %4868 = vmatprep.mubr.bf16.mxu0 0
        %4869 = vmatmul.mubr.bf16.gmra.mrb[0].mxu0 %v4825
        %v4870 = vpop.f32.mrb[0].mxu0
        %v4871 = vadd.f32 %v4689, %v4870
        %v4872 = vpop.f32.mrb[0].mxu0
        %v4873 = vadd.f32 %v4691, %v4872
        %v4874 = vpop.f32.mrb[0].mxu0
        %v4875 = vadd.f32 %v4693, %v4874
        %v4876 = vpop.f32.mrb[0].mxu0
        %v4877 = vadd.f32 %v4695, %v4876
        %4878 = vmatprep.mubr.bf16.mxu0 0
        %4879 = vmatmul.mubr.bf16.gmra.mrb[0].mxu0 %v4828
        %v4880 = vpop.f32.mrb[0].mxu0
        %v4881 = vadd.f32 %v4699, %v4880
        %v4882 = vpop.f32.mrb[0].mxu0
        %v4883 = vadd.f32 %v4701, %v4882
        %v4884 = vpop.f32.mrb[0].mxu0
        %v4885 = vadd.f32 %v4703, %v4884
        %v4886 = vpop.f32.mrb[0].mxu0
        %v4887 = vadd.f32 %v4705, %v4886
        %4888 = vmatprep.mubr.bf16.mxu0 0
        %4889 = vmatmul.mubr.bf16.gmra.mrb[0].mxu0 %v4831
        %v4890 = vpop.f32.mrb[0].mxu0
        %v4891 = vadd.f32 %v4709, %v4890
        %v4892 = vpop.f32.mrb[0].mxu0
        %v4893 = vadd.f32 %v4711, %v4892
        %v4894 = vpop.f32.mrb[0].mxu0
        %v4895 = vadd.f32 %v4713, %v4894
        %v4896 = vpop.f32.mrb[0].mxu0
        %v4897 = vadd.f32 %v4715, %v4896
        %4898 = vmatprep.mubr.bf16.mxu0 0
        %4899 = vmatmul.mubr.bf16.gmra.mrb[0].mxu0 %v4834
        %v4900 = vpop.f32.mrb[0].mxu0
        %v4901 = vadd.f32 %v4719, %v4900
        %v4902 = vpop.f32.mrb[0].mxu0
        %v4903 = vadd.f32 %v4721, %v4902
        %v4904 = vpop.f32.mrb[0].mxu0
        %v4905 = vadd.f32 %v4723, %v4904
        %v4906 = vpop.f32.mrb[0].mxu0
        %v4907 = vadd.f32 %v4725, %v4906
        %4908 = vdwg.mxu0
        %4909 = vmatprep.subr.bf16.mxu0 0
        %4910 = vmatpush1.bf16.msra.mxu0 %v4814
        %4911 = vmatprep.subr.bf16.mxu0 0
        %4912 = vmatpush1.bf16.msra.mxu0 %v4817
        %4913 = vmatprep.subr.bf16.mxu0 0
        %4914 = vmatpush1.bf16.msra.mxu0 0
        %4915 = vmatprep.subr.bf16.mxu0 0
        %4916 = vmatpush1.bf16.msra.mxu0 0
        %4917 = vmatprep.subr.bf16.mxu0 0
        %4918 = vmatpush1.bf16.msra.mxu0 0
        %4919 = vmatprep.subr.bf16.mxu0 0
        %4920 = vmatpush1.bf16.msra.mxu0 0
        %4921 = vmatprep.subr.bf16.mxu0 0
        %4922 = vmatpush1.bf16.msra.mxu0 0
        %4923 = vmatprep.subr.bf16.mxu0 0
        %4924 = vmatpush1.bf16.msra.mxu0 0
        %4925 = vmatprep.subr.bf16.mxu0 0
        %4926 = vmatpush1.bf16.msra.mxu0 0
        %4927 = vmatprep.subr.bf16.mxu0 0
        %4928 = vmatpush1.bf16.msra.mxu0 0
        %4929 = vmatprep.subr.bf16.mxu0 0
        %4930 = vmatpush1.bf16.msra.mxu0 0
        %4931 = vmatprep.subr.bf16.mxu0 0
        %4932 = vmatpush1.bf16.msra.mxu0 0
        %4933 = vmatprep.subr.bf16.mxu0 0
        %4934 = vmatpush1.bf16.msra.mxu0 0
        %4935 = vmatprep.subr.bf16.mxu0 0
        %4936 = vmatpush1.bf16.msra.mxu0 0
        %4937 = vmatprep.subr.bf16.mxu0 0
        %4938 = vmatpush1.bf16.msra.mxu0 0
        %4939 = vmatprep.subr.bf16.mxu0 0
        %4940 = vmatpush1.bf16.msra.mxu0 0
        %4941 = vmatprep.mubr.bf16.mxu0 0
        %4942 = vmatmul.mubr.bf16.gmra.mrb[0].mxu0 %v4825
        %v4943 = vpop.f32.mrb[0].mxu0
        %v4944 = vadd.f32 %v4762, %v4943
        %v4945 = vpop.f32.mrb[0].mxu0
        %v4946 = vpop.f32.mrb[0].mxu0
        %v4947 = vadd.f32 %v4765, %v4946
        %v4948 = vpop.f32.mrb[0].mxu0
        %4949 = vmatprep.mubr.bf16.mxu0 0
        %4950 = vmatmul.mubr.bf16.gmra.mrb[0].mxu0 %v4828
        %v4951 = vpop.f32.mrb[0].mxu0
        %v4952 = vadd.f32 %v4770, %v4951
        %v4953 = vpop.f32.mrb[0].mxu0
        %v4954 = vpop.f32.mrb[0].mxu0
        %v4955 = vadd.f32 %v4773, %v4954
        %v4956 = vpop.f32.mrb[0].mxu0
        %4957 = vmatprep.mubr.bf16.mxu0 0
        %4958 = vmatmul.mubr.bf16.gmra.mrb[0].mxu0 %v4831
        %v4959 = vpop.f32.mrb[0].mxu0
        %v4960 = vadd.f32 %v4778, %v4959
        %v4961 = vpop.f32.mrb[0].mxu0
        %v4962 = vpop.f32.mrb[0].mxu0
        %v4963 = vadd.f32 %v4781, %v4962
        %v4964 = vpop.f32.mrb[0].mxu0
        %4965 = vmatprep.mubr.bf16.mxu0 0
        %4966 = vmatmul.mubr.bf16.gmra.mrb[0].mxu0 %v4834
        %v4967 = vpop.f32.mrb[0].mxu0
        %v4968 = vadd.f32 %v4786, %v4967
        %v4969 = vpop.f32.mrb[0].mxu0
        %v4970 = vpop.f32.mrb[0].mxu0
        %v4971 = vadd.f32 %v4789, %v4970
        %v4972 = vpop.f32.mrb[0].mxu0
        %4973 = vdwg.mxu0
        %v4974 = vpack.c.bf16 %v4579, %v4578
        %v4975 = vpack.c.bf16 %v4581, %v4580
        %v4976 = vpack.c.bf16 %v4583, %v4582
        %v4977 = vpack.c.bf16 %v4585, %v4584
        %v4978 = vld [vmem:[%s15] sm:$0xff]
        %v4979 = vld [vmem:[%s15 + $0x8] sm:$0xf]
        %v4980 = vld [vmem:[%s15 + $0xc] sm:$0xff]
        %v4981 = vld [vmem:[%s15 + $0x14] sm:$0xf]
        %v4982 = vld [vmem:[%s15 + $0x18] sm:$0xff]
        %v4983 = vld [vmem:[%s15 + $0x20] sm:$0xf]
        %v4984 = vld [vmem:[%s15 + $0x24] sm:$0xff]
        %v4985 = vld [vmem:[%s15 + $0x2c] sm:$0xf]
        %v4986 = vld [vmem:[%s15 + $0x30] sm:$0xff]
        %v4987 = vld [vmem:[%s15 + $0x38] sm:$0xf]
        %v4988 = vld [vmem:[%s15 + $0x3c] sm:$0xff]
        %v4989 = vld [vmem:[%s15 + $0x44] sm:$0xf]
        %v4990 = vld [vmem:[%s15 + $0x48] sm:$0xff]
        %v4991 = vld [vmem:[%s15 + $0x50] sm:$0xf]
        %v4992 = vld [vmem:[%s15 + $0x54] sm:$0xff]
        %v4993 = vld [vmem:[%s15 + $0x5c] sm:$0xf]
        %v5010 = vunpack.c.l.b16 %v4978
        %v5011 = vunpack.c.h.b16 %v4978
        %v5012 = vunpack.c.l.b16 %v4979
        %v5013 = vunpack.c.l.b16 %v4980
        %v5014 = vunpack.c.h.b16 %v4980
        %v5015 = vunpack.c.l.b16 %v4981
        %v5016 = vunpack.c.l.b16 %v4982
        %v5017 = vunpack.c.h.b16 %v4982
        %v5018 = vunpack.c.l.b16 %v4983
        %v5019 = vunpack.c.l.b16 %v4984
        %v5020 = vunpack.c.h.b16 %v4984
        %v5021 = vunpack.c.l.b16 %v4985
        %v5022 = vunpack.c.l.b16 %v4986
        %v5023 = vunpack.c.h.b16 %v4986
        %v5024 = vunpack.c.l.b16 %v4987
        %v5025 = vunpack.c.l.b16 %v4988
        %v5026 = vunpack.c.h.b16 %v4988
        %v5027 = vunpack.c.l.b16 %v4989
        %v5028 = vunpack.c.l.b16 %v4990
        %v5029 = vunpack.c.h.b16 %v4990
        %v5030 = vunpack.c.l.b16 %v4991
        %v5031 = vunpack.c.l.b16 %v4992
        %v5032 = vunpack.c.h.b16 %v4992
        %v5033 = vunpack.c.l.b16 %v4993
        %v5034 = vpack.c.b16 %v5013, %v5010
        %v5035 = vpack.c.b16 %v5014, %v5011
        %v5036 = vpack.c.b16 %v5015, %v5012
        %v5037 = vpack.c.b16 %v5019, %v5016
        %v5038 = vpack.c.b16 %v5020, %v5017
        %v5039 = vpack.c.b16 %v5021, %v5018
        %v5040 = vpack.c.b16 %v5025, %v5022
        %v5041 = vpack.c.b16 %v5026, %v5023
        %v5042 = vpack.c.b16 %v5027, %v5024
        %v5043 = vpack.c.b16 %v5031, %v5028
        %v5044 = vpack.c.b16 %v5032, %v5029
        %v5045 = vpack.c.b16 %v5033, %v5030
        %v5059 = vsel %vm920, %v4974, 0
        %v5062 = vsel %vm920, %v4975, 0
        %v5065 = vsel %vm920, %v4976, 0
        %v5068 = vsel %vm920, %v4977, 0
        %5070 = vmatprep.subr.bf16.mxu0 %v5035
        %5071 = vmatpush1.bf16.msra.mxu0 %v5034
        %5072 = vmatprep.subr.bf16.mxu0 %v5038
        %5073 = vmatpush1.bf16.msra.mxu0 %v5037
        %5074 = vmatprep.subr.bf16.mxu0 %v5041
        %5075 = vmatpush1.bf16.msra.mxu0 %v5040
        %5076 = vmatprep.subr.bf16.mxu0 %v5044
        %5077 = vmatpush1.bf16.msra.mxu0 %v5043
        %5078 = vmatprep.subr.bf16.mxu0 0
        %5079 = vmatpush1.bf16.msra.mxu0 0
        %5080 = vmatprep.subr.bf16.mxu0 0
        %5081 = vmatpush1.bf16.msra.mxu0 0
        %5082 = vmatprep.subr.bf16.mxu0 0
        %5083 = vmatpush1.bf16.msra.mxu0 0
        %5084 = vmatprep.subr.bf16.mxu0 0
        %5085 = vmatpush1.bf16.msra.mxu0 0
        %5086 = vmatprep.subr.bf16.mxu0 0
        %5087 = vmatpush1.bf16.msra.mxu0 0
        %5088 = vmatprep.subr.bf16.mxu0 0
        %5089 = vmatpush1.bf16.msra.mxu0 0
        %5090 = vmatprep.subr.bf16.mxu0 0
        %5091 = vmatpush1.bf16.msra.mxu0 0
        %5092 = vmatprep.subr.bf16.mxu0 0
        %5093 = vmatpush1.bf16.msra.mxu0 0
        %5094 = vmatprep.subr.bf16.mxu0 0
        %5095 = vmatpush1.bf16.msra.mxu0 0
        %5096 = vmatprep.subr.bf16.mxu0 0
        %5097 = vmatpush1.bf16.msra.mxu0 0
        %5098 = vmatprep.subr.bf16.mxu0 0
        %5099 = vmatpush1.bf16.msra.mxu0 0
        %5100 = vmatprep.subr.bf16.mxu0 0
        %5101 = vmatpush1.bf16.msra.mxu0 0
        %5102 = vmatprep.mubr.bf16.mxu0 0
        %5103 = vmatmul.mubr.bf16.gmra.mrb[0].mxu0 %v5059
        %v5104 = vpop.f32.mrb[0].mxu0
        %v5105 = vadd.f32 0.0, %v5104
        %v5106 = vpop.f32.mrb[0].mxu0
        %v5107 = vadd.f32 0.0, %v5106
        %v5108 = vpop.f32.mrb[0].mxu0
        %v5109 = vadd.f32 0.0, %v5108
        %v5110 = vpop.f32.mrb[0].mxu0
        %v5111 = vadd.f32 0.0, %v5110
        %5112 = vmatprep.mubr.bf16.mxu0 0
        %5113 = vmatmul.mubr.bf16.gmra.mrb[0].mxu0 %v5062
        %v5114 = vpop.f32.mrb[0].mxu0
        %v5115 = vadd.f32 0.0, %v5114
        %v5116 = vpop.f32.mrb[0].mxu0
        %v5117 = vadd.f32 0.0, %v5116
        %v5118 = vpop.f32.mrb[0].mxu0
        %v5119 = vadd.f32 0.0, %v5118
        %v5120 = vpop.f32.mrb[0].mxu0
        %v5121 = vadd.f32 0.0, %v5120
        %5122 = vmatprep.mubr.bf16.mxu0 0
        %5123 = vmatmul.mubr.bf16.gmra.mrb[0].mxu0 %v5065
        %v5124 = vpop.f32.mrb[0].mxu0
        %v5125 = vadd.f32 0.0, %v5124
        %v5126 = vpop.f32.mrb[0].mxu0
        %v5127 = vadd.f32 0.0, %v5126
        %v5128 = vpop.f32.mrb[0].mxu0
        %v5129 = vadd.f32 0.0, %v5128
        %v5130 = vpop.f32.mrb[0].mxu0
        %v5131 = vadd.f32 0.0, %v5130
        %5132 = vmatprep.mubr.bf16.mxu0 0
        %5133 = vmatmul.mubr.bf16.gmra.mrb[0].mxu0 %v5068
        %v5134 = vpop.f32.mrb[0].mxu0
        %v5135 = vadd.f32 0.0, %v5134
        %v5136 = vpop.f32.mrb[0].mxu0
        %v5137 = vadd.f32 0.0, %v5136
        %v5138 = vpop.f32.mrb[0].mxu0
        %v5139 = vadd.f32 0.0, %v5138
        %v5140 = vpop.f32.mrb[0].mxu0
        %v5141 = vadd.f32 0.0, %v5140
        %5142 = vdwg.mxu0
        %5143 = vmatprep.subr.bf16.mxu0 0
        %5144 = vmatpush1.bf16.msra.mxu0 %v5036
        %5145 = vmatprep.subr.bf16.mxu0 0
        %5146 = vmatpush1.bf16.msra.mxu0 %v5039
        %5147 = vmatprep.subr.bf16.mxu0 0
        %5148 = vmatpush1.bf16.msra.mxu0 %v5042
        %5149 = vmatprep.subr.bf16.mxu0 0
        %5150 = vmatpush1.bf16.msra.mxu0 %v5045
        %5151 = vmatprep.subr.bf16.mxu0 0
        %5152 = vmatpush1.bf16.msra.mxu0 0
        %5153 = vmatprep.subr.bf16.mxu0 0
        %5154 = vmatpush1.bf16.msra.mxu0 0
        %5155 = vmatprep.subr.bf16.mxu0 0
        %5156 = vmatpush1.bf16.msra.mxu0 0
        %5157 = vmatprep.subr.bf16.mxu0 0
        %5158 = vmatpush1.bf16.msra.mxu0 0
        %5159 = vmatprep.subr.bf16.mxu0 0
        %5160 = vmatpush1.bf16.msra.mxu0 0
        %5161 = vmatprep.subr.bf16.mxu0 0
        %5162 = vmatpush1.bf16.msra.mxu0 0
        %5163 = vmatprep.subr.bf16.mxu0 0
        %5164 = vmatpush1.bf16.msra.mxu0 0
        %5165 = vmatprep.subr.bf16.mxu0 0
        %5166 = vmatpush1.bf16.msra.mxu0 0
        %5167 = vmatprep.subr.bf16.mxu0 0
        %5168 = vmatpush1.bf16.msra.mxu0 0
        %5169 = vmatprep.subr.bf16.mxu0 0
        %5170 = vmatpush1.bf16.msra.mxu0 0
        %5171 = vmatprep.subr.bf16.mxu0 0
        %5172 = vmatpush1.bf16.msra.mxu0 0
        %5173 = vmatprep.subr.bf16.mxu0 0
        %5174 = vmatpush1.bf16.msra.mxu0 0
        %5175 = vmatprep.mubr.bf16.mxu0 0
        %5176 = vmatmul.mubr.bf16.gmra.mrb[0].mxu0 %v5059
        %v5177 = vpop.f32.mrb[0].mxu0
        %v5178 = vadd.f32 0.0, %v5177
        %v5179 = vpop.f32.mrb[0].mxu0
        %v5180 = vpop.f32.mrb[0].mxu0
        %v5181 = vadd.f32 0.0, %v5180
        %v5182 = vpop.f32.mrb[0].mxu0
        %5183 = vmatprep.mubr.bf16.mxu0 0
        %5184 = vmatmul.mubr.bf16.gmra.mrb[0].mxu0 %v5062
        %v5185 = vpop.f32.mrb[0].mxu0
        %v5186 = vadd.f32 0.0, %v5185
        %v5187 = vpop.f32.mrb[0].mxu0
        %v5188 = vpop.f32.mrb[0].mxu0
        %v5189 = vadd.f32 0.0, %v5188
        %v5190 = vpop.f32.mrb[0].mxu0
        %5191 = vmatprep.mubr.bf16.mxu0 0
        %5192 = vmatmul.mubr.bf16.gmra.mrb[0].mxu0 %v5065
        %v5193 = vpop.f32.mrb[0].mxu0
        %v5194 = vadd.f32 0.0, %v5193
        %v5195 = vpop.f32.mrb[0].mxu0
        %v5196 = vpop.f32.mrb[0].mxu0
        %v5197 = vadd.f32 0.0, %v5196
        %v5198 = vpop.f32.mrb[0].mxu0
        %5199 = vmatprep.mubr.bf16.mxu0 0
        %5200 = vmatmul.mubr.bf16.gmra.mrb[0].mxu0 %v5068
        %v5201 = vpop.f32.mrb[0].mxu0
        %v5202 = vadd.f32 0.0, %v5201
        %v5203 = vpop.f32.mrb[0].mxu0
        %v5204 = vpop.f32.mrb[0].mxu0
        %v5205 = vadd.f32 0.0, %v5204
        %v5206 = vpop.f32.mrb[0].mxu0
        %5207 = vdwg.mxu0
        %v5208 = vadd.f32 %v4871, %v5105
        %v5209 = vadd.f32 %v4873, %v5107
        %v5210 = vadd.f32 %v4944, %v5178
        %v5211 = vadd.f32 %v4875, %v5109
        %v5212 = vadd.f32 %v4877, %v5111
        %v5213 = vadd.f32 %v4947, %v5181
        %v5214 = vadd.f32 %v4881, %v5115
        %v5215 = vadd.f32 %v4883, %v5117
        %v5216 = vadd.f32 %v4952, %v5186
        %v5217 = vadd.f32 %v4885, %v5119
        %v5218 = vadd.f32 %v4887, %v5121
        %v5219 = vadd.f32 %v4955, %v5189
        %v5220 = vadd.f32 %v4891, %v5125
        %v5221 = vadd.f32 %v4893, %v5127
        %v5222 = vadd.f32 %v4960, %v5194
        %v5223 = vadd.f32 %v4895, %v5129
        %v5224 = vadd.f32 %v4897, %v5131
        %v5225 = vadd.f32 %v4963, %v5197
        %v5226 = vadd.f32 %v4901, %v5135
        %v5227 = vadd.f32 %v4903, %v5137
        %v5228 = vadd.f32 %v4968, %v5202
        %v5229 = vadd.f32 %v4905, %v5139
        %v5230 = vadd.f32 %v4907, %v5141
        %v5231 = vadd.f32 %v4971, %v5205
        %v5232 = vld [vmem:[#allocation24] sm:$0x7]
        %v5234 = vlaneseq
        %v5235 = vshrl.u32 %v5234, 7
        %v5236 = vsub.s32 0, %v5235
        %v5237 = vrot.slane %v5232, %v5236
        %v5238 = vlaneseq
        %v5239 = vshrl.u32 %v5238, 7
        %v5240 = vsub.s32 1, %v5239
        %v5241 = vrot.slane %v5232, %v5240
        %v5242 = vlaneseq
        %v5243 = vshrl.u32 %v5242, 7
        %v5244 = vsub.s32 2, %v5243
        %v5245 = vrot.slane %v5232, %v5244
        %v5249 = vadd.f32 %v5208, %v5237
        %v5250 = vadd.f32 %v5209, %v5241
        %v5251 = vadd.f32 %v5210, %v5245
        %v5252 = vadd.f32 %v5211, %v5237
        %v5253 = vadd.f32 %v5212, %v5241
        %v5254 = vadd.f32 %v5213, %v5245
        %v5255 = vadd.f32 %v5214, %v5237
        %v5256 = vadd.f32 %v5215, %v5241
        %v5257 = vadd.f32 %v5216, %v5245
        %v5258 = vadd.f32 %v5217, %v5237
        %v5259 = vadd.f32 %v5218, %v5241
        %v5260 = vadd.f32 %v5219, %v5245
        %v5261 = vadd.f32 %v5220, %v5237
        %v5262 = vadd.f32 %v5221, %v5241
        %v5263 = vadd.f32 %v5222, %v5245
        %v5264 = vadd.f32 %v5223, %v5237
        %v5265 = vadd.f32 %v5224, %v5241
        %v5266 = vadd.f32 %v5225, %v5245
        %v5267 = vadd.f32 %v5226, %v5237
        %v5268 = vadd.f32 %v5227, %v5241
        %v5269 = vadd.f32 %v5228, %v5245
        %v5270 = vadd.f32 %v5229, %v5237
        %v5271 = vadd.f32 %v5230, %v5241
        %v5272 = vadd.f32 %v5231, %v5245
        %v5273 = vmul.f32 %v5249, 0.17
        %v5274 = vmul.f32 %v5250, 0.17
        %v5275 = vmul.f32 %v5251, 0.17
        %v5276 = vmul.f32 %v5252, 0.17
        %v5277 = vmul.f32 %v5253, 0.17
        %v5278 = vmul.f32 %v5254, 0.17
        %v5279 = vmul.f32 %v5255, 0.17
        %v5280 = vmul.f32 %v5256, 0.17
        %v5281 = vmul.f32 %v5257, 0.17
        %v5282 = vmul.f32 %v5258, 0.17
        %v5283 = vmul.f32 %v5259, 0.17
        %v5284 = vmul.f32 %v5260, 0.17
        %v5285 = vmul.f32 %v5261, 0.17
        %v5286 = vmul.f32 %v5262, 0.17
        %v5287 = vmul.f32 %v5263, 0.17
        %v5288 = vmul.f32 %v5264, 0.17
        %v5289 = vmul.f32 %v5265, 0.17
        %v5290 = vmul.f32 %v5266, 0.17
        %v5291 = vmul.f32 %v5267, 0.17
        %v5292 = vmul.f32 %v5268, 0.17
        %v5293 = vmul.f32 %v5269, 0.17
        %v5294 = vmul.f32 %v5270, 0.17
        %v5295 = vmul.f32 %v5271, 0.17
        %v5296 = vmul.f32 %v5272, 0.17
        %v5297 = vadd.f32 %v5273, %v724
        %v5298 = vadd.f32 %v5274, %v725
        %v5299 = vadd.f32 %v5275, %v726
        %v5300 = vadd.f32 %v5276, %v727
        %v5301 = vadd.f32 %v5277, %v728
        %v5302 = vadd.f32 %v5278, %v729
        %v5303 = vadd.f32 %v5279, %v730
        %v5304 = vadd.f32 %v5280, %v731
        %v5305 = vadd.f32 %v5281, %v732
        %v5306 = vadd.f32 %v5282, %v733
        %v5307 = vadd.f32 %v5283, %v734
        %v5308 = vadd.f32 %v5284, %v735
        %v5309 = vadd.f32 %v5285, %v736
        %v5310 = vadd.f32 %v5286, %v737
        %v5311 = vadd.f32 %v5287, %v738
        %v5312 = vadd.f32 %v5288, %v739
        %v5313 = vadd.f32 %v5289, %v740
        %v5314 = vadd.f32 %v5290, %v741
        %v5315 = vadd.f32 %v5291, %v742
        %v5316 = vadd.f32 %v5292, %v743
        %v5317 = vadd.f32 %v5293, %v744
        %v5318 = vadd.f32 %v5294, %v745
        %v5319 = vadd.f32 %v5295, %v746
        %v5320 = vadd.f32 %v5296, %v747
        %v5321 = vmax.f32 %v5297, 0.0
        %v5322 = vmax.f32 %v5298, 0.0
        %v5323 = vmax.f32 %v5299, 0.0
        %v5324 = vmax.f32 %v5300, 0.0
        %v5325 = vmax.f32 %v5301, 0.0
        %v5326 = vmax.f32 %v5302, 0.0
        %v5327 = vmax.f32 %v5303, 0.0
        %v5328 = vmax.f32 %v5304, 0.0
        %v5329 = vmax.f32 %v5305, 0.0
        %v5330 = vmax.f32 %v5306, 0.0
        %v5331 = vmax.f32 %v5307, 0.0
        %v5332 = vmax.f32 %v5308, 0.0
        %v5333 = vmax.f32 %v5309, 0.0
        %v5334 = vmax.f32 %v5310, 0.0
        %v5335 = vmax.f32 %v5311, 0.0
        %v5336 = vmax.f32 %v5312, 0.0
        %v5337 = vmax.f32 %v5313, 0.0
        %v5338 = vmax.f32 %v5314, 0.0
        %v5339 = vmax.f32 %v5315, 0.0
        %v5340 = vmax.f32 %v5316, 0.0
        %v5341 = vmax.f32 %v5317, 0.0
        %v5342 = vmax.f32 %v5318, 0.0
        %v5343 = vmax.f32 %v5319, 0.0
        %v5344 = vmax.f32 %v5320, 0.0
        %5345 = vst [vmem:[%s722] sm:$0xff] %v5321
        %5346 = vst [vmem:[%s722 + $0x8] sm:$0xff] %v5322
        %5347 = vst.msk [vmem:[%s722 + $0x10] sm:$0xff] %vm920, %v5323
        %5348 = vst [vmem:[%s722 + $0x18] sm:$0xff] %v5324
        %5349 = vst [vmem:[%s722 + $0x20] sm:$0xff] %v5325
        %5350 = vst.msk [vmem:[%s722 + $0x28] sm:$0xff] %vm920, %v5326
        %5351 = vst [vmem:[%s722 + $0x30] sm:$0xff] %v5327
        %5352 = vst [vmem:[%s722 + $0x38] sm:$0xff] %v5328
        %5353 = vst.msk [vmem:[%s722 + $0x40] sm:$0xff] %vm920, %v5329
        %5354 = vst [vmem:[%s722 + $0x48] sm:$0xff] %v5330
        %5355 = vst [vmem:[%s722 + $0x50] sm:$0xff] %v5331
        %5356 = vst.msk [vmem:[%s722 + $0x58] sm:$0xff] %vm920, %v5332
        %5357 = vst [vmem:[%s722 + $0x60] sm:$0xff] %v5333
        %5358 = vst [vmem:[%s722 + $0x68] sm:$0xff] %v5334
        %5359 = vst.msk [vmem:[%s722 + $0x70] sm:$0xff] %vm920, %v5335
        %5360 = vst [vmem:[%s722 + $0x78] sm:$0xff] %v5336
        %5361 = vst [vmem:[%s722 + $0x80] sm:$0xff] %v5337
        %5362 = vst.msk [vmem:[%s722 + $0x88] sm:$0xff] %vm920, %v5338
        %5363 = vst [vmem:[%s722 + $0x90] sm:$0xff] %v5339
        %5364 = vst [vmem:[%s722 + $0x98] sm:$0xff] %v5340
        %5365 = vst.msk [vmem:[%s722 + $0xa0] sm:$0xff] %vm920, %v5341
        %5366 = vst [vmem:[%s722 + $0xa8] sm:$0xff] %v5342
        %5367 = vst [vmem:[%s722 + $0xb0] sm:$0xff] %v5343
        %5368 = vst.msk [vmem:[%s722 + $0xb8] sm:$0xff] %vm920, %v5344
        %s5369 = sand.u32 %s410, 1
        %s5370 = scalar_lea.sflag [#allocation6], %s5369
        %s5371 = sand.u32 %s410, 1
        %s5372 = smul.addr %s5371, 192
        %s5373 = scalar_lea.vmem [#allocation25], %s5372
        // Predicated region
        $region141: #{block35_forward.1} parent=87 // pred_check
          %p5374 = pneg %p420
        $region142: #{block35_forward.1} parent=87 // pred_check_branch
          %5376 = sbr.rel (%p5374) target = $region144
        $region143: #{block35_forward.1} parent=87 // pred_region
          %s5378 = ssub.s32 3072, 3072
          %5379 = vsyncadd %s5370, %s5378
          %s5380 = smul.addr %s40, 24
          %s5381 = smul.addr %s5380, 128
          %s5382 = scalar_lea.hbm %s17, %s5381
          %s5383 = sshll.u32 %s5373, 4
          %s5384 = int_to_ptr.vmem [resolvable:$true] %s5383
          %5389 = dma.vmem_to_hbm [thread:$0]  %s5384, 3072, %s5382, %s5370, 384, 384, 24
        $region144: #{block35_forward.1} parent=87 // pred_fallthru
          _
      $region88: #{block35_forward.1} parent=5 // pred_fallthru
        _
      %p5390 = scmp.le.s32.totalorder 2, %s35
      // Predicated region
      $region145: #{block35_forward.1} parent=5 // pred_check
        %p5391 = pneg %p5390
      $region146: #{block35_forward.1} parent=5 // pred_check_branch
        %5393 = sbr.rel (%p5391) target = $region148
      $region147: #{block35_forward.1} parent=5 // pred_region
        %s5394 = ssub.s32 %s35, 2
        // Predicated region
        $region149: #{block35_forward.1} parent=147 // pred_check
          %p5395 = pneg %p426
        $region150: #{block35_forward.1} parent=147 // pred_check_branch
          %5397 = sbr.rel (%p5395) target = $region152
        $region151: #{block35_forward.1} parent=147 // pred_region
          %s5398 = sand.u32 %s411, 1
          %s5399 = scalar_lea.sflag [#allocation6], %s5398
          %s5400 = sand.u32 %s411, 1
          %s5401 = smul.addr %s5400, 192
          %s5402 = scalar_lea.vmem [#allocation25], %s5401
          %5403 = dma.done %s5399, 3072
        $region152: #{block35_forward.1} parent=147 // pred_fallthru
          _
      $region148: #{block35_forward.1} parent=5 // pred_fallthru
        _
    $region6: #{block35_forward.1} parent=1 // loop_footer
      %s39 = sadd.s32 1, %s35
    $region7: #{block35_forward.1} parent=1 // loop_footer_branch
      %34 = sbr.rel target = $region3
    $region8: #{block35_forward.1} parent=1 // loop_exit
      _
    %5404 = vsyncpa [#allocation5], 1
    %s5405 = scalar_lea.sflag [#allocation5], 1
    %5406 = vsyncpa %s5405, 1
    %5407 = vsyncpa [#allocation8], 1
    %5408 = vsyncpa [#allocation11], 1
    %5409 = vsyncpa [#allocation14], 1
    %5410 = vsyncpa [#allocation17], 1
    %5411 = vsyncpa [#allocation20], 1
    %5412 = vsyncpa [#allocation23], 1
    %5413 = vsyncpa [#allocation6], 1
    %s5414 = scalar_lea.sflag [#allocation6], 1
    %5415 = vsyncpa %s5414, 1

</llo_original>
